<compile_context>
chip_gen: v7x
topology: tpu7x:2x2x1
jax: 0.10.0
libtpu: 0.0.40
codegen_flags: <defaults>
</compile_context>

<pallas_src>
import numpy as np
import jax
import jax.numpy as jnp
from jax.experimental import pallas as pl
from jax.experimental.pallas import tpu as pltpu

# ----------------------- configuration (small shapes) -----------------------
B = 2        # batch
NS = 8       # max_sent_num
D = 16       # input_dim
H = 32       # n_hidden
L = 2        # n_layer (kernel signature below is written for L == 2)
N_HOP = 2    # n_hop
NQ = 7       # lstm_in sequence length; decoder length T = NQ + 1
T = NQ + 1
INI = 0.01


# ------------------------------ fused kernel ---------------------------------
def pointer_net_kernel(mem_sizes_ref,              # SMEM (B,) int32 (scalar prefetch)
                       mem_ref,                    # [B*NS, D] attn_mem, batch-major
                       x_ref,                      # [T*B, D]  [init_i ; lstm_in], time-major
                       wm_ref,                     # [D, 4H]   [attn_wm|hop_wm|hop_wm@hop_wq|hop_wm@attn_wq]
                       wih0_ref,                   # [D, 4H]   layer-0 W_ih^T, gates (i|f|o|g)
                       wih1_ref,                   # [H, 4H]   layer-1 W_ih^T, gates (i|f|o|g)
                       whh_blk_ref,                # [2H, 8H]  blockdiag(W_hh0^T, W_hh1^T)
                       b_cat_ref,                  # [1, 8H]   [b0 | b1]  (b_ih + b_hh, reordered)
                       h0_ref, c0_ref,             # [B, 2H]   initial [h_l0|h_l1], [c_l0|c_l1]
                       hop_wq_ref,                 # [H, H]
                       hop_v_ref, attn_v_ref,      # [1, H]
                       out_ref,                    # [B, T, NS]
                       q_scr):                     # VMEM scratch [B*T, H], batch-major
    f32 = jnp.float32
    H4 = 4 * H

    # ---- fused feature projection for both batch elements: [B*NS, D] @ [D, 4H] ----
    proj = jnp.dot(mem_ref[...], wm_ref[...], preferred_element_type=f32)    # [B*NS, 4H]
    proj3 = proj.reshape(B, NS, H4)
    attn_feat = proj3[:, :, 0 * H:1 * H]        # attn_mem @ attn_wm
    hop_feat = proj3[:, :, 1 * H:2 * H]         # attn_mem @ hop_wm
    hop_feat_hq = proj3[:, :, 2 * H:3 * H]      # (attn_mem @ hop_wm) @ hop_wq
    hop_feat_aq = proj3[:, :, 3 * H:4 * H]      # (attn_mem @ hop_wm) @ attn_wq

    # ---- additive validity mask from SMEM scalars: 0 where valid, -1e18 where padded ----
    iota_ns = jax.lax.broadcasted_iota(jnp.int32, (1, 1, NS), 2)
    neg_mask = jnp.concatenate(
        [jnp.where(iota_ns < mem_sizes_ref[b], jnp.float32(0.0), jnp.float32(-1e18))
         for b in range(B)], axis=0)                                         # [B, 1, NS]

    # ---- layer-0 input projections for ALL T steps (incl. init_i) in one matmul ----
    wih0 = wih0_ref[...]                                                     # [D, 4H]
    wih1 = wih1_ref[...]                                                     # [H, 4H]
    whh_blk = whh_blk_ref[...]                                               # [2H, 8H]
    b_cat = b_cat_ref[...]                                                   # [1, 8H]
    gin_all = jnp.dot(x_ref[...], wih0, preferred_element_type=f32)          # [T*B, 4H]

    # ---- 2-layer LSTM, time recurrence fully unrolled; gate order is (i|f|o|g) ----
    h_cat = h0_ref[...]                                                      # [B, 2H]
    c_cat = c0_ref[...]                                                      # [B, 2H]
    c = [c_cat[:, l * H:(l + 1) * H] for l in range(L)]

    for t in range(T):
        # both layers' recurrent projections (+ fused biases) in one block-diag matmul
        rec = jnp.dot(h_cat, whh_blk, preferred_element_type=f32) + b_cat    # [B, 8H]
        x = None
        new_h = []
        for l in range(L):
            g = rec[:, l * H4:(l + 1) * H4]                                  # [B, 4H]
            if l == 0:
                g = g + gin_all[t * B:(t + 1) * B, :]
            else:
                g = g + jnp.dot(x, wih1, preferred_element_type=f32)
            sg = jax.nn.sigmoid(g[:, :3 * H])          # i | f | o in one EUP pass
            gg = jnp.tanh(g[:, 3 * H:])                # g
            i_g = sg[:, 0 * H:1 * H]
            f_g = sg[:, 1 * H:2 * H]
            o_g = sg[:, 2 * H:3 * H]
            c_new = f_g * c[l] + i_g * gg
            h_new = o_g * jnp.tanh(c_new)
            c[l] = c_new
            new_h.append(h_new)
            x = h_new
        h_cat = jnp.concatenate(new_h, axis=1)                               # [B, 2H]
        for b in range(B):                                                   # store top-layer hidden
            q_scr[b * T + t:b * T + t + 1, :] = x[b:b + 1, :]

    # ---- glimpse hops (masked attention) + final unnormalized pointer scores ----
    hop_v = hop_v_ref[...][None, None, :, :]                                 # [1,1,1,H]
    attn_v = attn_v_ref[...][None, None, :, :]

    # only the first hop needs an explicit query @ W_q matmul (query = LSTM output)
    qp = jnp.dot(q_scr[...], hop_wq_ref[...],
                 preferred_element_type=f32).reshape(B, T, H)                # [B, T, H]

    for hop in range(N_HOP):
        s = jnp.tanh(hop_feat[:, None, :, :] + qp[:, :, None, :])            # [B, T, NS, H]
        score = jnp.sum(s * hop_v, axis=-1) + neg_mask                       # [B, T, NS]
        score = score - jnp.max(score, axis=-1, keepdims=True)
        e = jnp.exp(score)
        norm = e * pl.reciprocal(jnp.sum(e, axis=-1, keepdims=True), approx=True)
        # re-associated:  (norm @ hop_feat) @ W  ==  norm @ (hop_feat @ W)
        feat_next = hop_feat_hq if hop + 1 < N_HOP else hop_feat_aq
        qp = jnp.einsum('btn,bnh->bth', norm, feat_next,
                        preferred_element_type=f32)                          # [B, T, H]

    s = jnp.tanh(attn_feat[:, None, :, :] + qp[:, :, None, :])               # [B, T, NS, H]
    out_ref[...] = jnp.sum(s * attn_v, axis=-1)                              # [B, T, NS]


# ------------------------------- full forward --------------------------------
def lstm_pointer_net_forward(params, kparams, attn_mem, mem_sizes, lstm_in):
    # layout plumbing only (tiny concats/reshapes; no compute hoisted out of the kernel)
    init_i_b = jnp.broadcast_to(params['init_i'][None, None, :], (B, 1, D))
    x_full = jnp.concatenate([init_i_b, lstm_in], axis=1)                    # [B, T, D]
    x_tm = jnp.transpose(x_full, (1, 0, 2)).reshape(T * B, D)                # time-major flat
    mem_flat = attn_mem.reshape(B * NS, D)
    sizes = mem_sizes.astype(jnp.int32)                                      # (B,)

    grid_spec = pltpu.PrefetchScalarGridSpec(
        num_scalar_prefetch=1,
        grid=(1,),
        in_specs=[
            pl.BlockSpec((B * NS, D), lambda i, s: (0, 0)),                  # attn_mem (flat)
            pl.BlockSpec((T * B, D), lambda i, s: (0, 0)),                   # lstm input (time-major)
            pl.BlockSpec((D, 4 * H), lambda i, s: (0, 0)),                   # wm_cat
            pl.BlockSpec((D, 4 * H), lambda i, s: (0, 0)),                   # wih0
            pl.BlockSpec((H, 4 * H), lambda i, s: (0, 0)),                   # wih1
            pl.BlockSpec((L * H, L * 4 * H), lambda i, s: (0, 0)),           # whh block-diag
            pl.BlockSpec((1, L * 4 * H), lambda i, s: (0, 0)),               # fused biases
            pl.BlockSpec((B, L * H), lambda i, s: (0, 0)),                   # init h (cat)
            pl.BlockSpec((B, L * H), lambda i, s: (0, 0)),                   # init c (cat)
            pl.BlockSpec((H, H), lambda i, s: (0, 0)),                       # hop_wq
            pl.BlockSpec((1, H), lambda i, s: (0, 0)),                       # hop_v
            pl.BlockSpec((1, H), lambda i, s: (0, 0)),                       # attn_v
        ],
        out_specs=pl.BlockSpec((B, T, NS), lambda i, s: (0, 0, 0)),
        scratch_shapes=[pltpu.VMEM((B * T, H), jnp.float32)],
    )
    return pl.pallas_call(
        pointer_net_kernel,
        out_shape=jax.ShapeDtypeStruct((B, T, NS), jnp.float32),
        grid_spec=grid_spec,
        compiler_params=pltpu.CompilerParams(dimension_semantics=("arbitrary",)),
    )(sizes, mem_flat, x_tm,
      kparams['wm_cat'], kparams['wih0'], kparams['wih1'],
      kparams['whh_blk'], kparams['b_cat'],
      kparams['h_cat0'], kparams['c_cat0'],
      kparams['hop_wq'], kparams['hop_v'], kparams['attn_v'])


# --------------------------- pure-JAX reference -------------------------------
def reference_forward(params, attn_mem, mem_sizes, lstm_in):
    attn_feat = attn_mem @ params['attn_wm']
    hop_feat = attn_mem @ params['hop_wm']
    h0 = jnp.broadcast_to(params['init_h'][:, None, :], (L, B, H))
    c0 = jnp.broadcast_to(params['init_c'][:, None, :], (L, B, H))
    init_i = jnp.broadcast_to(params['init_i'][None, None, :], (B, 1, D))
    xs = jnp.transpose(jnp.concatenate([init_i, lstm_in], axis=1), (1, 0, 2))

    def step(carry, xt):
        h, c = carry
        inp = xt
        hs, cs = [], []
        for l in range(L):
            wih_t, whh_t, b = params['lstm'][l]
            gates = inp @ wih_t + h[l] @ whh_t + b
            i = jax.nn.sigmoid(gates[:, :H])
            f = jax.nn.sigmoid(gates[:, H:2 * H])
            g = jnp.tanh(gates[:, 2 * H:3 * H])
            o = jax.nn.sigmoid(gates[:, 3 * H:])
            cl = f * c[l] + i * g
            hl = o * jnp.tanh(cl)
            hs.append(hl)
            cs.append(cl)
            inp = hl
        return (jnp.stack(hs), jnp.stack(cs)), inp

    (_, _), ys = jax.lax.scan(step, (h0, c0), xs)
    query = jnp.transpose(ys, (1, 0, 2))
    mask = (jnp.arange(NS)[None, :] < mem_sizes[:, None])

    def attn_score(feat, q, v, w):
        s = feat[:, None, :, :] + (q @ w)[:, :, None, :]
        return jnp.einsum('btnh,h->btn', jnp.tanh(s), v)

    for _ in range(N_HOP):
        score = attn_score(hop_feat, query, params['hop_v'], params['hop_wq'])
        score = jnp.where(mask[:, None, :], score, -1e18)
        norm = jax.nn.softmax(score, axis=-1)
        query = norm @ hop_feat
    return attn_score(attn_feat, query, params['attn_v'], params['attn_wq'])


# ------------------------------- param init -----------------------------------
def init_params(key):
    ks = jax.random.split(key, 10)

    def xavier(k, shape):
        std = (2.0 / (shape[0] + shape[1])) ** 0.5
        return std * jax.random.normal(k, shape, jnp.float32)

    params = {
        'init_h': jax.random.uniform(ks[0], (L, H), jnp.float32, -INI, INI),
        'init_c': jax.random.uniform(ks[1], (L, H), jnp.float32, -INI, INI),
        'init_i': jax.random.uniform(ks[2], (D,), jnp.float32, -0.1, 0.1),
        'attn_wm': xavier(ks[3], (D, H)),
        'attn_wq': xavier(ks[4], (H, H)),
        'attn_v': jax.random.uniform(ks[5], (H,), jnp.float32, -INI, INI),
        'hop_wm': xavier(ks[6], (D, H)),
        'hop_wq': xavier(ks[7], (H, H)),
        'hop_v': jax.random.uniform(ks[8], (H,), jnp.float32, -INI, INI),
    }
    lstm = []
    kk = jax.random.split(ks[9], 4 * L)
    bound = 1.0 / (H ** 0.5)
    for l in range(L):
        din = D if l == 0 else H
        wih = jax.random.uniform(kk[4 * l + 0], (4 * H, din), jnp.float32, -bound, bound)
        whh = jax.random.uniform(kk[4 * l + 1], (4 * H, H), jnp.float32, -bound, bound)
        bih = jax.random.uniform(kk[4 * l + 2], (4 * H,), jnp.float32, -bound, bound)
        bhh = jax.random.uniform(kk[4 * l + 3], (4 * H,), jnp.float32, -bound, bound)
        # pre-transposed weights + fused bias (b_ih + b_hh), PyTorch gate order (i, f, g, o)
        lstm.append((wih.T, whh.T, (bih + bhh)[None, :]))
    params['lstm'] = lstm
    return params


def pack_kernel_params(params):
    """One-time wrapper-side packing / re-association for the fused kernel."""
    # reorder PyTorch gate blocks (i, f, g, o) -> (i, f, o, g): one sigmoid + one tanh in-kernel
    perm = np.r_[0:H, H:2 * H, 3 * H:4 * H, 2 * H:3 * H]
    (wih0_t, whh0_t, b0), (wih1_t, whh1_t, b1) = params['lstm']
    wih0 = wih0_t[:, perm]
    wih1 = wih1_t[:, perm]
    whh0 = whh0_t[:, perm]
    whh1 = whh1_t[:, perm]
    # block-diagonal recurrent weight: one [B,2H]@[2H,8H] dot covers both layers per step
    whh_blk = jnp.zeros((L * H, L * 4 * H), jnp.float32)
    whh_blk = whh_blk.at[:H, :4 * H].set(whh0).at[H:, 4 * H:].set(whh1)
    b_cat = jnp.concatenate([b0[:, perm], b1[:, perm]], axis=1)              # [1, 8H]
    # fused + re-associated attention projection: [D, 4H] = 128 lanes (full vreg width)
    wm_cat = jnp.concatenate(
        [params['attn_wm'], params['hop_wm'],
         params['hop_wm'] @ params['hop_wq'],
         params['hop_wm'] @ params['attn_wq']], axis=1)
    return {
        'wih0': wih0, 'wih1': wih1, 'whh_blk': whh_blk, 'b_cat': b_cat,
        'wm_cat': wm_cat,
        'h_cat0': jnp.broadcast_to(params['init_h'].reshape(1, L * H), (B, L * H)),
        'c_cat0': jnp.broadcast_to(params['init_c'].reshape(1, L * H), (B, L * H)),
        'hop_wq': params['hop_wq'],
        'hop_v': params['hop_v'][None, :],
        'attn_v': params['attn_v'][None, :],
    }


# ----------------------------------- main --------------------------------------
if __name__ == "__main__":
    key = jax.random.PRNGKey(0)
    kp_, k1, k2 = jax.random.split(key, 3)
    params = init_params(kp_)
    kparams = pack_kernel_params(params)

    attn_mem = jax.random.normal(k1, (B, NS, D), jnp.float32)   # [batch, max_sent_num, input_dim]
    lstm_in = jax.random.normal(k2, (B, NQ, D), jnp.float32)    # [batch, n_query, input_dim]
    mem_sizes = jnp.array([NS, 5], dtype=jnp.int32)

    out = lstm_pointer_net_forward(params, kparams, attn_mem, mem_sizes, lstm_in)
    out = jax.block_until_ready(out)
    assert out.shape == (B, T, NS)

    ref = reference_forward(params, attn_mem, mem_sizes, lstm_in)
    np.testing.assert_allclose(np.asarray(out), np.asarray(ref), atol=2e-3, rtol=1e-2)

    print("KERNEL_OK")
</pallas_src>

<mosaic_0001>
module attributes {stable_mosaic.version = 11 : i64} {
  func.func @pointer_net_kernel(%arg0: i32, %arg1: memref<2xi32, #tpu.memory_space<smem>>, %arg2: memref<16x16xf32, #tpu.memory_space<vmem>>, %arg3: memref<16x16xf32, #tpu.memory_space<vmem>>, %arg4: memref<16x128xf32, #tpu.memory_space<vmem>>, %arg5: memref<16x128xf32, #tpu.memory_space<vmem>>, %arg6: memref<32x128xf32, #tpu.memory_space<vmem>>, %arg7: memref<64x256xf32, #tpu.memory_space<vmem>>, %arg8: memref<1x256xf32, #tpu.memory_space<vmem>>, %arg9: memref<2x64xf32, #tpu.memory_space<vmem>>, %arg10: memref<2x64xf32, #tpu.memory_space<vmem>>, %arg11: memref<32x32xf32, #tpu.memory_space<vmem>>, %arg12: memref<1x32xf32, #tpu.memory_space<vmem>>, %arg13: memref<1x32xf32, #tpu.memory_space<vmem>>, %arg14: memref<2x8x8xf32, #tpu.memory_space<vmem>>, %arg15: memref<16x32xf32, #tpu.memory_space<vmem>>) attributes {dimension_semantics = [#tpu.dimension_semantics<arbitrary>], iteration_bounds = array<i64: 1>, scalar_prefetch = 1 : i64, scratch_operands = 1 : i64, tpu.core_type = #tpu.core_type<tc>, window_params = [{pipeline_mode = #tpu.pipeline_mode<synchronous>, transform_indices = @transform_0, window_bounds = array<i64: 16, 16>}, {pipeline_mode = #tpu.pipeline_mode<synchronous>, transform_indices = @transform_1, window_bounds = array<i64: 16, 16>}, {pipeline_mode = #tpu.pipeline_mode<synchronous>, transform_indices = @transform_2, window_bounds = array<i64: 16, 128>}, {pipeline_mode = #tpu.pipeline_mode<synchronous>, transform_indices = @transform_3, window_bounds = array<i64: 16, 128>}, {pipeline_mode = #tpu.pipeline_mode<synchronous>, transform_indices = @transform_4, window_bounds = array<i64: 32, 128>}, {pipeline_mode = #tpu.pipeline_mode<synchronous>, transform_indices = @transform_5, window_bounds = array<i64: 64, 256>}, {pipeline_mode = #tpu.pipeline_mode<synchronous>, transform_indices = @transform_6, window_bounds = array<i64: 1, 256>}, {pipeline_mode = #tpu.pipeline_mode<synchronous>, transform_indices = @transform_7, window_bounds = array<i64: 2, 64>}, {pipeline_mode = #tpu.pipeline_mode<synchronous>, transform_indices = @transform_8, window_bounds = array<i64: 2, 64>}, {pipeline_mode = #tpu.pipeline_mode<synchronous>, transform_indices = @transform_9, window_bounds = array<i64: 32, 32>}, {pipeline_mode = #tpu.pipeline_mode<synchronous>, transform_indices = @transform_10, window_bounds = array<i64: 1, 32>}, {pipeline_mode = #tpu.pipeline_mode<synchronous>, transform_indices = @transform_11, window_bounds = array<i64: 1, 32>}, {pipeline_mode = #tpu.pipeline_mode<synchronous>, transform_indices = @transform_12, window_bounds = array<i64: 2, 8, 8>}]} {
    %c0 = arith.constant 0 : index
    %c0_0 = arith.constant 0 : index
    %0 = vector.load %arg2[%c0, %c0_0] : memref<16x16xf32, #tpu.memory_space<vmem>>, vector<16x16xf32>
    %c0_1 = arith.constant 0 : index
    %c0_2 = arith.constant 0 : index
    %1 = vector.load %arg4[%c0_1, %c0_2] : memref<16x128xf32, #tpu.memory_space<vmem>>, vector<16x128xf32>
    %cst = arith.constant dense<0.000000e+00> : vector<16x128xf32>
    %2 = tpu.matmul %0, %1, %cst {dimension_numbers = #tpu.dot_dimension_numbers<[1], [0], [0], [1], [0, 0, 1, 1], [], []>} : vector<16x16xf32>, vector<16x128xf32>, vector<16x128xf32> -> vector<16x128xf32>
    %3 = vector.shape_cast %2 : vector<16x128xf32> to vector<2x8x128xf32>
    %4 = vector.extract_strided_slice %3 {offsets = [0, 0, 0], sizes = [2, 8, 32], strides = [1, 1, 1]} : vector<2x8x128xf32> to vector<2x8x32xf32>
    %5 = vector.extract_strided_slice %3 {offsets = [0, 0, 32], sizes = [2, 8, 32], strides = [1, 1, 1]} : vector<2x8x128xf32> to vector<2x8x32xf32>
    %6 = vector.extract_strided_slice %3 {offsets = [0, 0, 64], sizes = [2, 8, 32], strides = [1, 1, 1]} : vector<2x8x128xf32> to vector<2x8x32xf32>
    %7 = vector.extract_strided_slice %3 {offsets = [0, 0, 96], sizes = [2, 8, 32], strides = [1, 1, 1]} : vector<2x8x128xf32> to vector<2x8x32xf32>
    %8 = tpu.iota {dimensions = array<i32: 2>} : vector<1x1x8xi32>
    %c0_3 = arith.constant 0 : index
    %9 = memref.load %arg1[%c0_3] : memref<2xi32, #tpu.memory_space<smem>>
    %10 = vector.broadcast %9 : i32 to vector<1x1x8xi32>
    %11 = arith.cmpi slt, %8, %10 : vector<1x1x8xi32>
    %cst_4 = arith.constant 0.000000e+00 : f32
    %cst_5 = arith.constant -9.99999984E+17 : f32
    %12 = vector.broadcast %cst_4 : f32 to vector<1x1x8xf32>
    %13 = vector.broadcast %cst_5 : f32 to vector<1x1x8xf32>
    %14 = arith.select %11, %12, %13 : vector<1x1x8xi1>, vector<1x1x8xf32>
    %c1 = arith.constant 1 : index
    %15 = memref.load %arg1[%c1] : memref<2xi32, #tpu.memory_space<smem>>
    %16 = vector.broadcast %15 : i32 to vector<1x1x8xi32>
    %17 = arith.cmpi slt, %8, %16 : vector<1x1x8xi32>
    %cst_6 = arith.constant 0.000000e+00 : f32
    %cst_7 = arith.constant -9.99999984E+17 : f32
    %18 = vector.broadcast %cst_6 : f32 to vector<1x1x8xf32>
    %19 = vector.broadcast %cst_7 : f32 to vector<1x1x8xf32>
    %20 = arith.select %17, %18, %19 : vector<1x1x8xi1>, vector<1x1x8xf32>
    %21 = tpu.concatenate %14, %20 in 0 : vector<1x1x8xf32>, vector<1x1x8xf32> -> vector<2x1x8xf32>
    %c0_8 = arith.constant 0 : index
    %c0_9 = arith.constant 0 : index
    %22 = vector.load %arg5[%c0_8, %c0_9] : memref<16x128xf32, #tpu.memory_space<vmem>>, vector<16x128xf32>
    %c0_10 = arith.constant 0 : index
    %c0_11 = arith.constant 0 : index
    %23 = vector.load %arg6[%c0_10, %c0_11] : memref<32x128xf32, #tpu.memory_space<vmem>>, vector<32x128xf32>
    %c0_12 = arith.constant 0 : index
    %c0_13 = arith.constant 0 : index
    %24 = vector.load %arg7[%c0_12, %c0_13] : memref<64x256xf32, #tpu.memory_space<vmem>>, vector<64x256xf32>
    %c0_14 = arith.constant 0 : index
    %c0_15 = arith.constant 0 : index
    %25 = vector.load %arg8[%c0_14, %c0_15] : memref<1x256xf32, #tpu.memory_space<vmem>>, vector<1x256xf32>
    %c0_16 = arith.constant 0 : index
    %c0_17 = arith.constant 0 : index
    %26 = vector.load %arg3[%c0_16, %c0_17] : memref<16x16xf32, #tpu.memory_space<vmem>>, vector<16x16xf32>
    %cst_18 = arith.constant dense<0.000000e+00> : vector<16x128xf32>
    %27 = tpu.matmul %26, %22, %cst_18 {dimension_numbers = #tpu.dot_dimension_numbers<[1], [0], [0], [1], [0, 0, 1, 1], [], []>} : vector<16x16xf32>, vector<16x128xf32>, vector<16x128xf32> -> vector<16x128xf32>
    %c0_19 = arith.constant 0 : index
    %c0_20 = arith.constant 0 : index
    %28 = vector.load %arg9[%c0_19, %c0_20] : memref<2x64xf32, #tpu.memory_space<vmem>>, vector<2x64xf32>
    %c0_21 = arith.constant 0 : index
    %c0_22 = arith.constant 0 : index
    %29 = vector.load %arg10[%c0_21, %c0_22] : memref<2x64xf32, #tpu.memory_space<vmem>>, vector<2x64xf32>
    %30 = vector.extract_strided_slice %29 {offsets = [0, 0], sizes = [2, 32], strides = [1, 1]} : vector<2x64xf32> to vector<2x32xf32>
    %31 = vector.extract_strided_slice %29 {offsets = [0, 32], sizes = [2, 32], strides = [1, 1]} : vector<2x64xf32> to vector<2x32xf32>
    %cst_23 = arith.constant dense<0.000000e+00> : vector<2x256xf32>
    %32 = tpu.matmul %28, %24, %cst_23 {dimension_numbers = #tpu.dot_dimension_numbers<[1], [0], [0], [1], [0, 0, 1, 1], [], []>} : vector<2x64xf32>, vector<64x256xf32>, vector<2x256xf32> -> vector<2x256xf32>
    %33 = vector.broadcast %25 : vector<1x256xf32> to vector<2x256xf32>
    %34 = arith.addf %32, %33 : vector<2x256xf32>
    %35 = vector.extract_strided_slice %34 {offsets = [0, 0], sizes = [2, 128], strides = [1, 1]} : vector<2x256xf32> to vector<2x128xf32>
    %36 = vector.extract_strided_slice %27 {offsets = [0, 0], sizes = [2, 128], strides = [1, 1]} : vector<16x128xf32> to vector<2x128xf32>
    %37 = arith.addf %35, %36 : vector<2x128xf32>
    %38 = vector.extract_strided_slice %37 {offsets = [0, 0], sizes = [2, 96], strides = [1, 1]} : vector<2x128xf32> to vector<2x96xf32>
    %39 = arith.negf %38 : vector<2x96xf32>
    %40 = math.exp %39 : vector<2x96xf32>
    %cst_24 = arith.constant 1.000000e+00 : f32
    %41 = vector.broadcast %cst_24 : f32 to vector<2x96xf32>
    %42 = arith.addf %41, %40 : vector<2x96xf32>
    %43 = arith.divf %41, %42 : vector<2x96xf32>
    %44 = vector.extract_strided_slice %37 {offsets = [0, 96], sizes = [2, 32], strides = [1, 1]} : vector<2x128xf32> to vector<2x32xf32>
    %45 = math.tanh %44 : vector<2x32xf32>
    %46 = vector.extract_strided_slice %43 {offsets = [0, 0], sizes = [2, 32], strides = [1, 1]} : vector<2x96xf32> to vector<2x32xf32>
    %47 = vector.extract_strided_slice %43 {offsets = [0, 32], sizes = [2, 32], strides = [1, 1]} : vector<2x96xf32> to vector<2x32xf32>
    %48 = vector.extract_strided_slice %43 {offsets = [0, 64], sizes = [2, 32], strides = [1, 1]} : vector<2x96xf32> to vector<2x32xf32>
    %49 = arith.mulf %47, %30 : vector<2x32xf32>
    %50 = arith.mulf %46, %45 : vector<2x32xf32>
    %51 = arith.addf %49, %50 : vector<2x32xf32>
    %52 = math.tanh %51 : vector<2x32xf32>
    %53 = arith.mulf %48, %52 : vector<2x32xf32>
    %54 = vector.extract_strided_slice %34 {offsets = [0, 128], sizes = [2, 128], strides = [1, 1]} : vector<2x256xf32> to vector<2x128xf32>
    %cst_25 = arith.constant dense<0.000000e+00> : vector<2x128xf32>
    %55 = tpu.matmul %53, %23, %cst_25 {dimension_numbers = #tpu.dot_dimension_numbers<[1], [0], [0], [1], [0, 0, 1, 1], [], []>} : vector<2x32xf32>, vector<32x128xf32>, vector<2x128xf32> -> vector<2x128xf32>
    %56 = arith.addf %54, %55 : vector<2x128xf32>
    %57 = vector.extract_strided_slice %56 {offsets = [0, 0], sizes = [2, 96], strides = [1, 1]} : vector<2x128xf32> to vector<2x96xf32>
    %58 = arith.negf %57 : vector<2x96xf32>
    %59 = math.exp %58 : vector<2x96xf32>
    %cst_26 = arith.constant 1.000000e+00 : f32
    %60 = vector.broadcast %cst_26 : f32 to vector<2x96xf32>
    %61 = arith.addf %60, %59 : vector<2x96xf32>
    %62 = arith.divf %60, %61 : vector<2x96xf32>
    %63 = vector.extract_strided_slice %56 {offsets = [0, 96], sizes = [2, 32], strides = [1, 1]} : vector<2x128xf32> to vector<2x32xf32>
    %64 = math.tanh %63 : vector<2x32xf32>
    %65 = vector.extract_strided_slice %62 {offsets = [0, 0], sizes = [2, 32], strides = [1, 1]} : vector<2x96xf32> to vector<2x32xf32>
    %66 = vector.extract_strided_slice %62 {offsets = [0, 32], sizes = [2, 32], strides = [1, 1]} : vector<2x96xf32> to vector<2x32xf32>
    %67 = vector.extract_strided_slice %62 {offsets = [0, 64], sizes = [2, 32], strides = [1, 1]} : vector<2x96xf32> to vector<2x32xf32>
    %68 = arith.mulf %66, %31 : vector<2x32xf32>
    %69 = arith.mulf %65, %64 : vector<2x32xf32>
    %70 = arith.addf %68, %69 : vector<2x32xf32>
    %71 = math.tanh %70 : vector<2x32xf32>
    %72 = arith.mulf %67, %71 : vector<2x32xf32>
    %73 = tpu.concatenate %53, %72 in 1 : vector<2x32xf32>, vector<2x32xf32> -> vector<2x64xf32>
    %74 = vector.extract_strided_slice %72 {offsets = [0, 0], sizes = [1, 32], strides = [1, 1]} : vector<2x32xf32> to vector<1x32xf32>
    %c0_27 = arith.constant 0 : index
    %c0_28 = arith.constant 0 : index
    %75 = vector.load %arg15[%c0_27, %c0_28] : memref<16x32xf32, #tpu.memory_space<vmem>>, vector<1x32xf32>
    tpu.vector_store %arg15[%c0_27, %c0_28], %74 {strides = array<i32>} : memref<16x32xf32, #tpu.memory_space<vmem>>, vector<1x32xf32>,
    %76 = vector.extract_strided_slice %72 {offsets = [1, 0], sizes = [1, 32], strides = [1, 1]} : vector<2x32xf32> to vector<1x32xf32>
    %c8 = arith.constant 8 : index
    %c0_29 = arith.constant 0 : index
    %77 = vector.load %arg15[%c8, %c0_29] : memref<16x32xf32, #tpu.memory_space<vmem>>, vector<1x32xf32>
    tpu.vector_store %arg15[%c8, %c0_29], %76 {strides = array<i32>} : memref<16x32xf32, #tpu.memory_space<vmem>>, vector<1x32xf32>,
    %cst_30 = arith.constant dense<0.000000e+00> : vector<2x256xf32>
    %78 = tpu.matmul %73, %24, %cst_30 {dimension_numbers = #tpu.dot_dimension_numbers<[1], [0], [0], [1], [0, 0, 1, 1], [], []>} : vector<2x64xf32>, vector<64x256xf32>, vector<2x256xf32> -> vector<2x256xf32>
    %79 = vector.broadcast %25 : vector<1x256xf32> to vector<2x256xf32>
    %80 = arith.addf %78, %79 : vector<2x256xf32>
    %81 = vector.extract_strided_slice %80 {offsets = [0, 0], sizes = [2, 128], strides = [1, 1]} : vector<2x256xf32> to vector<2x128xf32>
    %82 = vector.extract_strided_slice %27 {offsets = [2, 0], sizes = [2, 128], strides = [1, 1]} : vector<16x128xf32> to vector<2x128xf32>
    %83 = arith.addf %81, %82 : vector<2x128xf32>
    %84 = vector.extract_strided_slice %83 {offsets = [0, 0], sizes = [2, 96], strides = [1, 1]} : vector<2x128xf32> to vector<2x96xf32>
    %85 = arith.negf %84 : vector<2x96xf32>
    %86 = math.exp %85 : vector<2x96xf32>
    %cst_31 = arith.constant 1.000000e+00 : f32
    %87 = vector.broadcast %cst_31 : f32 to vector<2x96xf32>
    %88 = arith.addf %87, %86 : vector<2x96xf32>
    %89 = arith.divf %87, %88 : vector<2x96xf32>
    %90 = vector.extract_strided_slice %83 {offsets = [0, 96], sizes = [2, 32], strides = [1, 1]} : vector<2x128xf32> to vector<2x32xf32>
    %91 = math.tanh %90 : vector<2x32xf32>
    %92 = vector.extract_strided_slice %89 {offsets = [0, 0], sizes = [2, 32], strides = [1, 1]} : vector<2x96xf32> to vector<2x32xf32>
    %93 = vector.extract_strided_slice %89 {offsets = [0, 32], sizes = [2, 32], strides = [1, 1]} : vector<2x96xf32> to vector<2x32xf32>
    %94 = vector.extract_strided_slice %89 {offsets = [0, 64], sizes = [2, 32], strides = [1, 1]} : vector<2x96xf32> to vector<2x32xf32>
    %95 = arith.mulf %93, %51 : vector<2x32xf32>
    %96 = arith.mulf %92, %91 : vector<2x32xf32>
    %97 = arith.addf %95, %96 : vector<2x32xf32>
    %98 = math.tanh %97 : vector<2x32xf32>
    %99 = arith.mulf %94, %98 : vector<2x32xf32>
    %100 = vector.extract_strided_slice %80 {offsets = [0, 128], sizes = [2, 128], strides = [1, 1]} : vector<2x256xf32> to vector<2x128xf32>
    %cst_32 = arith.constant dense<0.000000e+00> : vector<2x128xf32>
    %101 = tpu.matmul %99, %23, %cst_32 {dimension_numbers = #tpu.dot_dimension_numbers<[1], [0], [0], [1], [0, 0, 1, 1], [], []>} : vector<2x32xf32>, vector<32x128xf32>, vector<2x128xf32> -> vector<2x128xf32>
    %102 = arith.addf %100, %101 : vector<2x128xf32>
    %103 = vector.extract_strided_slice %102 {offsets = [0, 0], sizes = [2, 96], strides = [1, 1]} : vector<2x128xf32> to vector<2x96xf32>
    %104 = arith.negf %103 : vector<2x96xf32>
    %105 = math.exp %104 : vector<2x96xf32>
    %cst_33 = arith.constant 1.000000e+00 : f32
    %106 = vector.broadcast %cst_33 : f32 to vector<2x96xf32>
    %107 = arith.addf %106, %105 : vector<2x96xf32>
    %108 = arith.divf %106, %107 : vector<2x96xf32>
    %109 = vector.extract_strided_slice %102 {offsets = [0, 96], sizes = [2, 32], strides = [1, 1]} : vector<2x128xf32> to vector<2x32xf32>
    %110 = math.tanh %109 : vector<2x32xf32>
    %111 = vector.extract_strided_slice %108 {offsets = [0, 0], sizes = [2, 32], strides = [1, 1]} : vector<2x96xf32> to vector<2x32xf32>
    %112 = vector.extract_strided_slice %108 {offsets = [0, 32], sizes = [2, 32], strides = [1, 1]} : vector<2x96xf32> to vector<2x32xf32>
    %113 = vector.extract_strided_slice %108 {offsets = [0, 64], sizes = [2, 32], strides = [1, 1]} : vector<2x96xf32> to vector<2x32xf32>
    %114 = arith.mulf %112, %70 : vector<2x32xf32>
    %115 = arith.mulf %111, %110 : vector<2x32xf32>
    %116 = arith.addf %114, %115 : vector<2x32xf32>
    %117 = math.tanh %116 : vector<2x32xf32>
    %118 = arith.mulf %113, %117 : vector<2x32xf32>
    %119 = tpu.concatenate %99, %118 in 1 : vector<2x32xf32>, vector<2x32xf32> -> vector<2x64xf32>
    %120 = vector.extract_strided_slice %118 {offsets = [0, 0], sizes = [1, 32], strides = [1, 1]} : vector<2x32xf32> to vector<1x32xf32>
    %c1_34 = arith.constant 1 : index
    %c0_35 = arith.constant 0 : index
    %121 = vector.load %arg15[%c1_34, %c0_35] : memref<16x32xf32, #tpu.memory_space<vmem>>, vector<1x32xf32>
    tpu.vector_store %arg15[%c1_34, %c0_35], %120 {strides = array<i32>} : memref<16x32xf32, #tpu.memory_space<vmem>>, vector<1x32xf32>,
    %122 = vector.extract_strided_slice %118 {offsets = [1, 0], sizes = [1, 32], strides = [1, 1]} : vector<2x32xf32> to vector<1x32xf32>
    %c9 = arith.constant 9 : index
    %c0_36 = arith.constant 0 : index
    %123 = vector.load %arg15[%c9, %c0_36] : memref<16x32xf32, #tpu.memory_space<vmem>>, vector<1x32xf32>
    tpu.vector_store %arg15[%c9, %c0_36], %122 {strides = array<i32>} : memref<16x32xf32, #tpu.memory_space<vmem>>, vector<1x32xf32>,
    %cst_37 = arith.constant dense<0.000000e+00> : vector<2x256xf32>
    %124 = tpu.matmul %119, %24, %cst_37 {dimension_numbers = #tpu.dot_dimension_numbers<[1], [0], [0], [1], [0, 0, 1, 1], [], []>} : vector<2x64xf32>, vector<64x256xf32>, vector<2x256xf32> -> vector<2x256xf32>
    %125 = vector.broadcast %25 : vector<1x256xf32> to vector<2x256xf32>
    %126 = arith.addf %124, %125 : vector<2x256xf32>
    %127 = vector.extract_strided_slice %126 {offsets = [0, 0], sizes = [2, 128], strides = [1, 1]} : vector<2x256xf32> to vector<2x128xf32>
    %128 = vector.extract_strided_slice %27 {offsets = [4, 0], sizes = [2, 128], strides = [1, 1]} : vector<16x128xf32> to vector<2x128xf32>
    %129 = arith.addf %127, %128 : vector<2x128xf32>
    %130 = vector.extract_strided_slice %129 {offsets = [0, 0], sizes = [2, 96], strides = [1, 1]} : vector<2x128xf32> to vector<2x96xf32>
    %131 = arith.negf %130 : vector<2x96xf32>
    %132 = math.exp %131 : vector<2x96xf32>
    %cst_38 = arith.constant 1.000000e+00 : f32
    %133 = vector.broadcast %cst_38 : f32 to vector<2x96xf32>
    %134 = arith.addf %133, %132 : vector<2x96xf32>
    %135 = arith.divf %133, %134 : vector<2x96xf32>
    %136 = vector.extract_strided_slice %129 {offsets = [0, 96], sizes = [2, 32], strides = [1, 1]} : vector<2x128xf32> to vector<2x32xf32>
    %137 = math.tanh %136 : vector<2x32xf32>
    %138 = vector.extract_strided_slice %135 {offsets = [0, 0], sizes = [2, 32], strides = [1, 1]} : vector<2x96xf32> to vector<2x32xf32>
    %139 = vector.extract_strided_slice %135 {offsets = [0, 32], sizes = [2, 32], strides = [1, 1]} : vector<2x96xf32> to vector<2x32xf32>
    %140 = vector.extract_strided_slice %135 {offsets = [0, 64], sizes = [2, 32], strides = [1, 1]} : vector<2x96xf32> to vector<2x32xf32>
    %141 = arith.mulf %139, %97 : vector<2x32xf32>
    %142 = arith.mulf %138, %137 : vector<2x32xf32>
    %143 = arith.addf %141, %142 : vector<2x32xf32>
    %144 = math.tanh %143 : vector<2x32xf32>
    %145 = arith.mulf %140, %144 : vector<2x32xf32>
    %146 = vector.extract_strided_slice %126 {offsets = [0, 128], sizes = [2, 128], strides = [1, 1]} : vector<2x256xf32> to vector<2x128xf32>
    %cst_39 = arith.constant dense<0.000000e+00> : vector<2x128xf32>
    %147 = tpu.matmul %145, %23, %cst_39 {dimension_numbers = #tpu.dot_dimension_numbers<[1], [0], [0], [1], [0, 0, 1, 1], [], []>} : vector<2x32xf32>, vector<32x128xf32>, vector<2x128xf32> -> vector<2x128xf32>
    %148 = arith.addf %146, %147 : vector<2x128xf32>
    %149 = vector.extract_strided_slice %148 {offsets = [0, 0], sizes = [2, 96], strides = [1, 1]} : vector<2x128xf32> to vector<2x96xf32>
    %150 = arith.negf %149 : vector<2x96xf32>
    %151 = math.exp %150 : vector<2x96xf32>
    %cst_40 = arith.constant 1.000000e+00 : f32
    %152 = vector.broadcast %cst_40 : f32 to vector<2x96xf32>
    %153 = arith.addf %152, %151 : vector<2x96xf32>
    %154 = arith.divf %152, %153 : vector<2x96xf32>
    %155 = vector.extract_strided_slice %148 {offsets = [0, 96], sizes = [2, 32], strides = [1, 1]} : vector<2x128xf32> to vector<2x32xf32>
    %156 = math.tanh %155 : vector<2x32xf32>
    %157 = vector.extract_strided_slice %154 {offsets = [0, 0], sizes = [2, 32], strides = [1, 1]} : vector<2x96xf32> to vector<2x32xf32>
    %158 = vector.extract_strided_slice %154 {offsets = [0, 32], sizes = [2, 32], strides = [1, 1]} : vector<2x96xf32> to vector<2x32xf32>
    %159 = vector.extract_strided_slice %154 {offsets = [0, 64], sizes = [2, 32], strides = [1, 1]} : vector<2x96xf32> to vector<2x32xf32>
    %160 = arith.mulf %158, %116 : vector<2x32xf32>
    %161 = arith.mulf %157, %156 : vector<2x32xf32>
    %162 = arith.addf %160, %161 : vector<2x32xf32>
    %163 = math.tanh %162 : vector<2x32xf32>
    %164 = arith.mulf %159, %163 : vector<2x32xf32>
    %165 = tpu.concatenate %145, %164 in 1 : vector<2x32xf32>, vector<2x32xf32> -> vector<2x64xf32>
    %166 = vector.extract_strided_slice %164 {offsets = [0, 0], sizes = [1, 32], strides = [1, 1]} : vector<2x32xf32> to vector<1x32xf32>
    %c2 = arith.constant 2 : index
    %c0_41 = arith.constant 0 : index
    %167 = vector.load %arg15[%c2, %c0_41] : memref<16x32xf32, #tpu.memory_space<vmem>>, vector<1x32xf32>
    tpu.vector_store %arg15[%c2, %c0_41], %166 {strides = array<i32>} : memref<16x32xf32, #tpu.memory_space<vmem>>, vector<1x32xf32>,
    %168 = vector.extract_strided_slice %164 {offsets = [1, 0], sizes = [1, 32], strides = [1, 1]} : vector<2x32xf32> to vector<1x32xf32>
    %c10 = arith.constant 10 : index
    %c0_42 = arith.constant 0 : index
    %169 = vector.load %arg15[%c10, %c0_42] : memref<16x32xf32, #tpu.memory_space<vmem>>, vector<1x32xf32>
    tpu.vector_store %arg15[%c10, %c0_42], %168 {strides = array<i32>} : memref<16x32xf32, #tpu.memory_space<vmem>>, vector<1x32xf32>,
    %cst_43 = arith.constant dense<0.000000e+00> : vector<2x256xf32>
    %170 = tpu.matmul %165, %24, %cst_43 {dimension_numbers = #tpu.dot_dimension_numbers<[1], [0], [0], [1], [0, 0, 1, 1], [], []>} : vector<2x64xf32>, vector<64x256xf32>, vector<2x256xf32> -> vector<2x256xf32>
    %171 = vector.broadcast %25 : vector<1x256xf32> to vector<2x256xf32>
    %172 = arith.addf %170, %171 : vector<2x256xf32>
    %173 = vector.extract_strided_slice %172 {offsets = [0, 0], sizes = [2, 128], strides = [1, 1]} : vector<2x256xf32> to vector<2x128xf32>
    %174 = vector.extract_strided_slice %27 {offsets = [6, 0], sizes = [2, 128], strides = [1, 1]} : vector<16x128xf32> to vector<2x128xf32>
    %175 = arith.addf %173, %174 : vector<2x128xf32>
    %176 = vector.extract_strided_slice %175 {offsets = [0, 0], sizes = [2, 96], strides = [1, 1]} : vector<2x128xf32> to vector<2x96xf32>
    %177 = arith.negf %176 : vector<2x96xf32>
    %178 = math.exp %177 : vector<2x96xf32>
    %cst_44 = arith.constant 1.000000e+00 : f32
    %179 = vector.broadcast %cst_44 : f32 to vector<2x96xf32>
    %180 = arith.addf %179, %178 : vector<2x96xf32>
    %181 = arith.divf %179, %180 : vector<2x96xf32>
    %182 = vector.extract_strided_slice %175 {offsets = [0, 96], sizes = [2, 32], strides = [1, 1]} : vector<2x128xf32> to vector<2x32xf32>
    %183 = math.tanh %182 : vector<2x32xf32>
    %184 = vector.extract_strided_slice %181 {offsets = [0, 0], sizes = [2, 32], strides = [1, 1]} : vector<2x96xf32> to vector<2x32xf32>
    %185 = vector.extract_strided_slice %181 {offsets = [0, 32], sizes = [2, 32], strides = [1, 1]} : vector<2x96xf32> to vector<2x32xf32>
    %186 = vector.extract_strided_slice %181 {offsets = [0, 64], sizes = [2, 32], strides = [1, 1]} : vector<2x96xf32> to vector<2x32xf32>
    %187 = arith.mulf %185, %143 : vector<2x32xf32>
    %188 = arith.mulf %184, %183 : vector<2x32xf32>
    %189 = arith.addf %187, %188 : vector<2x32xf32>
    %190 = math.tanh %189 : vector<2x32xf32>
    %191 = arith.mulf %186, %190 : vector<2x32xf32>
    %192 = vector.extract_strided_slice %172 {offsets = [0, 128], sizes = [2, 128], strides = [1, 1]} : vector<2x256xf32> to vector<2x128xf32>
    %cst_45 = arith.constant dense<0.000000e+00> : vector<2x128xf32>
    %193 = tpu.matmul %191, %23, %cst_45 {dimension_numbers = #tpu.dot_dimension_numbers<[1], [0], [0], [1], [0, 0, 1, 1], [], []>} : vector<2x32xf32>, vector<32x128xf32>, vector<2x128xf32> -> vector<2x128xf32>
    %194 = arith.addf %192, %193 : vector<2x128xf32>
    %195 = vector.extract_strided_slice %194 {offsets = [0, 0], sizes = [2, 96], strides = [1, 1]} : vector<2x128xf32> to vector<2x96xf32>
    %196 = arith.negf %195 : vector<2x96xf32>
    %197 = math.exp %196 : vector<2x96xf32>
    %cst_46 = arith.constant 1.000000e+00 : f32
    %198 = vector.broadcast %cst_46 : f32 to vector<2x96xf32>
    %199 = arith.addf %198, %197 : vector<2x96xf32>
    %200 = arith.divf %198, %199 : vector<2x96xf32>
    %201 = vector.extract_strided_slice %194 {offsets = [0, 96], sizes = [2, 32], strides = [1, 1]} : vector<2x128xf32> to vector<2x32xf32>
    %202 = math.tanh %201 : vector<2x32xf32>
    %203 = vector.extract_strided_slice %200 {offsets = [0, 0], sizes = [2, 32], strides = [1, 1]} : vector<2x96xf32> to vector<2x32xf32>
    %204 = vector.extract_strided_slice %200 {offsets = [0, 32], sizes = [2, 32], strides = [1, 1]} : vector<2x96xf32> to vector<2x32xf32>
    %205 = vector.extract_strided_slice %200 {offsets = [0, 64], sizes = [2, 32], strides = [1, 1]} : vector<2x96xf32> to vector<2x32xf32>
    %206 = arith.mulf %204, %162 : vector<2x32xf32>
    %207 = arith.mulf %203, %202 : vector<2x32xf32>
    %208 = arith.addf %206, %207 : vector<2x32xf32>
    %209 = math.tanh %208 : vector<2x32xf32>
    %210 = arith.mulf %205, %209 : vector<2x32xf32>
    %211 = tpu.concatenate %191, %210 in 1 : vector<2x32xf32>, vector<2x32xf32> -> vector<2x64xf32>
    %212 = vector.extract_strided_slice %210 {offsets = [0, 0], sizes = [1, 32], strides = [1, 1]} : vector<2x32xf32> to vector<1x32xf32>
    %c3 = arith.constant 3 : index
    %c0_47 = arith.constant 0 : index
    %213 = vector.load %arg15[%c3, %c0_47] : memref<16x32xf32, #tpu.memory_space<vmem>>, vector<1x32xf32>
    tpu.vector_store %arg15[%c3, %c0_47], %212 {strides = array<i32>} : memref<16x32xf32, #tpu.memory_space<vmem>>, vector<1x32xf32>,
    %214 = vector.extract_strided_slice %210 {offsets = [1, 0], sizes = [1, 32], strides = [1, 1]} : vector<2x32xf32> to vector<1x32xf32>
    %c11 = arith.constant 11 : index
    %c0_48 = arith.constant 0 : index
    %215 = vector.load %arg15[%c11, %c0_48] : memref<16x32xf32, #tpu.memory_space<vmem>>, vector<1x32xf32>
    tpu.vector_store %arg15[%c11, %c0_48], %214 {strides = array<i32>} : memref<16x32xf32, #tpu.memory_space<vmem>>, vector<1x32xf32>,
    %cst_49 = arith.constant dense<0.000000e+00> : vector<2x256xf32>
    %216 = tpu.matmul %211, %24, %cst_49 {dimension_numbers = #tpu.dot_dimension_numbers<[1], [0], [0], [1], [0, 0, 1, 1], [], []>} : vector<2x64xf32>, vector<64x256xf32>, vector<2x256xf32> -> vector<2x256xf32>
    %217 = vector.broadcast %25 : vector<1x256xf32> to vector<2x256xf32>
    %218 = arith.addf %216, %217 : vector<2x256xf32>
    %219 = vector.extract_strided_slice %218 {offsets = [0, 0], sizes = [2, 128], strides = [1, 1]} : vector<2x256xf32> to vector<2x128xf32>
    %220 = vector.extract_strided_slice %27 {offsets = [8, 0], sizes = [2, 128], strides = [1, 1]} : vector<16x128xf32> to vector<2x128xf32>
    %221 = arith.addf %219, %220 : vector<2x128xf32>
    %222 = vector.extract_strided_slice %221 {offsets = [0, 0], sizes = [2, 96], strides = [1, 1]} : vector<2x128xf32> to vector<2x96xf32>
    %223 = arith.negf %222 : vector<2x96xf32>
    %224 = math.exp %223 : vector<2x96xf32>
    %cst_50 = arith.constant 1.000000e+00 : f32
    %225 = vector.broadcast %cst_50 : f32 to vector<2x96xf32>
    %226 = arith.addf %225, %224 : vector<2x96xf32>
    %227 = arith.divf %225, %226 : vector<2x96xf32>
    %228 = vector.extract_strided_slice %221 {offsets = [0, 96], sizes = [2, 32], strides = [1, 1]} : vector<2x128xf32> to vector<2x32xf32>
    %229 = math.tanh %228 : vector<2x32xf32>
    %230 = vector.extract_strided_slice %227 {offsets = [0, 0], sizes = [2, 32], strides = [1, 1]} : vector<2x96xf32> to vector<2x32xf32>
    %231 = vector.extract_strided_slice %227 {offsets = [0, 32], sizes = [2, 32], strides = [1, 1]} : vector<2x96xf32> to vector<2x32xf32>
    %232 = vector.extract_strided_slice %227 {offsets = [0, 64], sizes = [2, 32], strides = [1, 1]} : vector<2x96xf32> to vector<2x32xf32>
    %233 = arith.mulf %231, %189 : vector<2x32xf32>
    %234 = arith.mulf %230, %229 : vector<2x32xf32>
    %235 = arith.addf %233, %234 : vector<2x32xf32>
    %236 = math.tanh %235 : vector<2x32xf32>
    %237 = arith.mulf %232, %236 : vector<2x32xf32>
    %238 = vector.extract_strided_slice %218 {offsets = [0, 128], sizes = [2, 128], strides = [1, 1]} : vector<2x256xf32> to vector<2x128xf32>
    %cst_51 = arith.constant dense<0.000000e+00> : vector<2x128xf32>
    %239 = tpu.matmul %237, %23, %cst_51 {dimension_numbers = #tpu.dot_dimension_numbers<[1], [0], [0], [1], [0, 0, 1, 1], [], []>} : vector<2x32xf32>, vector<32x128xf32>, vector<2x128xf32> -> vector<2x128xf32>
    %240 = arith.addf %238, %239 : vector<2x128xf32>
    %241 = vector.extract_strided_slice %240 {offsets = [0, 0], sizes = [2, 96], strides = [1, 1]} : vector<2x128xf32> to vector<2x96xf32>
    %242 = arith.negf %241 : vector<2x96xf32>
    %243 = math.exp %242 : vector<2x96xf32>
    %cst_52 = arith.constant 1.000000e+00 : f32
    %244 = vector.broadcast %cst_52 : f32 to vector<2x96xf32>
    %245 = arith.addf %244, %243 : vector<2x96xf32>
    %246 = arith.divf %244, %245 : vector<2x96xf32>
    %247 = vector.extract_strided_slice %240 {offsets = [0, 96], sizes = [2, 32], strides = [1, 1]} : vector<2x128xf32> to vector<2x32xf32>
    %248 = math.tanh %247 : vector<2x32xf32>
    %249 = vector.extract_strided_slice %246 {offsets = [0, 0], sizes = [2, 32], strides = [1, 1]} : vector<2x96xf32> to vector<2x32xf32>
    %250 = vector.extract_strided_slice %246 {offsets = [0, 32], sizes = [2, 32], strides = [1, 1]} : vector<2x96xf32> to vector<2x32xf32>
    %251 = vector.extract_strided_slice %246 {offsets = [0, 64], sizes = [2, 32], strides = [1, 1]} : vector<2x96xf32> to vector<2x32xf32>
    %252 = arith.mulf %250, %208 : vector<2x32xf32>
    %253 = arith.mulf %249, %248 : vector<2x32xf32>
    %254 = arith.addf %252, %253 : vector<2x32xf32>
    %255 = math.tanh %254 : vector<2x32xf32>
    %256 = arith.mulf %251, %255 : vector<2x32xf32>
    %257 = tpu.concatenate %237, %256 in 1 : vector<2x32xf32>, vector<2x32xf32> -> vector<2x64xf32>
    %258 = vector.extract_strided_slice %256 {offsets = [0, 0], sizes = [1, 32], strides = [1, 1]} : vector<2x32xf32> to vector<1x32xf32>
    %c4 = arith.constant 4 : index
    %c0_53 = arith.constant 0 : index
    %259 = vector.load %arg15[%c4, %c0_53] : memref<16x32xf32, #tpu.memory_space<vmem>>, vector<1x32xf32>
    tpu.vector_store %arg15[%c4, %c0_53], %258 {strides = array<i32>} : memref<16x32xf32, #tpu.memory_space<vmem>>, vector<1x32xf32>,
    %260 = vector.extract_strided_slice %256 {offsets = [1, 0], sizes = [1, 32], strides = [1, 1]} : vector<2x32xf32> to vector<1x32xf32>
    %c12 = arith.constant 12 : index
    %c0_54 = arith.constant 0 : index
    %261 = vector.load %arg15[%c12, %c0_54] : memref<16x32xf32, #tpu.memory_space<vmem>>, vector<1x32xf32>
    tpu.vector_store %arg15[%c12, %c0_54], %260 {strides = array<i32>} : memref<16x32xf32, #tpu.memory_space<vmem>>, vector<1x32xf32>,
    %cst_55 = arith.constant dense<0.000000e+00> : vector<2x256xf32>
    %262 = tpu.matmul %257, %24, %cst_55 {dimension_numbers = #tpu.dot_dimension_numbers<[1], [0], [0], [1], [0, 0, 1, 1], [], []>} : vector<2x64xf32>, vector<64x256xf32>, vector<2x256xf32> -> vector<2x256xf32>
    %263 = vector.broadcast %25 : vector<1x256xf32> to vector<2x256xf32>
    %264 = arith.addf %262, %263 : vector<2x256xf32>
    %265 = vector.extract_strided_slice %264 {offsets = [0, 0], sizes = [2, 128], strides = [1, 1]} : vector<2x256xf32> to vector<2x128xf32>
    %266 = vector.extract_strided_slice %27 {offsets = [10, 0], sizes = [2, 128], strides = [1, 1]} : vector<16x128xf32> to vector<2x128xf32>
    %267 = arith.addf %265, %266 : vector<2x128xf32>
    %268 = vector.extract_strided_slice %267 {offsets = [0, 0], sizes = [2, 96], strides = [1, 1]} : vector<2x128xf32> to vector<2x96xf32>
    %269 = arith.negf %268 : vector<2x96xf32>
    %270 = math.exp %269 : vector<2x96xf32>
    %cst_56 = arith.constant 1.000000e+00 : f32
    %271 = vector.broadcast %cst_56 : f32 to vector<2x96xf32>
    %272 = arith.addf %271, %270 : vector<2x96xf32>
    %273 = arith.divf %271, %272 : vector<2x96xf32>
    %274 = vector.extract_strided_slice %267 {offsets = [0, 96], sizes = [2, 32], strides = [1, 1]} : vector<2x128xf32> to vector<2x32xf32>
    %275 = math.tanh %274 : vector<2x32xf32>
    %276 = vector.extract_strided_slice %273 {offsets = [0, 0], sizes = [2, 32], strides = [1, 1]} : vector<2x96xf32> to vector<2x32xf32>
    %277 = vector.extract_strided_slice %273 {offsets = [0, 32], sizes = [2, 32], strides = [1, 1]} : vector<2x96xf32> to vector<2x32xf32>
    %278 = vector.extract_strided_slice %273 {offsets = [0, 64], sizes = [2, 32], strides = [1, 1]} : vector<2x96xf32> to vector<2x32xf32>
    %279 = arith.mulf %277, %235 : vector<2x32xf32>
    %280 = arith.mulf %276, %275 : vector<2x32xf32>
    %281 = arith.addf %279, %280 : vector<2x32xf32>
    %282 = math.tanh %281 : vector<2x32xf32>
    %283 = arith.mulf %278, %282 : vector<2x32xf32>
    %284 = vector.extract_strided_slice %264 {offsets = [0, 128], sizes = [2, 128], strides = [1, 1]} : vector<2x256xf32> to vector<2x128xf32>
    %cst_57 = arith.constant dense<0.000000e+00> : vector<2x128xf32>
    %285 = tpu.matmul %283, %23, %cst_57 {dimension_numbers = #tpu.dot_dimension_numbers<[1], [0], [0], [1], [0, 0, 1, 1], [], []>} : vector<2x32xf32>, vector<32x128xf32>, vector<2x128xf32> -> vector<2x128xf32>
    %286 = arith.addf %284, %285 : vector<2x128xf32>
    %287 = vector.extract_strided_slice %286 {offsets = [0, 0], sizes = [2, 96], strides = [1, 1]} : vector<2x128xf32> to vector<2x96xf32>
    %288 = arith.negf %287 : vector<2x96xf32>
    %289 = math.exp %288 : vector<2x96xf32>
    %cst_58 = arith.constant 1.000000e+00 : f32
    %290 = vector.broadcast %cst_58 : f32 to vector<2x96xf32>
    %291 = arith.addf %290, %289 : vector<2x96xf32>
    %292 = arith.divf %290, %291 : vector<2x96xf32>
    %293 = vector.extract_strided_slice %286 {offsets = [0, 96], sizes = [2, 32], strides = [1, 1]} : vector<2x128xf32> to vector<2x32xf32>
    %294 = math.tanh %293 : vector<2x32xf32>
    %295 = vector.extract_strided_slice %292 {offsets = [0, 0], sizes = [2, 32], strides = [1, 1]} : vector<2x96xf32> to vector<2x32xf32>
    %296 = vector.extract_strided_slice %292 {offsets = [0, 32], sizes = [2, 32], strides = [1, 1]} : vector<2x96xf32> to vector<2x32xf32>
    %297 = vector.extract_strided_slice %292 {offsets = [0, 64], sizes = [2, 32], strides = [1, 1]} : vector<2x96xf32> to vector<2x32xf32>
    %298 = arith.mulf %296, %254 : vector<2x32xf32>
    %299 = arith.mulf %295, %294 : vector<2x32xf32>
    %300 = arith.addf %298, %299 : vector<2x32xf32>
    %301 = math.tanh %300 : vector<2x32xf32>
    %302 = arith.mulf %297, %301 : vector<2x32xf32>
    %303 = tpu.concatenate %283, %302 in 1 : vector<2x32xf32>, vector<2x32xf32> -> vector<2x64xf32>
    %304 = vector.extract_strided_slice %302 {offsets = [0, 0], sizes = [1, 32], strides = [1, 1]} : vector<2x32xf32> to vector<1x32xf32>
    %c5 = arith.constant 5 : index
    %c0_59 = arith.constant 0 : index
    %305 = vector.load %arg15[%c5, %c0_59] : memref<16x32xf32, #tpu.memory_space<vmem>>, vector<1x32xf32>
    tpu.vector_store %arg15[%c5, %c0_59], %304 {strides = array<i32>} : memref<16x32xf32, #tpu.memory_space<vmem>>, vector<1x32xf32>,
    %306 = vector.extract_strided_slice %302 {offsets = [1, 0], sizes = [1, 32], strides = [1, 1]} : vector<2x32xf32> to vector<1x32xf32>
    %c13 = arith.constant 13 : index
    %c0_60 = arith.constant 0 : index
    %307 = vector.load %arg15[%c13, %c0_60] : memref<16x32xf32, #tpu.memory_space<vmem>>, vector<1x32xf32>
    tpu.vector_store %arg15[%c13, %c0_60], %306 {strides = array<i32>} : memref<16x32xf32, #tpu.memory_space<vmem>>, vector<1x32xf32>,
    %cst_61 = arith.constant dense<0.000000e+00> : vector<2x256xf32>
    %308 = tpu.matmul %303, %24, %cst_61 {dimension_numbers = #tpu.dot_dimension_numbers<[1], [0], [0], [1], [0, 0, 1, 1], [], []>} : vector<2x64xf32>, vector<64x256xf32>, vector<2x256xf32> -> vector<2x256xf32>
    %309 = vector.broadcast %25 : vector<1x256xf32> to vector<2x256xf32>
    %310 = arith.addf %308, %309 : vector<2x256xf32>
    %311 = vector.extract_strided_slice %310 {offsets = [0, 0], sizes = [2, 128], strides = [1, 1]} : vector<2x256xf32> to vector<2x128xf32>
    %312 = vector.extract_strided_slice %27 {offsets = [12, 0], sizes = [2, 128], strides = [1, 1]} : vector<16x128xf32> to vector<2x128xf32>
    %313 = arith.addf %311, %312 : vector<2x128xf32>
    %314 = vector.extract_strided_slice %313 {offsets = [0, 0], sizes = [2, 96], strides = [1, 1]} : vector<2x128xf32> to vector<2x96xf32>
    %315 = arith.negf %314 : vector<2x96xf32>
    %316 = math.exp %315 : vector<2x96xf32>
    %cst_62 = arith.constant 1.000000e+00 : f32
    %317 = vector.broadcast %cst_62 : f32 to vector<2x96xf32>
    %318 = arith.addf %317, %316 : vector<2x96xf32>
    %319 = arith.divf %317, %318 : vector<2x96xf32>
    %320 = vector.extract_strided_slice %313 {offsets = [0, 96], sizes = [2, 32], strides = [1, 1]} : vector<2x128xf32> to vector<2x32xf32>
    %321 = math.tanh %320 : vector<2x32xf32>
    %322 = vector.extract_strided_slice %319 {offsets = [0, 0], sizes = [2, 32], strides = [1, 1]} : vector<2x96xf32> to vector<2x32xf32>
    %323 = vector.extract_strided_slice %319 {offsets = [0, 32], sizes = [2, 32], strides = [1, 1]} : vector<2x96xf32> to vector<2x32xf32>
    %324 = vector.extract_strided_slice %319 {offsets = [0, 64], sizes = [2, 32], strides = [1, 1]} : vector<2x96xf32> to vector<2x32xf32>
    %325 = arith.mulf %323, %281 : vector<2x32xf32>
    %326 = arith.mulf %322, %321 : vector<2x32xf32>
    %327 = arith.addf %325, %326 : vector<2x32xf32>
    %328 = math.tanh %327 : vector<2x32xf32>
    %329 = arith.mulf %324, %328 : vector<2x32xf32>
    %330 = vector.extract_strided_slice %310 {offsets = [0, 128], sizes = [2, 128], strides = [1, 1]} : vector<2x256xf32> to vector<2x128xf32>
    %cst_63 = arith.constant dense<0.000000e+00> : vector<2x128xf32>
    %331 = tpu.matmul %329, %23, %cst_63 {dimension_numbers = #tpu.dot_dimension_numbers<[1], [0], [0], [1], [0, 0, 1, 1], [], []>} : vector<2x32xf32>, vector<32x128xf32>, vector<2x128xf32> -> vector<2x128xf32>
    %332 = arith.addf %330, %331 : vector<2x128xf32>
    %333 = vector.extract_strided_slice %332 {offsets = [0, 0], sizes = [2, 96], strides = [1, 1]} : vector<2x128xf32> to vector<2x96xf32>
    %334 = arith.negf %333 : vector<2x96xf32>
    %335 = math.exp %334 : vector<2x96xf32>
    %cst_64 = arith.constant 1.000000e+00 : f32
    %336 = vector.broadcast %cst_64 : f32 to vector<2x96xf32>
    %337 = arith.addf %336, %335 : vector<2x96xf32>
    %338 = arith.divf %336, %337 : vector<2x96xf32>
    %339 = vector.extract_strided_slice %332 {offsets = [0, 96], sizes = [2, 32], strides = [1, 1]} : vector<2x128xf32> to vector<2x32xf32>
    %340 = math.tanh %339 : vector<2x32xf32>
    %341 = vector.extract_strided_slice %338 {offsets = [0, 0], sizes = [2, 32], strides = [1, 1]} : vector<2x96xf32> to vector<2x32xf32>
    %342 = vector.extract_strided_slice %338 {offsets = [0, 32], sizes = [2, 32], strides = [1, 1]} : vector<2x96xf32> to vector<2x32xf32>
    %343 = vector.extract_strided_slice %338 {offsets = [0, 64], sizes = [2, 32], strides = [1, 1]} : vector<2x96xf32> to vector<2x32xf32>
    %344 = arith.mulf %342, %300 : vector<2x32xf32>
    %345 = arith.mulf %341, %340 : vector<2x32xf32>
    %346 = arith.addf %344, %345 : vector<2x32xf32>
    %347 = math.tanh %346 : vector<2x32xf32>
    %348 = arith.mulf %343, %347 : vector<2x32xf32>
    %349 = tpu.concatenate %329, %348 in 1 : vector<2x32xf32>, vector<2x32xf32> -> vector<2x64xf32>
    %350 = vector.extract_strided_slice %348 {offsets = [0, 0], sizes = [1, 32], strides = [1, 1]} : vector<2x32xf32> to vector<1x32xf32>
    %c6 = arith.constant 6 : index
    %c0_65 = arith.constant 0 : index
    %351 = vector.load %arg15[%c6, %c0_65] : memref<16x32xf32, #tpu.memory_space<vmem>>, vector<1x32xf32>
    tpu.vector_store %arg15[%c6, %c0_65], %350 {strides = array<i32>} : memref<16x32xf32, #tpu.memory_space<vmem>>, vector<1x32xf32>,
    %352 = vector.extract_strided_slice %348 {offsets = [1, 0], sizes = [1, 32], strides = [1, 1]} : vector<2x32xf32> to vector<1x32xf32>
    %c14 = arith.constant 14 : index
    %c0_66 = arith.constant 0 : index
    %353 = vector.load %arg15[%c14, %c0_66] : memref<16x32xf32, #tpu.memory_space<vmem>>, vector<1x32xf32>
    tpu.vector_store %arg15[%c14, %c0_66], %352 {strides = array<i32>} : memref<16x32xf32, #tpu.memory_space<vmem>>, vector<1x32xf32>,
    %cst_67 = arith.constant dense<0.000000e+00> : vector<2x256xf32>
    %354 = tpu.matmul %349, %24, %cst_67 {dimension_numbers = #tpu.dot_dimension_numbers<[1], [0], [0], [1], [0, 0, 1, 1], [], []>} : vector<2x64xf32>, vector<64x256xf32>, vector<2x256xf32> -> vector<2x256xf32>
    %355 = vector.broadcast %25 : vector<1x256xf32> to vector<2x256xf32>
    %356 = arith.addf %354, %355 : vector<2x256xf32>
    %357 = vector.extract_strided_slice %356 {offsets = [0, 0], sizes = [2, 128], strides = [1, 1]} : vector<2x256xf32> to vector<2x128xf32>
    %358 = vector.extract_strided_slice %27 {offsets = [14, 0], sizes = [2, 128], strides = [1, 1]} : vector<16x128xf32> to vector<2x128xf32>
    %359 = arith.addf %357, %358 : vector<2x128xf32>
    %360 = vector.extract_strided_slice %359 {offsets = [0, 0], sizes = [2, 96], strides = [1, 1]} : vector<2x128xf32> to vector<2x96xf32>
    %361 = arith.negf %360 : vector<2x96xf32>
    %362 = math.exp %361 : vector<2x96xf32>
    %cst_68 = arith.constant 1.000000e+00 : f32
    %363 = vector.broadcast %cst_68 : f32 to vector<2x96xf32>
    %364 = arith.addf %363, %362 : vector<2x96xf32>
    %365 = arith.divf %363, %364 : vector<2x96xf32>
    %366 = vector.extract_strided_slice %359 {offsets = [0, 96], sizes = [2, 32], strides = [1, 1]} : vector<2x128xf32> to vector<2x32xf32>
    %367 = math.tanh %366 : vector<2x32xf32>
    %368 = vector.extract_strided_slice %365 {offsets = [0, 0], sizes = [2, 32], strides = [1, 1]} : vector<2x96xf32> to vector<2x32xf32>
    %369 = vector.extract_strided_slice %365 {offsets = [0, 32], sizes = [2, 32], strides = [1, 1]} : vector<2x96xf32> to vector<2x32xf32>
    %370 = vector.extract_strided_slice %365 {offsets = [0, 64], sizes = [2, 32], strides = [1, 1]} : vector<2x96xf32> to vector<2x32xf32>
    %371 = arith.mulf %369, %327 : vector<2x32xf32>
    %372 = arith.mulf %368, %367 : vector<2x32xf32>
    %373 = arith.addf %371, %372 : vector<2x32xf32>
    %374 = math.tanh %373 : vector<2x32xf32>
    %375 = arith.mulf %370, %374 : vector<2x32xf32>
    %376 = vector.extract_strided_slice %356 {offsets = [0, 128], sizes = [2, 128], strides = [1, 1]} : vector<2x256xf32> to vector<2x128xf32>
    %cst_69 = arith.constant dense<0.000000e+00> : vector<2x128xf32>
    %377 = tpu.matmul %375, %23, %cst_69 {dimension_numbers = #tpu.dot_dimension_numbers<[1], [0], [0], [1], [0, 0, 1, 1], [], []>} : vector<2x32xf32>, vector<32x128xf32>, vector<2x128xf32> -> vector<2x128xf32>
    %378 = arith.addf %376, %377 : vector<2x128xf32>
    %379 = vector.extract_strided_slice %378 {offsets = [0, 0], sizes = [2, 96], strides = [1, 1]} : vector<2x128xf32> to vector<2x96xf32>
    %380 = arith.negf %379 : vector<2x96xf32>
    %381 = math.exp %380 : vector<2x96xf32>
    %cst_70 = arith.constant 1.000000e+00 : f32
    %382 = vector.broadcast %cst_70 : f32 to vector<2x96xf32>
    %383 = arith.addf %382, %381 : vector<2x96xf32>
    %384 = arith.divf %382, %383 : vector<2x96xf32>
    %385 = vector.extract_strided_slice %378 {offsets = [0, 96], sizes = [2, 32], strides = [1, 1]} : vector<2x128xf32> to vector<2x32xf32>
    %386 = math.tanh %385 : vector<2x32xf32>
    %387 = vector.extract_strided_slice %384 {offsets = [0, 0], sizes = [2, 32], strides = [1, 1]} : vector<2x96xf32> to vector<2x32xf32>
    %388 = vector.extract_strided_slice %384 {offsets = [0, 32], sizes = [2, 32], strides = [1, 1]} : vector<2x96xf32> to vector<2x32xf32>
    %389 = vector.extract_strided_slice %384 {offsets = [0, 64], sizes = [2, 32], strides = [1, 1]} : vector<2x96xf32> to vector<2x32xf32>
    %390 = arith.mulf %388, %346 : vector<2x32xf32>
    %391 = arith.mulf %387, %386 : vector<2x32xf32>
    %392 = arith.addf %390, %391 : vector<2x32xf32>
    %393 = math.tanh %392 : vector<2x32xf32>
    %394 = arith.mulf %389, %393 : vector<2x32xf32>
    %395 = vector.extract_strided_slice %394 {offsets = [0, 0], sizes = [1, 32], strides = [1, 1]} : vector<2x32xf32> to vector<1x32xf32>
    %c7 = arith.constant 7 : index
    %c0_71 = arith.constant 0 : index
    %396 = vector.load %arg15[%c7, %c0_71] : memref<16x32xf32, #tpu.memory_space<vmem>>, vector<1x32xf32>
    tpu.vector_store %arg15[%c7, %c0_71], %395 {strides = array<i32>} : memref<16x32xf32, #tpu.memory_space<vmem>>, vector<1x32xf32>,
    %397 = vector.extract_strided_slice %394 {offsets = [1, 0], sizes = [1, 32], strides = [1, 1]} : vector<2x32xf32> to vector<1x32xf32>
    %c15 = arith.constant 15 : index
    %c0_72 = arith.constant 0 : index
    %398 = vector.load %arg15[%c15, %c0_72] : memref<16x32xf32, #tpu.memory_space<vmem>>, vector<1x32xf32>
    tpu.vector_store %arg15[%c15, %c0_72], %397 {strides = array<i32>} : memref<16x32xf32, #tpu.memory_space<vmem>>, vector<1x32xf32>,
    %c0_73 = arith.constant 0 : index
    %c0_74 = arith.constant 0 : index
    %399 = vector.load %arg12[%c0_73, %c0_74] : memref<1x32xf32, #tpu.memory_space<vmem>>, vector<1x32xf32>
    %400 = vector.shape_cast %399 : vector<1x32xf32> to vector<1x1x1x32xf32>
    %c0_75 = arith.constant 0 : index
    %c0_76 = arith.constant 0 : index
    %401 = vector.load %arg13[%c0_75, %c0_76] : memref<1x32xf32, #tpu.memory_space<vmem>>, vector<1x32xf32>
    %402 = vector.shape_cast %401 : vector<1x32xf32> to vector<1x1x1x32xf32>
    %c0_77 = arith.constant 0 : index
    %c0_78 = arith.constant 0 : index
    %403 = vector.load %arg15[%c0_77, %c0_78] : memref<16x32xf32, #tpu.memory_space<vmem>>, vector<16x32xf32>
    %c0_79 = arith.constant 0 : index
    %c0_80 = arith.constant 0 : index
    %404 = vector.load %arg11[%c0_79, %c0_80] : memref<32x32xf32, #tpu.memory_space<vmem>>, vector<32x32xf32>
    %cst_81 = arith.constant dense<0.000000e+00> : vector<16x32xf32>
    %405 = tpu.matmul %403, %404, %cst_81 {dimension_numbers = #tpu.dot_dimension_numbers<[1], [0], [0], [1], [0, 0, 1, 1], [], []>} : vector<16x32xf32>, vector<32x32xf32>, vector<16x32xf32> -> vector<16x32xf32>
    %406 = vector.shape_cast %405 : vector<16x32xf32> to vector<2x8x32xf32>
    %407 = vector.shape_cast %5 : vector<2x8x32xf32> to vector<2x1x8x32xf32>
    %408 = vector.shape_cast %406 : vector<2x8x32xf32> to vector<2x8x1x32xf32>
    %409 = vector.broadcast %407 : vector<2x1x8x32xf32> to vector<2x8x8x32xf32>
    %410 = vector.broadcast %408 : vector<2x8x1x32xf32> to vector<2x8x8x32xf32>
    %411 = arith.addf %409, %410 : vector<2x8x8x32xf32>
    %412 = math.tanh %411 : vector<2x8x8x32xf32>
    %413 = vector.broadcast %400 : vector<1x1x1x32xf32> to vector<2x8x8x32xf32>
    %414 = arith.mulf %412, %413 : vector<2x8x8x32xf32>
    %cst_82 = arith.constant dense<0.000000e+00> : vector<2x8x8xf32>
    %415 = vector.multi_reduction <add>, %414, %cst_82 [3] : vector<2x8x8x32xf32> to vector<2x8x8xf32>
    %416 = vector.broadcast %21 : vector<2x1x8xf32> to vector<2x8x8xf32>
    %417 = arith.addf %415, %416 : vector<2x8x8xf32>
    %cst_83 = arith.constant dense<0xFF800000> : vector<2x8xf32>
    %418 = vector.multi_reduction <maximumf>, %417, %cst_83 [2] : vector<2x8x8xf32> to vector<2x8xf32>
    %419 = vector.shape_cast %418 : vector<2x8xf32> to vector<2x8x1xf32>
    %420 = vector.broadcast %419 : vector<2x8x1xf32> to vector<2x8x8xf32>
    %421 = arith.subf %417, %420 : vector<2x8x8xf32>
    %422 = math.exp %421 : vector<2x8x8xf32>
    %cst_84 = arith.constant dense<0.000000e+00> : vector<2x8xf32>
    %423 = vector.multi_reduction <add>, %422, %cst_84 [2] : vector<2x8x8xf32> to vector<2x8xf32>
    %424 = vector.shape_cast %423 : vector<2x8xf32> to vector<2x8x1xf32>
    %425 = tpu.reciprocal %424 {approx = true} : vector<2x8x1xf32> -> vector<2x8x1xf32>
    %426 = vector.broadcast %425 : vector<2x8x1xf32> to vector<2x8x8xf32>
    %427 = arith.mulf %422, %426 : vector<2x8x8xf32>
    "tpu.trace_start"() <{level = 10 : i32, message = "btn,bnh->bth"}> : () -> ()
    %cst_85 = arith.constant dense<0.000000e+00> : vector<2x8x32xf32>
    %428 = tpu.matmul %427, %6, %cst_85 {dimension_numbers = #tpu.dot_dimension_numbers<[2], [1], [1], [2], [0, 0, 0, 1, 1, 2], [0], [0]>} : vector<2x8x8xf32>, vector<2x8x32xf32>, vector<2x8x32xf32> -> vector<2x8x32xf32>
    "tpu.trace_stop"() : () -> ()
    %429 = vector.shape_cast %5 : vector<2x8x32xf32> to vector<2x1x8x32xf32>
    %430 = vector.shape_cast %428 : vector<2x8x32xf32> to vector<2x8x1x32xf32>
    %431 = vector.broadcast %429 : vector<2x1x8x32xf32> to vector<2x8x8x32xf32>
    %432 = vector.broadcast %430 : vector<2x8x1x32xf32> to vector<2x8x8x32xf32>
    %433 = arith.addf %431, %432 : vector<2x8x8x32xf32>
    %434 = math.tanh %433 : vector<2x8x8x32xf32>
    %435 = vector.broadcast %400 : vector<1x1x1x32xf32> to vector<2x8x8x32xf32>
    %436 = arith.mulf %434, %435 : vector<2x8x8x32xf32>
    %cst_86 = arith.constant dense<0.000000e+00> : vector<2x8x8xf32>
    %437 = vector.multi_reduction <add>, %436, %cst_86 [3] : vector<2x8x8x32xf32> to vector<2x8x8xf32>
    %438 = vector.broadcast %21 : vector<2x1x8xf32> to vector<2x8x8xf32>
    %439 = arith.addf %437, %438 : vector<2x8x8xf32>
    %cst_87 = arith.constant dense<0xFF800000> : vector<2x8xf32>
    %440 = vector.multi_reduction <maximumf>, %439, %cst_87 [2] : vector<2x8x8xf32> to vector<2x8xf32>
    %441 = vector.shape_cast %440 : vector<2x8xf32> to vector<2x8x1xf32>
    %442 = vector.broadcast %441 : vector<2x8x1xf32> to vector<2x8x8xf32>
    %443 = arith.subf %439, %442 : vector<2x8x8xf32>
    %444 = math.exp %443 : vector<2x8x8xf32>
    %cst_88 = arith.constant dense<0.000000e+00> : vector<2x8xf32>
    %445 = vector.multi_reduction <add>, %444, %cst_88 [2] : vector<2x8x8xf32> to vector<2x8xf32>
    %446 = vector.shape_cast %445 : vector<2x8xf32> to vector<2x8x1xf32>
    %447 = tpu.reciprocal %446 {approx = true} : vector<2x8x1xf32> -> vector<2x8x1xf32>
    %448 = vector.broadcast %447 : vector<2x8x1xf32> to vector<2x8x8xf32>
    %449 = arith.mulf %444, %448 : vector<2x8x8xf32>
    "tpu.trace_start"() <{level = 10 : i32, message = "btn,bnh->bth"}> : () -> ()
    %cst_89 = arith.constant dense<0.000000e+00> : vector<2x8x32xf32>
    %450 = tpu.matmul %449, %7, %cst_89 {dimension_numbers = #tpu.dot_dimension_numbers<[2], [1], [1], [2], [0, 0, 0, 1, 1, 2], [0], [0]>} : vector<2x8x8xf32>, vector<2x8x32xf32>, vector<2x8x32xf32> -> vector<2x8x32xf32>
    "tpu.trace_stop"() : () -> ()
    %451 = vector.shape_cast %4 : vector<2x8x32xf32> to vector<2x1x8x32xf32>
    %452 = vector.shape_cast %450 : vector<2x8x32xf32> to vector<2x8x1x32xf32>
    %453 = vector.broadcast %451 : vector<2x1x8x32xf32> to vector<2x8x8x32xf32>
    %454 = vector.broadcast %452 : vector<2x8x1x32xf32> to vector<2x8x8x32xf32>
    %455 = arith.addf %453, %454 : vector<2x8x8x32xf32>
    %456 = math.tanh %455 : vector<2x8x8x32xf32>
    %457 = vector.broadcast %402 : vector<1x1x1x32xf32> to vector<2x8x8x32xf32>
    %458 = arith.mulf %456, %457 : vector<2x8x8x32xf32>
    %cst_90 = arith.constant dense<0.000000e+00> : vector<2x8x8xf32>
    %459 = vector.multi_reduction <add>, %458, %cst_90 [3] : vector<2x8x8x32xf32> to vector<2x8x8xf32>
    %c0_91 = arith.constant 0 : index
    %c0_92 = arith.constant 0 : index
    %c0_93 = arith.constant 0 : index
    %460 = vector.load %arg14[%c0_91, %c0_92, %c0_93] : memref<2x8x8xf32, #tpu.memory_space<vmem>>, vector<2x8x8xf32>
    tpu.vector_store %arg14[%c0_91, %c0_92, %c0_93], %459 {strides = array<i32>} : memref<2x8x8xf32, #tpu.memory_space<vmem>>, vector<2x8x8xf32>,
    return
  }
  func.func @transform_0(%arg0: i32, %arg1: memref<2xi32, #tpu.memory_space<smem>>) -> (i32, i32) {
    %c0_i32 = arith.constant 0 : i32
    %c0_i32_0 = arith.constant 0 : i32
    %c0_i32_1 = arith.constant 0 : i32
    return %c0_i32, %c0_i32_0 : i32, i32
  }
  func.func @transform_1(%arg0: i32, %arg1: memref<2xi32, #tpu.memory_space<smem>>) -> (i32, i32) {
    %c0_i32 = arith.constant 0 : i32
    %c0_i32_0 = arith.constant 0 : i32
    %c0_i32_1 = arith.constant 0 : i32
    return %c0_i32, %c0_i32_0 : i32, i32
  }
  func.func @transform_2(%arg0: i32, %arg1: memref<2xi32, #tpu.memory_space<smem>>) -> (i32, i32) {
    %c0_i32 = arith.constant 0 : i32
    %c0_i32_0 = arith.constant 0 : i32
    %c0_i32_1 = arith.constant 0 : i32
    return %c0_i32, %c0_i32_0 : i32, i32
  }
  func.func @transform_3(%arg0: i32, %arg1: memref<2xi32, #tpu.memory_space<smem>>) -> (i32, i32) {
    %c0_i32 = arith.constant 0 : i32
    %c0_i32_0 = arith.constant 0 : i32
    %c0_i32_1 = arith.constant 0 : i32
    return %c0_i32, %c0_i32_0 : i32, i32
  }
  func.func @transform_4(%arg0: i32, %arg1: memref<2xi32, #tpu.memory_space<smem>>) -> (i32, i32) {
    %c0_i32 = arith.constant 0 : i32
    %c0_i32_0 = arith.constant 0 : i32
    %c0_i32_1 = arith.constant 0 : i32
    return %c0_i32, %c0_i32_0 : i32, i32
  }
  func.func @transform_5(%arg0: i32, %arg1: memref<2xi32, #tpu.memory_space<smem>>) -> (i32, i32) {
    %c0_i32 = arith.constant 0 : i32
    %c0_i32_0 = arith.constant 0 : i32
    %c0_i32_1 = arith.constant 0 : i32
    return %c0_i32, %c0_i32_0 : i32, i32
  }
  func.func @transform_6(%arg0: i32, %arg1: memref<2xi32, #tpu.memory_space<smem>>) -> (i32, i32) {
    %c0_i32 = arith.constant 0 : i32
    %c0_i32_0 = arith.constant 0 : i32
    %c0_i32_1 = arith.constant 0 : i32
    return %c0_i32, %c0_i32_0 : i32, i32
  }
  func.func @transform_7(%arg0: i32, %arg1: memref<2xi32, #tpu.memory_space<smem>>) -> (i32, i32) {
    %c0_i32 = arith.constant 0 : i32
    %c0_i32_0 = arith.constant 0 : i32
    %c0_i32_1 = arith.constant 0 : i32
    return %c0_i32, %c0_i32_0 : i32, i32
  }
  func.func @transform_8(%arg0: i32, %arg1: memref<2xi32, #tpu.memory_space<smem>>) -> (i32, i32) {
    %c0_i32 = arith.constant 0 : i32
    %c0_i32_0 = arith.constant 0 : i32
    %c0_i32_1 = arith.constant 0 : i32
    return %c0_i32, %c0_i32_0 : i32, i32
  }
  func.func @transform_9(%arg0: i32, %arg1: memref<2xi32, #tpu.memory_space<smem>>) -> (i32, i32) {
    %c0_i32 = arith.constant 0 : i32
    %c0_i32_0 = arith.constant 0 : i32
    %c0_i32_1 = arith.constant 0 : i32
    return %c0_i32, %c0_i32_0 : i32, i32
  }
  func.func @transform_10(%arg0: i32, %arg1: memref<2xi32, #tpu.memory_space<smem>>) -> (i32, i32) {
    %c0_i32 = arith.constant 0 : i32
    %c0_i32_0 = arith.constant 0 : i32
    %c0_i32_1 = arith.constant 0 : i32
    return %c0_i32, %c0_i32_0 : i32, i32
  }
  func.func @transform_11(%arg0: i32, %arg1: memref<2xi32, #tpu.memory_space<smem>>) -> (i32, i32) {
    %c0_i32 = arith.constant 0 : i32
    %c0_i32_0 = arith.constant 0 : i32
    %c0_i32_1 = arith.constant 0 : i32
    return %c0_i32, %c0_i32_0 : i32, i32
  }
  func.func @transform_12(%arg0: i32, %arg1: memref<2xi32, #tpu.memory_space<smem>>) -> (i32, i32, i32) {
    %c0_i32 = arith.constant 0 : i32
    %c0_i32_0 = arith.constant 0 : i32
    %c0_i32_1 = arith.constant 0 : i32
    %c0_i32_2 = arith.constant 0 : i32
    return %c0_i32, %c0_i32_0, %c0_i32_1 : i32, i32, i32
  }
}

</mosaic_0001>

<llo_original>
// kernel: tpu_custom_call.1
$region0: #{tpu_custom_call.1}
  #allocation0 [shape = 'u32[]', space=smem, size = 0x4, offset = 0x4, fixed_abs, tag = 'smem constant byte address 0x4 - core index']
  #allocation1 [shape = 'u32[144,128]{1,0:T(1,128)}', space=vmem, size = 0x12000, scoped, tag = 'internal scratch']
  #allocation2 [shape = 'f32[16,32]{1,0:T(8,128)}', space=vmem, size = 0x2000, scoped, tag = 'scratch operand']
  #allocation3 [shape = 's32[1]{0}', space=sflag, size = 0x4, scoped, tag = 'scoped memory for tpu_custom_call.1']
  #allocation4 [shape = 'u8[512]{0}', space=smem, size = 0x200, scoped, tag = 'prefetched SMEM operand 0']
  %s0 = inlined_call_operand.hbm [shape: s32[2], index: 0, kind: input, shape index: {}]
  %s1 = inlined_call_operand.hbm [shape: f32[16,16], index: 1, kind: input, shape index: {}]
  %s2 = inlined_call_operand.hbm [shape: f32[16,16], index: 2, kind: input, shape index: {}]
  %s3 = inlined_call_operand.hbm [shape: f32[16,128], index: 3, kind: input, shape index: {}]
  %s4 = inlined_call_operand.hbm [shape: f32[16,128], index: 4, kind: input, shape index: {}]
  %s5 = inlined_call_operand.hbm [shape: f32[32,128], index: 5, kind: input, shape index: {}]
  %s6 = inlined_call_operand.hbm [shape: f32[64,256], index: 6, kind: input, shape index: {}]
  %s7 = inlined_call_operand.vmem [shape: f32[1,256], index: 7, kind: input, shape index: {}]
  %s8 = inlined_call_operand.vmem [shape: f32[2,64], index: 8, kind: input, shape index: {}]
  %s9 = inlined_call_operand.hbm [shape: f32[2,64], index: 9, kind: input, shape index: {}]
  %s10 = inlined_call_operand.vmem [shape: f32[32,32], index: 10, kind: input, shape index: {}]
  %s11 = inlined_call_operand.vmem [shape: f32[1,32], index: 11, kind: input, shape index: {}]
  %s12 = inlined_call_operand.vmem [shape: f32[1,32], index: 12, kind: input, shape index: {}]
  %s13 = inlined_call_operand.hbm [shape: f32[2,8,8], index: 13, kind: output, shape index: {}]
  %s14 = sld [smem:[#allocation0]]
  $region86: #{tpu_custom_call.1} parent=0
    _
  %s16 = ssub.s32 1, %s14
  %s17 = scalar_select 0, %s16, %s14
  %19 = dma.hbm_to_smem %s0, 16, [#allocation4], [#allocation3]
  %20 = dma.done [#allocation3], 16
  %21 = sfence
  $region1: #{tpu_custom_call.1} parent=0
    #allocation5 [shape = 'u8[8192]{0}', space=vmem, size = 0x2000, scoped, tag = 'input window, operand 1, single buffered']
    #allocation6 [shape = 's32[1]{0}', space=sflag, size = 0x4, scoped, tag = 'scoped memory for tpu_custom_call.1']
    #allocation7 [shape = 's32[1]{0}', space=sflag, size = 0x4, scoped, tag = 'scoped memory for tpu_custom_call.1']
    #allocation8 [shape = 'u8[8192]{0}', space=vmem, size = 0x2000, scoped, tag = 'input window, operand 2, single buffered']
    #allocation9 [shape = 's32[1]{0}', space=sflag, size = 0x4, scoped, tag = 'scoped memory for tpu_custom_call.1']
    #allocation10 [shape = 'u8[8192]{0}', space=vmem, size = 0x2000, scoped, tag = 'input window, operand 3, single buffered']
    #allocation11 [shape = 'u8[8192]{0}', space=vmem, size = 0x2000, scoped, tag = 'input window, operand 4, single buffered']
    #allocation12 [shape = 's32[1]{0}', space=sflag, size = 0x4, scoped, tag = 'scoped memory for tpu_custom_call.1']
    #allocation13 [shape = 'u8[16384]{0}', space=vmem, size = 0x4000, scoped, tag = 'input window, operand 5, single buffered']
    #allocation14 [shape = 'u8[65536]{0}', space=vmem, size = 0x10000, scoped, tag = 'input window, operand 6, single buffered']
    #allocation15 [shape = 's32[1]{0}', space=sflag, size = 0x4, scoped, tag = 'scoped memory for tpu_custom_call.1']
    #allocation16 [shape = 'u8[1024]{0}', space=vmem, size = 0x400, scoped, tag = 'input window, operand 9, single buffered']
    #allocation17 [shape = 'u8[8192]{0}', space=vmem, size = 0x2000, scoped, tag = 'output window, operand 0, single buffered']
    %22 = vsyncpa [#allocation6], 0
    %23 = vsyncpa [#allocation9], 0
    %24 = vsyncpa [#allocation12], 0
    %25 = vsyncpa [#allocation15], 0
    %26 = vsyncpa [#allocation7], 0
    // Predicated region
    $region2: #{tpu_custom_call.1} parent=1 // pred_check
      _
    $region3: #{tpu_custom_call.1} parent=1 // pred_check_branch
      %28 = sbr.rel (0) target = $region5
    $region4: #{tpu_custom_call.1} parent=1 // pred_region
      %s30 = ssub.s32 256, 256
      %31 = vsyncadd [#allocation6], %s30
      %s32 = sshll.u32 [#allocation5], 4
      %s33 = int_to_ptr.vmem [resolvable:$true] %s32
      %38 = dma.hbm_to_vmem [thread:$0]  %s1, 256, %s33, [#allocation6], 128, 128, 8
    $region5: #{tpu_custom_call.1} parent=1 // pred_fallthru
      _
    // Predicated region
    $region6: #{tpu_custom_call.1} parent=1 // pred_check
      _
    $region7: #{tpu_custom_call.1} parent=1 // pred_check_branch
      %40 = sbr.rel (0) target = $region9
    $region8: #{tpu_custom_call.1} parent=1 // pred_region
      %s42 = ssub.s32 256, 256
      %43 = vsyncadd [#allocation9], %s42
      %s44 = sshll.u32 [#allocation8], 4
      %s45 = int_to_ptr.vmem [resolvable:$true] %s44
      %50 = dma.hbm_to_vmem [thread:$0]  %s2, 256, %s45, [#allocation9], 128, 128, 8
    $region9: #{tpu_custom_call.1} parent=1 // pred_fallthru
      _
    // Predicated region
    $region10: #{tpu_custom_call.1} parent=1 // pred_check
      _
    $region11: #{tpu_custom_call.1} parent=1 // pred_check_branch
      %52 = sbr.rel (0) target = $region13
    $region12: #{tpu_custom_call.1} parent=1 // pred_region
      %s54 = ssub.s32 256, 256
      %55 = vsyncadd [#allocation9], %s54
      %s56 = sshll.u32 [#allocation10], 4
      %s57 = int_to_ptr.vmem [resolvable:$true] %s56
      %62 = dma.hbm_to_vmem [thread:$0]  %s3, 256, %s57, [#allocation9], 128, 128, 8
    $region13: #{tpu_custom_call.1} parent=1 // pred_fallthru
      _
    // Predicated region
    $region14: #{tpu_custom_call.1} parent=1 // pred_check
      _
    $region15: #{tpu_custom_call.1} parent=1 // pred_check_branch
      %64 = sbr.rel (0) target = $region17
    $region16: #{tpu_custom_call.1} parent=1 // pred_region
      %s66 = ssub.s32 256, 256
      %67 = vsyncadd [#allocation12], %s66
      %s68 = sshll.u32 [#allocation11], 4
      %s69 = int_to_ptr.vmem [resolvable:$true] %s68
      %74 = dma.hbm_to_vmem [thread:$0]  %s4, 256, %s69, [#allocation12], 128, 128, 8
    $region17: #{tpu_custom_call.1} parent=1 // pred_fallthru
      _
    // Predicated region
    $region18: #{tpu_custom_call.1} parent=1 // pred_check
      _
    $region19: #{tpu_custom_call.1} parent=1 // pred_check_branch
      %76 = sbr.rel (0) target = $region21
    $region20: #{tpu_custom_call.1} parent=1 // pred_region
      %s78 = ssub.s32 512, 512
      %79 = vsyncadd [#allocation12], %s78
      %s80 = sshll.u32 [#allocation13], 4
      %s81 = int_to_ptr.vmem [resolvable:$true] %s80
      %86 = dma.hbm_to_vmem [thread:$0]  %s5, 512, %s81, [#allocation12], 128, 128, 8
    $region21: #{tpu_custom_call.1} parent=1 // pred_fallthru
      _
    // Predicated region
    $region22: #{tpu_custom_call.1} parent=1 // pred_check
      _
    $region23: #{tpu_custom_call.1} parent=1 // pred_check_branch
      %88 = sbr.rel (0) target = $region25
    $region24: #{tpu_custom_call.1} parent=1 // pred_region
      %s90 = ssub.s32 2048, 2048
      %91 = vsyncadd [#allocation15], %s90
      %s92 = sshll.u32 [#allocation14], 4
      %s93 = int_to_ptr.vmem [resolvable:$true] %s92
      %98 = dma.hbm_to_vmem [thread:$0]  %s6, 2048, %s93, [#allocation15], 256, 256, 16
    $region25: #{tpu_custom_call.1} parent=1 // pred_fallthru
      _
    // Predicated region
    $region26: #{tpu_custom_call.1} parent=1 // pred_check
      _
    $region27: #{tpu_custom_call.1} parent=1 // pred_check_branch
      %100 = sbr.rel (0) target = $region29
    $region28: #{tpu_custom_call.1} parent=1 // pred_region
      _
    $region29: #{tpu_custom_call.1} parent=1 // pred_fallthru
      _
    // Predicated region
    $region30: #{tpu_custom_call.1} parent=1 // pred_check
      _
    $region31: #{tpu_custom_call.1} parent=1 // pred_check_branch
      %102 = sbr.rel (0) target = $region33
    $region32: #{tpu_custom_call.1} parent=1 // pred_region
      _
    $region33: #{tpu_custom_call.1} parent=1 // pred_fallthru
      _
    // Predicated region
    $region34: #{tpu_custom_call.1} parent=1 // pred_check
      _
    $region35: #{tpu_custom_call.1} parent=1 // pred_check_branch
      %104 = sbr.rel (0) target = $region37
    $region36: #{tpu_custom_call.1} parent=1 // pred_region
      %s106 = ssub.s32 32, 32
      %107 = vsyncadd [#allocation15], %s106
      %s109 = sshll.u32 [#allocation16], 4
      %s110 = int_to_ptr.vmem [resolvable:$true] %s109
      %112 = dma.hbm_to_vmem [thread:$0]  %s9, 32, %s110, [#allocation15]
    $region37: #{tpu_custom_call.1} parent=1 // pred_fallthru
      _
    // Predicated region
    $region38: #{tpu_custom_call.1} parent=1 // pred_check
      _
    $region39: #{tpu_custom_call.1} parent=1 // pred_check_branch
      %114 = sbr.rel (0) target = $region41
    $region40: #{tpu_custom_call.1} parent=1 // pred_region
      _
    $region41: #{tpu_custom_call.1} parent=1 // pred_fallthru
      _
    // Predicated region
    $region42: #{tpu_custom_call.1} parent=1 // pred_check
      _
    $region43: #{tpu_custom_call.1} parent=1 // pred_check_branch
      %116 = sbr.rel (0) target = $region45
    $region44: #{tpu_custom_call.1} parent=1 // pred_region
      _
    $region45: #{tpu_custom_call.1} parent=1 // pred_fallthru
      _
    // Predicated region
    $region46: #{tpu_custom_call.1} parent=1 // pred_check
      _
    $region47: #{tpu_custom_call.1} parent=1 // pred_check_branch
      %118 = sbr.rel (0) target = $region49
    $region48: #{tpu_custom_call.1} parent=1 // pred_region
      _
    $region49: #{tpu_custom_call.1} parent=1 // pred_fallthru
      _
    // Predicated region
    $region50: #{tpu_custom_call.1} parent=1 // pred_check
      _
    $region51: #{tpu_custom_call.1} parent=1 // pred_check_branch
      %120 = sbr.rel (0) target = $region53
    $region52: #{tpu_custom_call.1} parent=1 // pred_region
      %121 = dma.done [#allocation6], 256
    $region53: #{tpu_custom_call.1} parent=1 // pred_fallthru
      _
    // Predicated region
    $region54: #{tpu_custom_call.1} parent=1 // pred_check
      _
    $region55: #{tpu_custom_call.1} parent=1 // pred_check_branch
      %123 = sbr.rel (0) target = $region57
    $region56: #{tpu_custom_call.1} parent=1 // pred_region
      %124 = dma.done [#allocation9], 256
    $region57: #{tpu_custom_call.1} parent=1 // pred_fallthru
      _
    // Predicated region
    $region58: #{tpu_custom_call.1} parent=1 // pred_check
      _
    $region59: #{tpu_custom_call.1} parent=1 // pred_check_branch
      %126 = sbr.rel (0) target = $region61
    $region60: #{tpu_custom_call.1} parent=1 // pred_region
      %127 = dma.done [#allocation9], 256
    $region61: #{tpu_custom_call.1} parent=1 // pred_fallthru
      _
    // Predicated region
    $region62: #{tpu_custom_call.1} parent=1 // pred_check
      _
    $region63: #{tpu_custom_call.1} parent=1 // pred_check_branch
      %129 = sbr.rel (0) target = $region65
    $region64: #{tpu_custom_call.1} parent=1 // pred_region
      %130 = dma.done [#allocation12], 256
    $region65: #{tpu_custom_call.1} parent=1 // pred_fallthru
      _
    // Predicated region
    $region66: #{tpu_custom_call.1} parent=1 // pred_check
      _
    $region67: #{tpu_custom_call.1} parent=1 // pred_check_branch
      %132 = sbr.rel (0) target = $region69
    $region68: #{tpu_custom_call.1} parent=1 // pred_region
      %133 = dma.done [#allocation12], 512
    $region69: #{tpu_custom_call.1} parent=1 // pred_fallthru
      _
    // Predicated region
    $region70: #{tpu_custom_call.1} parent=1 // pred_check
      _
    $region71: #{tpu_custom_call.1} parent=1 // pred_check_branch
      %135 = sbr.rel (0) target = $region73
    $region72: #{tpu_custom_call.1} parent=1 // pred_region
      %136 = dma.done [#allocation15], 2048
    $region73: #{tpu_custom_call.1} parent=1 // pred_fallthru
      _
    // Predicated region
    $region74: #{tpu_custom_call.1} parent=1 // pred_check
      _
    $region75: #{tpu_custom_call.1} parent=1 // pred_check_branch
      %138 = sbr.rel (0) target = $region77
    $region76: #{tpu_custom_call.1} parent=1 // pred_region
      %139 = dma.done [#allocation15], 32
    $region77: #{tpu_custom_call.1} parent=1 // pred_fallthru
      _
    %v140 = vld [vmem:[#allocation5] sm:$0xff]
    %v141 = vld [vmem:[#allocation5 + $0x8] sm:$0xff]
    %v142 = vld [vmem:[#allocation10] sm:$0xff]
    %v143 = vld [vmem:[#allocation10 + $0x8] sm:$0xff]
    %vm144 = vcmask 130048
    %v146 = vsel %vm144, %v140, 0
    %v149 = vsel %vm144, %v141, 0
    %151 = vmatprep.subr.mxu0 0.0
    %152 = vmatpush1.msra.mxu0 %v142
    %153 = vmatprep.subr.mxu0 0.0
    %154 = vmatpush1.msra.mxu0 %v143
    %155 = vmatprep.subr.mxu0 0.0
    %156 = vmatpush1.msra.mxu0 0.0
    %157 = vmatprep.subr.mxu0 0.0
    %158 = vmatpush1.msra.mxu0 0.0
    %159 = vmatprep.subr.mxu0 0.0
    %160 = vmatpush1.msra.mxu0 0.0
    %161 = vmatprep.subr.mxu0 0.0
    %162 = vmatpush1.msra.mxu0 0.0
    %163 = vmatprep.subr.mxu0 0.0
    %164 = vmatpush1.msra.mxu0 0.0
    %165 = vmatprep.subr.mxu0 0.0
    %166 = vmatpush1.msra.mxu0 0.0
    %167 = vmatprep.subr.mxu0 0.0
    %168 = vmatpush1.msra.mxu0 0.0
    %169 = vmatprep.subr.mxu0 0.0
    %170 = vmatpush1.msra.mxu0 0.0
    %171 = vmatprep.subr.mxu0 0.0
    %172 = vmatpush1.msra.mxu0 0.0
    %173 = vmatprep.subr.mxu0 0.0
    %174 = vmatpush1.msra.mxu0 0.0
    %175 = vmatprep.subr.mxu0 0.0
    %176 = vmatpush1.msra.mxu0 0.0
    %177 = vmatprep.subr.mxu0 0.0
    %178 = vmatpush1.msra.mxu0 0.0
    %179 = vmatprep.subr.mxu0 0.0
    %180 = vmatpush1.msra.mxu0 0.0
    %181 = vmatprep.subr.mxu0 0.0
    %182 = vmatpush1.msra.mxu0 0.0
    %183 = vmatprep.subr.mxu0 0.0
    %184 = vmatpush1.msra.mxu0 0.0
    %185 = vmatprep.subr.mxu0 0.0
    %186 = vmatpush1.msra.mxu0 0.0
    %187 = vmatprep.subr.mxu0 0.0
    %188 = vmatpush1.msra.mxu0 0.0
    %189 = vmatprep.subr.mxu0 0.0
    %190 = vmatpush1.msra.mxu0 0.0
    %191 = vmatprep.subr.mxu0 0.0
    %192 = vmatpush1.msra.mxu0 0.0
    %193 = vmatprep.subr.mxu0 0.0
    %194 = vmatpush1.msra.mxu0 0.0
    %195 = vmatprep.subr.mxu0 0.0
    %196 = vmatpush1.msra.mxu0 0.0
    %197 = vmatprep.subr.mxu0 0.0
    %198 = vmatpush1.msra.mxu0 0.0
    %199 = vmatprep.subr.mxu0 0.0
    %200 = vmatpush1.msra.mxu0 0.0
    %201 = vmatprep.subr.mxu0 0.0
    %202 = vmatpush1.msra.mxu0 0.0
    %203 = vmatprep.subr.mxu0 0.0
    %204 = vmatpush1.msra.mxu0 0.0
    %205 = vmatprep.subr.mxu0 0.0
    %206 = vmatpush1.msra.mxu0 0.0
    %207 = vmatprep.subr.mxu0 0.0
    %208 = vmatpush1.msra.mxu0 0.0
    %209 = vmatprep.subr.mxu0 0.0
    %210 = vmatpush1.msra.mxu0 0.0
    %211 = vmatprep.subr.mxu0 0.0
    %212 = vmatpush1.msra.mxu0 0.0
    %213 = vmatprep.subr.mxu0 0.0
    %214 = vmatpush1.msra.mxu0 0.0
    %215 = vmatprep.mubr.f32.mxu0 0.0
    %216 = vmatmul.mubr.f32.gmra.mrb[0].mxu0 %v146
    %v217 = vpop.f32.mrb[0].mxu0
    %v218 = vadd.f32 0.0, %v217
    %v219 = vpop.f32.mrb[0].mxu0
    %220 = vmatprep.mubr.f32.mxu0 0.0
    %221 = vmatmul.mubr.f32.gmra.mrb[0].mxu0 %v149
    %v222 = vpop.f32.mrb[0].mxu0
    %v223 = vadd.f32 0.0, %v222
    %v224 = vpop.f32.mrb[0].mxu0
    %225 = vdwg.mxu0
    %v226 = vlaneseq
    %v227 = vand.u32 %v226, 127
    %s228 = sld [smem:[#allocation4]]
    %v229 = vstv %s228
    %vm230 = vcmp.lt.s32.totalorder %v227, %v229
    %v231 = vsel %vm230, 0.0, -1e+18
    %s232 = sld [smem:[#allocation4 + $0x1]]
    %v233 = vstv %s232
    %vm234 = vcmp.lt.s32.totalorder %v227, %v233
    %v235 = vsel %vm234, 0.0, -1e+18
    %v236 = vld [vmem:[#allocation11] sm:$0xff]
    %v237 = vld [vmem:[#allocation11 + $0x8] sm:$0xff]
    %v238 = vld [vmem:[#allocation13] sm:$0xff]
    %v239 = vld [vmem:[#allocation13 + $0x8] sm:$0xff]
    %v240 = vld [vmem:[#allocation13 + $0x10] sm:$0xff]
    %v241 = vld [vmem:[#allocation13 + $0x18] sm:$0xff]
    %v242 = vld [vmem:[#allocation14] sm:$0xff]
    %v243 = vld [vmem:[#allocation14 + $0x8] sm:$0xff]
    %v244 = vld [vmem:[#allocation14 + $0x10] sm:$0xff]
    %v245 = vld [vmem:[#allocation14 + $0x18] sm:$0xff]
    %v246 = vld [vmem:[#allocation14 + $0x20] sm:$0xff]
    %v247 = vld [vmem:[#allocation14 + $0x28] sm:$0xff]
    %v248 = vld [vmem:[#allocation14 + $0x30] sm:$0xff]
    %v249 = vld [vmem:[#allocation14 + $0x38] sm:$0xff]
    %v250 = vld [vmem:[#allocation14 + $0x40] sm:$0xff]
    %v251 = vld [vmem:[#allocation14 + $0x48] sm:$0xff]
    %v252 = vld [vmem:[#allocation14 + $0x50] sm:$0xff]
    %v253 = vld [vmem:[#allocation14 + $0x58] sm:$0xff]
    %v254 = vld [vmem:[#allocation14 + $0x60] sm:$0xff]
    %v255 = vld [vmem:[#allocation14 + $0x68] sm:$0xff]
    %v256 = vld [vmem:[#allocation14 + $0x70] sm:$0xff]
    %v257 = vld [vmem:[#allocation14 + $0x78] sm:$0xff]
    %v258 = vld [vmem:[%s7] sm:$0x3]
    %v259 = vld [vmem:[#allocation8] sm:$0xff]
    %v260 = vld [vmem:[#allocation8 + $0x8] sm:$0xff]
    %v262 = vsel %vm144, %v259, 0
    %v265 = vsel %vm144, %v260, 0
    %267 = vmatprep.subr.mxu0 0.0
    %268 = vmatpush1.msra.mxu0 %v236
    %269 = vmatprep.subr.mxu0 0.0
    %270 = vmatpush1.msra.mxu0 %v237
    %271 = vmatprep.subr.mxu0 0.0
    %272 = vmatpush1.msra.mxu0 0.0
    %273 = vmatprep.subr.mxu0 0.0
    %274 = vmatpush1.msra.mxu0 0.0
    %275 = vmatprep.subr.mxu0 0.0
    %276 = vmatpush1.msra.mxu0 0.0
    %277 = vmatprep.subr.mxu0 0.0
    %278 = vmatpush1.msra.mxu0 0.0
    %279 = vmatprep.subr.mxu0 0.0
    %280 = vmatpush1.msra.mxu0 0.0
    %281 = vmatprep.subr.mxu0 0.0
    %282 = vmatpush1.msra.mxu0 0.0
    %283 = vmatprep.subr.mxu0 0.0
    %284 = vmatpush1.msra.mxu0 0.0
    %285 = vmatprep.subr.mxu0 0.0
    %286 = vmatpush1.msra.mxu0 0.0
    %287 = vmatprep.subr.mxu0 0.0
    %288 = vmatpush1.msra.mxu0 0.0
    %289 = vmatprep.subr.mxu0 0.0
    %290 = vmatpush1.msra.mxu0 0.0
    %291 = vmatprep.subr.mxu0 0.0
    %292 = vmatpush1.msra.mxu0 0.0
    %293 = vmatprep.subr.mxu0 0.0
    %294 = vmatpush1.msra.mxu0 0.0
    %295 = vmatprep.subr.mxu0 0.0
    %296 = vmatpush1.msra.mxu0 0.0
    %297 = vmatprep.subr.mxu0 0.0
    %298 = vmatpush1.msra.mxu0 0.0
    %299 = vmatprep.subr.mxu0 0.0
    %300 = vmatpush1.msra.mxu0 0.0
    %301 = vmatprep.subr.mxu0 0.0
    %302 = vmatpush1.msra.mxu0 0.0
    %303 = vmatprep.subr.mxu0 0.0
    %304 = vmatpush1.msra.mxu0 0.0
    %305 = vmatprep.subr.mxu0 0.0
    %306 = vmatpush1.msra.mxu0 0.0
    %307 = vmatprep.subr.mxu0 0.0
    %308 = vmatpush1.msra.mxu0 0.0
    %309 = vmatprep.subr.mxu0 0.0
    %310 = vmatpush1.msra.mxu0 0.0
    %311 = vmatprep.subr.mxu0 0.0
    %312 = vmatpush1.msra.mxu0 0.0
    %313 = vmatprep.subr.mxu0 0.0
    %314 = vmatpush1.msra.mxu0 0.0
    %315 = vmatprep.subr.mxu0 0.0
    %316 = vmatpush1.msra.mxu0 0.0
    %317 = vmatprep.subr.mxu0 0.0
    %318 = vmatpush1.msra.mxu0 0.0
    %319 = vmatprep.subr.mxu0 0.0
    %320 = vmatpush1.msra.mxu0 0.0
    %321 = vmatprep.subr.mxu0 0.0
    %322 = vmatpush1.msra.mxu0 0.0
    %323 = vmatprep.subr.mxu0 0.0
    %324 = vmatpush1.msra.mxu0 0.0
    %325 = vmatprep.subr.mxu0 0.0
    %326 = vmatpush1.msra.mxu0 0.0
    %327 = vmatprep.subr.mxu0 0.0
    %328 = vmatpush1.msra.mxu0 0.0
    %329 = vmatprep.subr.mxu0 0.0
    %330 = vmatpush1.msra.mxu0 0.0
    %331 = vmatprep.mubr.f32.mxu0 0.0
    %332 = vmatmul.mubr.f32.gmra.mrb[0].mxu0 %v262
    %v333 = vpop.f32.mrb[0].mxu0
    %v334 = vadd.f32 0.0, %v333
    %v335 = vpop.f32.mrb[0].mxu0
    %336 = vmatprep.mubr.f32.mxu0 0.0
    %337 = vmatmul.mubr.f32.gmra.mrb[0].mxu0 %v265
    %v338 = vpop.f32.mrb[0].mxu0
    %v339 = vadd.f32 0.0, %v338
    %v340 = vpop.f32.mrb[0].mxu0
    %341 = vdwg.mxu0
    %v342 = vld [vmem:[%s8] sm:$0x3]
    %v343 = vld [vmem:[#allocation16] sm:$0x3]
    %v345 = vlaneseq
    %v346 = vshrl.u32 %v345, 7
    %v347 = vsub.s32 0, %v346
    %v348 = vrot.slane %v258, %v347
    %v349 = vlaneseq
    %v350 = vshrl.u32 %v349, 7
    %v351 = vsub.s32 1, %v350
    %v352 = vrot.slane %v258, %v351
    %vm355 = vcmask 523264
    %v357 = vsel %vm355, %v342, 0
    %359 = vmatprep.subr.mxu0 %v243
    %360 = vmatpush1.msra.mxu0 %v242
    %361 = vmatprep.subr.mxu0 %v245
    %362 = vmatpush1.msra.mxu0 %v244
    %363 = vmatprep.subr.mxu0 %v247
    %364 = vmatpush1.msra.mxu0 %v246
    %365 = vmatprep.subr.mxu0 %v249
    %366 = vmatpush1.msra.mxu0 %v248
    %367 = vmatprep.subr.mxu0 %v251
    %368 = vmatpush1.msra.mxu0 %v250
    %369 = vmatprep.subr.mxu0 %v253
    %370 = vmatpush1.msra.mxu0 %v252
    %371 = vmatprep.subr.mxu0 %v255
    %372 = vmatpush1.msra.mxu0 %v254
    %373 = vmatprep.subr.mxu0 %v257
    %374 = vmatpush1.msra.mxu0 %v256
    %375 = vmatprep.subr.mxu0 0.0
    %376 = vmatpush1.msra.mxu0 0.0
    %377 = vmatprep.subr.mxu0 0.0
    %378 = vmatpush1.msra.mxu0 0.0
    %379 = vmatprep.subr.mxu0 0.0
    %380 = vmatpush1.msra.mxu0 0.0
    %381 = vmatprep.subr.mxu0 0.0
    %382 = vmatpush1.msra.mxu0 0.0
    %383 = vmatprep.subr.mxu0 0.0
    %384 = vmatpush1.msra.mxu0 0.0
    %385 = vmatprep.subr.mxu0 0.0
    %386 = vmatpush1.msra.mxu0 0.0
    %387 = vmatprep.subr.mxu0 0.0
    %388 = vmatpush1.msra.mxu0 0.0
    %389 = vmatprep.subr.mxu0 0.0
    %390 = vmatpush1.msra.mxu0 0.0
    %391 = vmatprep.subr.mxu0 0.0
    %392 = vmatpush1.msra.mxu0 0.0
    %393 = vmatprep.subr.mxu0 0.0
    %394 = vmatpush1.msra.mxu0 0.0
    %395 = vmatprep.subr.mxu0 0.0
    %396 = vmatpush1.msra.mxu0 0.0
    %397 = vmatprep.subr.mxu0 0.0
    %398 = vmatpush1.msra.mxu0 0.0
    %399 = vmatprep.subr.mxu0 0.0
    %400 = vmatpush1.msra.mxu0 0.0
    %401 = vmatprep.subr.mxu0 0.0
    %402 = vmatpush1.msra.mxu0 0.0
    %403 = vmatprep.subr.mxu0 0.0
    %404 = vmatpush1.msra.mxu0 0.0
    %405 = vmatprep.subr.mxu0 0.0
    %406 = vmatpush1.msra.mxu0 0.0
    %407 = vmatprep.subr.mxu0 0.0
    %408 = vmatpush1.msra.mxu0 0.0
    %409 = vmatprep.subr.mxu0 0.0
    %410 = vmatpush1.msra.mxu0 0.0
    %411 = vmatprep.subr.mxu0 0.0
    %412 = vmatpush1.msra.mxu0 0.0
    %413 = vmatprep.subr.mxu0 0.0
    %414 = vmatpush1.msra.mxu0 0.0
    %415 = vmatprep.subr.mxu0 0.0
    %416 = vmatpush1.msra.mxu0 0.0
    %417 = vmatprep.subr.mxu0 0.0
    %418 = vmatpush1.msra.mxu0 0.0
    %419 = vmatprep.subr.mxu0 0.0
    %420 = vmatpush1.msra.mxu0 0.0
    %421 = vmatprep.subr.mxu0 0.0
    %422 = vmatpush1.msra.mxu0 0.0
    %423 = vmatprep.mubr.f32.mxu0 0.0
    %424 = vmatmul.mubr.f32.gmra.mrb[0].mxu0 %v357
    %v425 = vpop.f32.mrb[0].mxu0
    %v426 = vadd.f32 %v348, %v425
    %v427 = vpop.f32.mrb[0].mxu0
    %v428 = vadd.f32 %v352, %v427
    %429 = vdwg.mxu0
    %v430 = vadd.f32 %v426, %v334
    %v431 = vxor.u32 %v430, 2147483648
    %v432 = vmul.f32 %v431, 1.442695
    %v433 = vpow.pop %v432
    %v434 = vadd.f32 %v433, 1.0
    %v435 = vrcp.pop %v434
    %v436 = vmul.f32 1.0, %v435
    %v437 = vtanh.pop %v430
    %439 = vrot.lane.b32.xlu0 %v343, 32
    %v440 = vpop.permute.xlu0 %439
    %v442 = vmul.f32 %v436, %v440
    %444 = vrot.lane.b32.xlu0 %v437, 32
    %v445 = vpop.permute.xlu0 %444
    %v447 = vmul.f32 %v436, %v445
    %449 = vrot.lane.b32.xlu0 %v447, 32
    %v450 = vpop.permute.xlu0 %449
    %v452 = vadd.f32 %v442, %v450
    %v453 = vtanh.pop %v452
    %455 = vrot.lane.b32.xlu0 %v453, 32
    %v456 = vpop.permute.xlu0 %455
    %v458 = vmul.f32 %v436, %v456
    %460 = vrot.lane.b32.xlu0 %v458, 64
    %v461 = vpop.permute.xlu0 %460
    %vm462 = vcmask 261120
    %v463 = vsel %vm462, %v461, 0
    %465 = vmatprep.subr.mxu0 0.0
    %466 = vmatpush1.msra.mxu0 %v238
    %467 = vmatprep.subr.mxu0 0.0
    %468 = vmatpush1.msra.mxu0 %v239
    %469 = vmatprep.subr.mxu0 0.0
    %470 = vmatpush1.msra.mxu0 %v240
    %471 = vmatprep.subr.mxu0 0.0
    %472 = vmatpush1.msra.mxu0 %v241
    %473 = vmatprep.subr.mxu0 0.0
    %474 = vmatpush1.msra.mxu0 0.0
    %475 = vmatprep.subr.mxu0 0.0
    %476 = vmatpush1.msra.mxu0 0.0
    %477 = vmatprep.subr.mxu0 0.0
    %478 = vmatpush1.msra.mxu0 0.0
    %479 = vmatprep.subr.mxu0 0.0
    %480 = vmatpush1.msra.mxu0 0.0
    %481 = vmatprep.subr.mxu0 0.0
    %482 = vmatpush1.msra.mxu0 0.0
    %483 = vmatprep.subr.mxu0 0.0
    %484 = vmatpush1.msra.mxu0 0.0
    %485 = vmatprep.subr.mxu0 0.0
    %486 = vmatpush1.msra.mxu0 0.0
    %487 = vmatprep.subr.mxu0 0.0
    %488 = vmatpush1.msra.mxu0 0.0
    %489 = vmatprep.subr.mxu0 0.0
    %490 = vmatpush1.msra.mxu0 0.0
    %491 = vmatprep.subr.mxu0 0.0
    %492 = vmatpush1.msra.mxu0 0.0
    %493 = vmatprep.subr.mxu0 0.0
    %494 = vmatpush1.msra.mxu0 0.0
    %495 = vmatprep.subr.mxu0 0.0
    %496 = vmatpush1.msra.mxu0 0.0
    %497 = vmatprep.subr.mxu0 0.0
    %498 = vmatpush1.msra.mxu0 0.0
    %499 = vmatprep.subr.mxu0 0.0
    %500 = vmatpush1.msra.mxu0 0.0
    %501 = vmatprep.subr.mxu0 0.0
    %502 = vmatpush1.msra.mxu0 0.0
    %503 = vmatprep.subr.mxu0 0.0
    %504 = vmatpush1.msra.mxu0 0.0
    %505 = vmatprep.subr.mxu0 0.0
    %506 = vmatpush1.msra.mxu0 0.0
    %507 = vmatprep.subr.mxu0 0.0
    %508 = vmatpush1.msra.mxu0 0.0
    %509 = vmatprep.subr.mxu0 0.0
    %510 = vmatpush1.msra.mxu0 0.0
    %511 = vmatprep.subr.mxu0 0.0
    %512 = vmatpush1.msra.mxu0 0.0
    %513 = vmatprep.subr.mxu0 0.0
    %514 = vmatpush1.msra.mxu0 0.0
    %515 = vmatprep.subr.mxu0 0.0
    %516 = vmatpush1.msra.mxu0 0.0
    %517 = vmatprep.subr.mxu0 0.0
    %518 = vmatpush1.msra.mxu0 0.0
    %519 = vmatprep.subr.mxu0 0.0
    %520 = vmatpush1.msra.mxu0 0.0
    %521 = vmatprep.subr.mxu0 0.0
    %522 = vmatpush1.msra.mxu0 0.0
    %523 = vmatprep.subr.mxu0 0.0
    %524 = vmatpush1.msra.mxu0 0.0
    %525 = vmatprep.subr.mxu0 0.0
    %526 = vmatpush1.msra.mxu0 0.0
    %527 = vmatprep.subr.mxu0 0.0
    %528 = vmatpush1.msra.mxu0 0.0
    %529 = vmatprep.mubr.f32.mxu0 0.0
    %530 = vmatmul.mubr.f32.gmra.mrb[0].mxu0 %v463
    %v531 = vpop.f32.mrb[0].mxu0
    %v532 = vadd.f32 0.0, %v531
    %v533 = vpop.f32.mrb[0].mxu0
    %534 = vdwg.mxu0
    %v535 = vadd.f32 %v428, %v532
    %v536 = vxor.u32 %v535, 2147483648
    %v537 = vmul.f32 %v536, 1.442695
    %v538 = vpow.pop %v537
    %v539 = vadd.f32 %v538, 1.0
    %v540 = vrcp.pop %v539
    %v541 = vmul.f32 1.0, %v540
    %v542 = vtanh.pop %v535
    %v543 = vmul.f32 %v541, %v343
    %545 = vrot.lane.b32.xlu0 %v542, 32
    %v546 = vpop.permute.xlu0 %545
    %v548 = vmul.f32 %v541, %v546
    %550 = vrot.lane.b32.xlu0 %v548, 32
    %v551 = vpop.permute.xlu0 %550
    %v553 = vadd.f32 %v543, %v551
    %v554 = vtanh.pop %v553
    %556 = vrot.lane.b32.xlu0 %v554, 32
    %v557 = vpop.permute.xlu0 %556
    %v559 = vmul.f32 %v541, %v557
    %562 = vrot.lane.b32.xlu0 %v559, 96
    %v563 = vpop.permute.xlu0 %562
    %v565 = vsel %vm462, %v461, %v563
    %566 = vrot.lane.b32.xlu0 %v559, 64
    %v567 = vpop.permute.xlu0 %566
    %vm569 = vcmask 253952
    %570 = vst.msk [vmem:[#allocation2] sm:$0x1] %vm569, %v567
    %vm571 = vcmask 254977
    %572 = vst.msk [vmem:[#allocation2 + $0x7] sm:$0x2] %vm571, %v567
    %v574 = vsel %vm355, %v565, 0
    %576 = vmatprep.subr.mxu0 %v243
    %577 = vmatpush1.msra.mxu0 %v242
    %578 = vmatprep.subr.mxu0 %v245
    %579 = vmatpush1.msra.mxu0 %v244
    %580 = vmatprep.subr.mxu0 %v247
    %581 = vmatpush1.msra.mxu0 %v246
    %582 = vmatprep.subr.mxu0 %v249
    %583 = vmatpush1.msra.mxu0 %v248
    %584 = vmatprep.subr.mxu0 %v251
    %585 = vmatpush1.msra.mxu0 %v250
    %586 = vmatprep.subr.mxu0 %v253
    %587 = vmatpush1.msra.mxu0 %v252
    %588 = vmatprep.subr.mxu0 %v255
    %589 = vmatpush1.msra.mxu0 %v254
    %590 = vmatprep.subr.mxu0 %v257
    %591 = vmatpush1.msra.mxu0 %v256
    %592 = vmatprep.subr.mxu0 0.0
    %593 = vmatpush1.msra.mxu0 0.0
    %594 = vmatprep.subr.mxu0 0.0
    %595 = vmatpush1.msra.mxu0 0.0
    %596 = vmatprep.subr.mxu0 0.0
    %597 = vmatpush1.msra.mxu0 0.0
    %598 = vmatprep.subr.mxu0 0.0
    %599 = vmatpush1.msra.mxu0 0.0
    %600 = vmatprep.subr.mxu0 0.0
    %601 = vmatpush1.msra.mxu0 0.0
    %602 = vmatprep.subr.mxu0 0.0
    %603 = vmatpush1.msra.mxu0 0.0
    %604 = vmatprep.subr.mxu0 0.0
    %605 = vmatpush1.msra.mxu0 0.0
    %606 = vmatprep.subr.mxu0 0.0
    %607 = vmatpush1.msra.mxu0 0.0
    %608 = vmatprep.subr.mxu0 0.0
    %609 = vmatpush1.msra.mxu0 0.0
    %610 = vmatprep.subr.mxu0 0.0
    %611 = vmatpush1.msra.mxu0 0.0
    %612 = vmatprep.subr.mxu0 0.0
    %613 = vmatpush1.msra.mxu0 0.0
    %614 = vmatprep.subr.mxu0 0.0
    %615 = vmatpush1.msra.mxu0 0.0
    %616 = vmatprep.subr.mxu0 0.0
    %617 = vmatpush1.msra.mxu0 0.0
    %618 = vmatprep.subr.mxu0 0.0
    %619 = vmatpush1.msra.mxu0 0.0
    %620 = vmatprep.subr.mxu0 0.0
    %621 = vmatpush1.msra.mxu0 0.0
    %622 = vmatprep.subr.mxu0 0.0
    %623 = vmatpush1.msra.mxu0 0.0
    %624 = vmatprep.subr.mxu0 0.0
    %625 = vmatpush1.msra.mxu0 0.0
    %626 = vmatprep.subr.mxu0 0.0
    %627 = vmatpush1.msra.mxu0 0.0
    %628 = vmatprep.subr.mxu0 0.0
    %629 = vmatpush1.msra.mxu0 0.0
    %630 = vmatprep.subr.mxu0 0.0
    %631 = vmatpush1.msra.mxu0 0.0
    %632 = vmatprep.subr.mxu0 0.0
    %633 = vmatpush1.msra.mxu0 0.0
    %634 = vmatprep.subr.mxu0 0.0
    %635 = vmatpush1.msra.mxu0 0.0
    %636 = vmatprep.subr.mxu0 0.0
    %637 = vmatpush1.msra.mxu0 0.0
    %638 = vmatprep.subr.mxu0 0.0
    %639 = vmatpush1.msra.mxu0 0.0
    %640 = vmatprep.mubr.f32.mxu0 0.0
    %641 = vmatmul.mubr.f32.gmra.mrb[0].mxu0 %v574
    %v642 = vpop.f32.mrb[0].mxu0
    %v643 = vadd.f32 %v348, %v642
    %v644 = vpop.f32.mrb[0].mxu0
    %v645 = vadd.f32 %v352, %v644
    %646 = vdwg.mxu0
    %v648 = vrot.slane %v334, 2
    %v650 = vadd.f32 %v643, %v648
    %v651 = vxor.u32 %v650, 2147483648
    %v652 = vmul.f32 %v651, 1.442695
    %v653 = vpow.pop %v652
    %v654 = vadd.f32 %v653, 1.0
    %v655 = vrcp.pop %v654
    %v656 = vmul.f32 1.0, %v655
    %v657 = vtanh.pop %v650
    %v658 = vmul.f32 %v656, %v452
    %660 = vrot.lane.b32.xlu0 %v657, 32
    %v661 = vpop.permute.xlu0 %660
    %v663 = vmul.f32 %v656, %v661
    %665 = vrot.lane.b32.xlu0 %v663, 32
    %v666 = vpop.permute.xlu0 %665
    %v668 = vadd.f32 %v658, %v666
    %v669 = vtanh.pop %v668
    %671 = vrot.lane.b32.xlu0 %v669, 32
    %v672 = vpop.permute.xlu0 %671
    %v674 = vmul.f32 %v656, %v672
    %676 = vrot.lane.b32.xlu0 %v674, 64
    %v677 = vpop.permute.xlu0 %676
    %v678 = vsel %vm462, %v677, 0
    %680 = vmatprep.subr.mxu0 0.0
    %681 = vmatpush1.msra.mxu0 %v238
    %682 = vmatprep.subr.mxu0 0.0
    %683 = vmatpush1.msra.mxu0 %v239
    %684 = vmatprep.subr.mxu0 0.0
    %685 = vmatpush1.msra.mxu0 %v240
    %686 = vmatprep.subr.mxu0 0.0
    %687 = vmatpush1.msra.mxu0 %v241
    %688 = vmatprep.subr.mxu0 0.0
    %689 = vmatpush1.msra.mxu0 0.0
    %690 = vmatprep.subr.mxu0 0.0
    %691 = vmatpush1.msra.mxu0 0.0
    %692 = vmatprep.subr.mxu0 0.0
    %693 = vmatpush1.msra.mxu0 0.0
    %694 = vmatprep.subr.mxu0 0.0
    %695 = vmatpush1.msra.mxu0 0.0
    %696 = vmatprep.subr.mxu0 0.0
    %697 = vmatpush1.msra.mxu0 0.0
    %698 = vmatprep.subr.mxu0 0.0
    %699 = vmatpush1.msra.mxu0 0.0
    %700 = vmatprep.subr.mxu0 0.0
    %701 = vmatpush1.msra.mxu0 0.0
    %702 = vmatprep.subr.mxu0 0.0
    %703 = vmatpush1.msra.mxu0 0.0
    %704 = vmatprep.subr.mxu0 0.0
    %705 = vmatpush1.msra.mxu0 0.0
    %706 = vmatprep.subr.mxu0 0.0
    %707 = vmatpush1.msra.mxu0 0.0
    %708 = vmatprep.subr.mxu0 0.0
    %709 = vmatpush1.msra.mxu0 0.0
    %710 = vmatprep.subr.mxu0 0.0
    %711 = vmatpush1.msra.mxu0 0.0
    %712 = vmatprep.subr.mxu0 0.0
    %713 = vmatpush1.msra.mxu0 0.0
    %714 = vmatprep.subr.mxu0 0.0
    %715 = vmatpush1.msra.mxu0 0.0
    %716 = vmatprep.subr.mxu0 0.0
    %717 = vmatpush1.msra.mxu0 0.0
    %718 = vmatprep.subr.mxu0 0.0
    %719 = vmatpush1.msra.mxu0 0.0
    %720 = vmatprep.subr.mxu0 0.0
    %721 = vmatpush1.msra.mxu0 0.0
    %722 = vmatprep.subr.mxu0 0.0
    %723 = vmatpush1.msra.mxu0 0.0
    %724 = vmatprep.subr.mxu0 0.0
    %725 = vmatpush1.msra.mxu0 0.0
    %726 = vmatprep.subr.mxu0 0.0
    %727 = vmatpush1.msra.mxu0 0.0
    %728 = vmatprep.subr.mxu0 0.0
    %729 = vmatpush1.msra.mxu0 0.0
    %730 = vmatprep.subr.mxu0 0.0
    %731 = vmatpush1.msra.mxu0 0.0
    %732 = vmatprep.subr.mxu0 0.0
    %733 = vmatpush1.msra.mxu0 0.0
    %734 = vmatprep.subr.mxu0 0.0
    %735 = vmatpush1.msra.mxu0 0.0
    %736 = vmatprep.subr.mxu0 0.0
    %737 = vmatpush1.msra.mxu0 0.0
    %738 = vmatprep.subr.mxu0 0.0
    %739 = vmatpush1.msra.mxu0 0.0
    %740 = vmatprep.subr.mxu0 0.0
    %741 = vmatpush1.msra.mxu0 0.0
    %742 = vmatprep.subr.mxu0 0.0
    %743 = vmatpush1.msra.mxu0 0.0
    %744 = vmatprep.mubr.f32.mxu0 0.0
    %745 = vmatmul.mubr.f32.gmra.mrb[0].mxu0 %v678
    %v746 = vpop.f32.mrb[0].mxu0
    %v747 = vadd.f32 0.0, %v746
    %v748 = vpop.f32.mrb[0].mxu0
    %749 = vdwg.mxu0
    %v750 = vadd.f32 %v645, %v747
    %v751 = vxor.u32 %v750, 2147483648
    %v752 = vmul.f32 %v751, 1.442695
    %v753 = vpow.pop %v752
    %v754 = vadd.f32 %v753, 1.0
    %v755 = vrcp.pop %v754
    %v756 = vmul.f32 1.0, %v755
    %v757 = vtanh.pop %v750
    %v758 = vmul.f32 %v756, %v553
    %760 = vrot.lane.b32.xlu0 %v757, 32
    %v761 = vpop.permute.xlu0 %760
    %v763 = vmul.f32 %v756, %v761
    %765 = vrot.lane.b32.xlu0 %v763, 32
    %v766 = vpop.permute.xlu0 %765
    %v768 = vadd.f32 %v758, %v766
    %v769 = vtanh.pop %v768
    %771 = vrot.lane.b32.xlu0 %v769, 32
    %v772 = vpop.permute.xlu0 %771
    %v774 = vmul.f32 %v756, %v772
    %777 = vrot.lane.b32.xlu0 %v774, 96
    %v778 = vpop.permute.xlu0 %777
    %v780 = vsel %vm462, %v677, %v778
    %781 = vrot.lane.b32.xlu0 %v774, 64
    %v782 = vpop.permute.xlu0 %781
    %784 = vst.msk [vmem:[#allocation2 + $0x1] sm:$0x1] %vm569, %v782
    %785 = vst.msk [vmem:[#allocation2 + $0x8] sm:$0x2] %vm571, %v782
    %v787 = vsel %vm355, %v780, 0
    %789 = vmatprep.subr.mxu0 %v243
    %790 = vmatpush1.msra.mxu0 %v242
    %791 = vmatprep.subr.mxu0 %v245
    %792 = vmatpush1.msra.mxu0 %v244
    %793 = vmatprep.subr.mxu0 %v247
    %794 = vmatpush1.msra.mxu0 %v246
    %795 = vmatprep.subr.mxu0 %v249
    %796 = vmatpush1.msra.mxu0 %v248
    %797 = vmatprep.subr.mxu0 %v251
    %798 = vmatpush1.msra.mxu0 %v250
    %799 = vmatprep.subr.mxu0 %v253
    %800 = vmatpush1.msra.mxu0 %v252
    %801 = vmatprep.subr.mxu0 %v255
    %802 = vmatpush1.msra.mxu0 %v254
    %803 = vmatprep.subr.mxu0 %v257
    %804 = vmatpush1.msra.mxu0 %v256
    %805 = vmatprep.subr.mxu0 0.0
    %806 = vmatpush1.msra.mxu0 0.0
    %807 = vmatprep.subr.mxu0 0.0
    %808 = vmatpush1.msra.mxu0 0.0
    %809 = vmatprep.subr.mxu0 0.0
    %810 = vmatpush1.msra.mxu0 0.0
    %811 = vmatprep.subr.mxu0 0.0
    %812 = vmatpush1.msra.mxu0 0.0
    %813 = vmatprep.subr.mxu0 0.0
    %814 = vmatpush1.msra.mxu0 0.0
    %815 = vmatprep.subr.mxu0 0.0
    %816 = vmatpush1.msra.mxu0 0.0
    %817 = vmatprep.subr.mxu0 0.0
    %818 = vmatpush1.msra.mxu0 0.0
    %819 = vmatprep.subr.mxu0 0.0
    %820 = vmatpush1.msra.mxu0 0.0
    %821 = vmatprep.subr.mxu0 0.0
    %822 = vmatpush1.msra.mxu0 0.0
    %823 = vmatprep.subr.mxu0 0.0
    %824 = vmatpush1.msra.mxu0 0.0
    %825 = vmatprep.subr.mxu0 0.0
    %826 = vmatpush1.msra.mxu0 0.0
    %827 = vmatprep.subr.mxu0 0.0
    %828 = vmatpush1.msra.mxu0 0.0
    %829 = vmatprep.subr.mxu0 0.0
    %830 = vmatpush1.msra.mxu0 0.0
    %831 = vmatprep.subr.mxu0 0.0
    %832 = vmatpush1.msra.mxu0 0.0
    %833 = vmatprep.subr.mxu0 0.0
    %834 = vmatpush1.msra.mxu0 0.0
    %835 = vmatprep.subr.mxu0 0.0
    %836 = vmatpush1.msra.mxu0 0.0
    %837 = vmatprep.subr.mxu0 0.0
    %838 = vmatpush1.msra.mxu0 0.0
    %839 = vmatprep.subr.mxu0 0.0
    %840 = vmatpush1.msra.mxu0 0.0
    %841 = vmatprep.subr.mxu0 0.0
    %842 = vmatpush1.msra.mxu0 0.0
    %843 = vmatprep.subr.mxu0 0.0
    %844 = vmatpush1.msra.mxu0 0.0
    %845 = vmatprep.subr.mxu0 0.0
    %846 = vmatpush1.msra.mxu0 0.0
    %847 = vmatprep.subr.mxu0 0.0
    %848 = vmatpush1.msra.mxu0 0.0
    %849 = vmatprep.subr.mxu0 0.0
    %850 = vmatpush1.msra.mxu0 0.0
    %851 = vmatprep.subr.mxu0 0.0
    %852 = vmatpush1.msra.mxu0 0.0
    %853 = vmatprep.mubr.f32.mxu0 0.0
    %854 = vmatmul.mubr.f32.gmra.mrb[0].mxu0 %v787
    %v855 = vpop.f32.mrb[0].mxu0
    %v856 = vadd.f32 %v348, %v855
    %v857 = vpop.f32.mrb[0].mxu0
    %v858 = vadd.f32 %v352, %v857
    %859 = vdwg.mxu0
    %v860 = vrot.slane %v334, 4
    %v862 = vadd.f32 %v856, %v860
    %v863 = vxor.u32 %v862, 2147483648
    %v864 = vmul.f32 %v863, 1.442695
    %v865 = vpow.pop %v864
    %v866 = vadd.f32 %v865, 1.0
    %v867 = vrcp.pop %v866
    %v868 = vmul.f32 1.0, %v867
    %v869 = vtanh.pop %v862
    %v870 = vmul.f32 %v868, %v668
    %872 = vrot.lane.b32.xlu0 %v869, 32
    %v873 = vpop.permute.xlu0 %872
    %v875 = vmul.f32 %v868, %v873
    %877 = vrot.lane.b32.xlu0 %v875, 32
    %v878 = vpop.permute.xlu0 %877
    %v880 = vadd.f32 %v870, %v878
    %v881 = vtanh.pop %v880
    %883 = vrot.lane.b32.xlu0 %v881, 32
    %v884 = vpop.permute.xlu0 %883
    %v886 = vmul.f32 %v868, %v884
    %888 = vrot.lane.b32.xlu0 %v886, 64
    %v889 = vpop.permute.xlu0 %888
    %v890 = vsel %vm462, %v889, 0
    %892 = vmatprep.subr.mxu0 0.0
    %893 = vmatpush1.msra.mxu0 %v238
    %894 = vmatprep.subr.mxu0 0.0
    %895 = vmatpush1.msra.mxu0 %v239
    %896 = vmatprep.subr.mxu0 0.0
    %897 = vmatpush1.msra.mxu0 %v240
    %898 = vmatprep.subr.mxu0 0.0
    %899 = vmatpush1.msra.mxu0 %v241
    %900 = vmatprep.subr.mxu0 0.0
    %901 = vmatpush1.msra.mxu0 0.0
    %902 = vmatprep.subr.mxu0 0.0
    %903 = vmatpush1.msra.mxu0 0.0
    %904 = vmatprep.subr.mxu0 0.0
    %905 = vmatpush1.msra.mxu0 0.0
    %906 = vmatprep.subr.mxu0 0.0
    %907 = vmatpush1.msra.mxu0 0.0
    %908 = vmatprep.subr.mxu0 0.0
    %909 = vmatpush1.msra.mxu0 0.0
    %910 = vmatprep.subr.mxu0 0.0
    %911 = vmatpush1.msra.mxu0 0.0
    %912 = vmatprep.subr.mxu0 0.0
    %913 = vmatpush1.msra.mxu0 0.0
    %914 = vmatprep.subr.mxu0 0.0
    %915 = vmatpush1.msra.mxu0 0.0
    %916 = vmatprep.subr.mxu0 0.0
    %917 = vmatpush1.msra.mxu0 0.0
    %918 = vmatprep.subr.mxu0 0.0
    %919 = vmatpush1.msra.mxu0 0.0
    %920 = vmatprep.subr.mxu0 0.0
    %921 = vmatpush1.msra.mxu0 0.0
    %922 = vmatprep.subr.mxu0 0.0
    %923 = vmatpush1.msra.mxu0 0.0
    %924 = vmatprep.subr.mxu0 0.0
    %925 = vmatpush1.msra.mxu0 0.0
    %926 = vmatprep.subr.mxu0 0.0
    %927 = vmatpush1.msra.mxu0 0.0
    %928 = vmatprep.subr.mxu0 0.0
    %929 = vmatpush1.msra.mxu0 0.0
    %930 = vmatprep.subr.mxu0 0.0
    %931 = vmatpush1.msra.mxu0 0.0
    %932 = vmatprep.subr.mxu0 0.0
    %933 = vmatpush1.msra.mxu0 0.0
    %934 = vmatprep.subr.mxu0 0.0
    %935 = vmatpush1.msra.mxu0 0.0
    %936 = vmatprep.subr.mxu0 0.0
    %937 = vmatpush1.msra.mxu0 0.0
    %938 = vmatprep.subr.mxu0 0.0
    %939 = vmatpush1.msra.mxu0 0.0
    %940 = vmatprep.subr.mxu0 0.0
    %941 = vmatpush1.msra.mxu0 0.0
    %942 = vmatprep.subr.mxu0 0.0
    %943 = vmatpush1.msra.mxu0 0.0
    %944 = vmatprep.subr.mxu0 0.0
    %945 = vmatpush1.msra.mxu0 0.0
    %946 = vmatprep.subr.mxu0 0.0
    %947 = vmatpush1.msra.mxu0 0.0
    %948 = vmatprep.subr.mxu0 0.0
    %949 = vmatpush1.msra.mxu0 0.0
    %950 = vmatprep.subr.mxu0 0.0
    %951 = vmatpush1.msra.mxu0 0.0
    %952 = vmatprep.subr.mxu0 0.0
    %953 = vmatpush1.msra.mxu0 0.0
    %954 = vmatprep.subr.mxu0 0.0
    %955 = vmatpush1.msra.mxu0 0.0
    %956 = vmatprep.mubr.f32.mxu0 0.0
    %957 = vmatmul.mubr.f32.gmra.mrb[0].mxu0 %v890
    %v958 = vpop.f32.mrb[0].mxu0
    %v959 = vadd.f32 0.0, %v958
    %v960 = vpop.f32.mrb[0].mxu0
    %961 = vdwg.mxu0
    %v962 = vadd.f32 %v858, %v959
    %v963 = vxor.u32 %v962, 2147483648
    %v964 = vmul.f32 %v963, 1.442695
    %v965 = vpow.pop %v964
    %v966 = vadd.f32 %v965, 1.0
    %v967 = vrcp.pop %v966
    %v968 = vmul.f32 1.0, %v967
    %v969 = vtanh.pop %v962
    %v970 = vmul.f32 %v968, %v768
    %972 = vrot.lane.b32.xlu0 %v969, 32
    %v973 = vpop.permute.xlu0 %972
    %v975 = vmul.f32 %v968, %v973
    %977 = vrot.lane.b32.xlu0 %v975, 32
    %v978 = vpop.permute.xlu0 %977
    %v980 = vadd.f32 %v970, %v978
    %v981 = vtanh.pop %v980
    %983 = vrot.lane.b32.xlu0 %v981, 32
    %v984 = vpop.permute.xlu0 %983
    %v986 = vmul.f32 %v968, %v984
    %989 = vrot.lane.b32.xlu0 %v986, 96
    %v990 = vpop.permute.xlu0 %989
    %v992 = vsel %vm462, %v889, %v990
    %993 = vrot.lane.b32.xlu0 %v986, 64
    %v994 = vpop.permute.xlu0 %993
    %996 = vst.msk [vmem:[#allocation2 + $0x2] sm:$0x1] %vm569, %v994
    %997 = vst.msk [vmem:[#allocation2 + $0x9] sm:$0x2] %vm571, %v994
    %v999 = vsel %vm355, %v992, 0
    %1001 = vmatprep.subr.mxu0 %v243
    %1002 = vmatpush1.msra.mxu0 %v242
    %1003 = vmatprep.subr.mxu0 %v245
    %1004 = vmatpush1.msra.mxu0 %v244
    %1005 = vmatprep.subr.mxu0 %v247
    %1006 = vmatpush1.msra.mxu0 %v246
    %1007 = vmatprep.subr.mxu0 %v249
    %1008 = vmatpush1.msra.mxu0 %v248
    %1009 = vmatprep.subr.mxu0 %v251
    %1010 = vmatpush1.msra.mxu0 %v250
    %1011 = vmatprep.subr.mxu0 %v253
    %1012 = vmatpush1.msra.mxu0 %v252
    %1013 = vmatprep.subr.mxu0 %v255
    %1014 = vmatpush1.msra.mxu0 %v254
    %1015 = vmatprep.subr.mxu0 %v257
    %1016 = vmatpush1.msra.mxu0 %v256
    %1017 = vmatprep.subr.mxu0 0.0
    %1018 = vmatpush1.msra.mxu0 0.0
    %1019 = vmatprep.subr.mxu0 0.0
    %1020 = vmatpush1.msra.mxu0 0.0
    %1021 = vmatprep.subr.mxu0 0.0
    %1022 = vmatpush1.msra.mxu0 0.0
    %1023 = vmatprep.subr.mxu0 0.0
    %1024 = vmatpush1.msra.mxu0 0.0
    %1025 = vmatprep.subr.mxu0 0.0
    %1026 = vmatpush1.msra.mxu0 0.0
    %1027 = vmatprep.subr.mxu0 0.0
    %1028 = vmatpush1.msra.mxu0 0.0
    %1029 = vmatprep.subr.mxu0 0.0
    %1030 = vmatpush1.msra.mxu0 0.0
    %1031 = vmatprep.subr.mxu0 0.0
    %1032 = vmatpush1.msra.mxu0 0.0
    %1033 = vmatprep.subr.mxu0 0.0
    %1034 = vmatpush1.msra.mxu0 0.0
    %1035 = vmatprep.subr.mxu0 0.0
    %1036 = vmatpush1.msra.mxu0 0.0
    %1037 = vmatprep.subr.mxu0 0.0
    %1038 = vmatpush1.msra.mxu0 0.0
    %1039 = vmatprep.subr.mxu0 0.0
    %1040 = vmatpush1.msra.mxu0 0.0
    %1041 = vmatprep.subr.mxu0 0.0
    %1042 = vmatpush1.msra.mxu0 0.0
    %1043 = vmatprep.subr.mxu0 0.0
    %1044 = vmatpush1.msra.mxu0 0.0
    %1045 = vmatprep.subr.mxu0 0.0
    %1046 = vmatpush1.msra.mxu0 0.0
    %1047 = vmatprep.subr.mxu0 0.0
    %1048 = vmatpush1.msra.mxu0 0.0
    %1049 = vmatprep.subr.mxu0 0.0
    %1050 = vmatpush1.msra.mxu0 0.0
    %1051 = vmatprep.subr.mxu0 0.0
    %1052 = vmatpush1.msra.mxu0 0.0
    %1053 = vmatprep.subr.mxu0 0.0
    %1054 = vmatpush1.msra.mxu0 0.0
    %1055 = vmatprep.subr.mxu0 0.0
    %1056 = vmatpush1.msra.mxu0 0.0
    %1057 = vmatprep.subr.mxu0 0.0
    %1058 = vmatpush1.msra.mxu0 0.0
    %1059 = vmatprep.subr.mxu0 0.0
    %1060 = vmatpush1.msra.mxu0 0.0
    %1061 = vmatprep.subr.mxu0 0.0
    %1062 = vmatpush1.msra.mxu0 0.0
    %1063 = vmatprep.subr.mxu0 0.0
    %1064 = vmatpush1.msra.mxu0 0.0
    %1065 = vmatprep.mubr.f32.mxu0 0.0
    %1066 = vmatmul.mubr.f32.gmra.mrb[0].mxu0 %v999
    %v1067 = vpop.f32.mrb[0].mxu0
    %v1068 = vadd.f32 %v348, %v1067
    %v1069 = vpop.f32.mrb[0].mxu0
    %v1070 = vadd.f32 %v352, %v1069
    %1071 = vdwg.mxu0
    %v1072 = vrot.slane %v334, 6
    %v1074 = vadd.f32 %v1068, %v1072
    %v1075 = vxor.u32 %v1074, 2147483648
    %v1076 = vmul.f32 %v1075, 1.442695
    %v1077 = vpow.pop %v1076
    %v1078 = vadd.f32 %v1077, 1.0
    %v1079 = vrcp.pop %v1078
    %v1080 = vmul.f32 1.0, %v1079
    %v1081 = vtanh.pop %v1074
    %v1082 = vmul.f32 %v1080, %v880
    %1084 = vrot.lane.b32.xlu0 %v1081, 32
    %v1085 = vpop.permute.xlu0 %1084
    %v1087 = vmul.f32 %v1080, %v1085
    %1089 = vrot.lane.b32.xlu0 %v1087, 32
    %v1090 = vpop.permute.xlu0 %1089
    %v1092 = vadd.f32 %v1082, %v1090
    %v1093 = vtanh.pop %v1092
    %1095 = vrot.lane.b32.xlu0 %v1093, 32
    %v1096 = vpop.permute.xlu0 %1095
    %v1098 = vmul.f32 %v1080, %v1096
    %1100 = vrot.lane.b32.xlu0 %v1098, 64
    %v1101 = vpop.permute.xlu0 %1100
    %v1102 = vsel %vm462, %v1101, 0
    %1104 = vmatprep.subr.mxu0 0.0
    %1105 = vmatpush1.msra.mxu0 %v238
    %1106 = vmatprep.subr.mxu0 0.0
    %1107 = vmatpush1.msra.mxu0 %v239
    %1108 = vmatprep.subr.mxu0 0.0
    %1109 = vmatpush1.msra.mxu0 %v240
    %1110 = vmatprep.subr.mxu0 0.0
    %1111 = vmatpush1.msra.mxu0 %v241
    %1112 = vmatprep.subr.mxu0 0.0
    %1113 = vmatpush1.msra.mxu0 0.0
    %1114 = vmatprep.subr.mxu0 0.0
    %1115 = vmatpush1.msra.mxu0 0.0
    %1116 = vmatprep.subr.mxu0 0.0
    %1117 = vmatpush1.msra.mxu0 0.0
    %1118 = vmatprep.subr.mxu0 0.0
    %1119 = vmatpush1.msra.mxu0 0.0
    %1120 = vmatprep.subr.mxu0 0.0
    %1121 = vmatpush1.msra.mxu0 0.0
    %1122 = vmatprep.subr.mxu0 0.0
    %1123 = vmatpush1.msra.mxu0 0.0
    %1124 = vmatprep.subr.mxu0 0.0
    %1125 = vmatpush1.msra.mxu0 0.0
    %1126 = vmatprep.subr.mxu0 0.0
    %1127 = vmatpush1.msra.mxu0 0.0
    %1128 = vmatprep.subr.mxu0 0.0
    %1129 = vmatpush1.msra.mxu0 0.0
    %1130 = vmatprep.subr.mxu0 0.0
    %1131 = vmatpush1.msra.mxu0 0.0
    %1132 = vmatprep.subr.mxu0 0.0
    %1133 = vmatpush1.msra.mxu0 0.0
    %1134 = vmatprep.subr.mxu0 0.0
    %1135 = vmatpush1.msra.mxu0 0.0
    %1136 = vmatprep.subr.mxu0 0.0
    %1137 = vmatpush1.msra.mxu0 0.0
    %1138 = vmatprep.subr.mxu0 0.0
    %1139 = vmatpush1.msra.mxu0 0.0
    %1140 = vmatprep.subr.mxu0 0.0
    %1141 = vmatpush1.msra.mxu0 0.0
    %1142 = vmatprep.subr.mxu0 0.0
    %1143 = vmatpush1.msra.mxu0 0.0
    %1144 = vmatprep.subr.mxu0 0.0
    %1145 = vmatpush1.msra.mxu0 0.0
    %1146 = vmatprep.subr.mxu0 0.0
    %1147 = vmatpush1.msra.mxu0 0.0
    %1148 = vmatprep.subr.mxu0 0.0
    %1149 = vmatpush1.msra.mxu0 0.0
    %1150 = vmatprep.subr.mxu0 0.0
    %1151 = vmatpush1.msra.mxu0 0.0
    %1152 = vmatprep.subr.mxu0 0.0
    %1153 = vmatpush1.msra.mxu0 0.0
    %1154 = vmatprep.subr.mxu0 0.0
    %1155 = vmatpush1.msra.mxu0 0.0
    %1156 = vmatprep.subr.mxu0 0.0
    %1157 = vmatpush1.msra.mxu0 0.0
    %1158 = vmatprep.subr.mxu0 0.0
    %1159 = vmatpush1.msra.mxu0 0.0
    %1160 = vmatprep.subr.mxu0 0.0
    %1161 = vmatpush1.msra.mxu0 0.0
    %1162 = vmatprep.subr.mxu0 0.0
    %1163 = vmatpush1.msra.mxu0 0.0
    %1164 = vmatprep.subr.mxu0 0.0
    %1165 = vmatpush1.msra.mxu0 0.0
    %1166 = vmatprep.subr.mxu0 0.0
    %1167 = vmatpush1.msra.mxu0 0.0
    %1168 = vmatprep.mubr.f32.mxu0 0.0
    %1169 = vmatmul.mubr.f32.gmra.mrb[0].mxu0 %v1102
    %v1170 = vpop.f32.mrb[0].mxu0
    %v1171 = vadd.f32 0.0, %v1170
    %v1172 = vpop.f32.mrb[0].mxu0
    %1173 = vdwg.mxu0
    %v1174 = vadd.f32 %v1070, %v1171
    %v1175 = vxor.u32 %v1174, 2147483648
    %v1176 = vmul.f32 %v1175, 1.442695
    %v1177 = vpow.pop %v1176
    %v1178 = vadd.f32 %v1177, 1.0
    %v1179 = vrcp.pop %v1178
    %v1180 = vmul.f32 1.0, %v1179
    %v1181 = vtanh.pop %v1174
    %v1182 = vmul.f32 %v1180, %v980
    %1184 = vrot.lane.b32.xlu0 %v1181, 32
    %v1185 = vpop.permute.xlu0 %1184
    %v1187 = vmul.f32 %v1180, %v1185
    %1189 = vrot.lane.b32.xlu0 %v1187, 32
    %v1190 = vpop.permute.xlu0 %1189
    %v1192 = vadd.f32 %v1182, %v1190
    %v1193 = vtanh.pop %v1192
    %1195 = vrot.lane.b32.xlu0 %v1193, 32
    %v1196 = vpop.permute.xlu0 %1195
    %v1198 = vmul.f32 %v1180, %v1196
    %1201 = vrot.lane.b32.xlu0 %v1198, 96
    %v1202 = vpop.permute.xlu0 %1201
    %v1204 = vsel %vm462, %v1101, %v1202
    %1205 = vrot.lane.b32.xlu0 %v1198, 64
    %v1206 = vpop.permute.xlu0 %1205
    %1208 = vst.msk [vmem:[#allocation2 + $0x3] sm:$0x1] %vm569, %v1206
    %1209 = vst.msk [vmem:[#allocation2 + $0xa] sm:$0x2] %vm571, %v1206
    %v1211 = vsel %vm355, %v1204, 0
    %1213 = vmatprep.subr.mxu0 %v243
    %1214 = vmatpush1.msra.mxu0 %v242
    %1215 = vmatprep.subr.mxu0 %v245
    %1216 = vmatpush1.msra.mxu0 %v244
    %1217 = vmatprep.subr.mxu0 %v247
    %1218 = vmatpush1.msra.mxu0 %v246
    %1219 = vmatprep.subr.mxu0 %v249
    %1220 = vmatpush1.msra.mxu0 %v248
    %1221 = vmatprep.subr.mxu0 %v251
    %1222 = vmatpush1.msra.mxu0 %v250
    %1223 = vmatprep.subr.mxu0 %v253
    %1224 = vmatpush1.msra.mxu0 %v252
    %1225 = vmatprep.subr.mxu0 %v255
    %1226 = vmatpush1.msra.mxu0 %v254
    %1227 = vmatprep.subr.mxu0 %v257
    %1228 = vmatpush1.msra.mxu0 %v256
    %1229 = vmatprep.subr.mxu0 0.0
    %1230 = vmatpush1.msra.mxu0 0.0
    %1231 = vmatprep.subr.mxu0 0.0
    %1232 = vmatpush1.msra.mxu0 0.0
    %1233 = vmatprep.subr.mxu0 0.0
    %1234 = vmatpush1.msra.mxu0 0.0
    %1235 = vmatprep.subr.mxu0 0.0
    %1236 = vmatpush1.msra.mxu0 0.0
    %1237 = vmatprep.subr.mxu0 0.0
    %1238 = vmatpush1.msra.mxu0 0.0
    %1239 = vmatprep.subr.mxu0 0.0
    %1240 = vmatpush1.msra.mxu0 0.0
    %1241 = vmatprep.subr.mxu0 0.0
    %1242 = vmatpush1.msra.mxu0 0.0
    %1243 = vmatprep.subr.mxu0 0.0
    %1244 = vmatpush1.msra.mxu0 0.0
    %1245 = vmatprep.subr.mxu0 0.0
    %1246 = vmatpush1.msra.mxu0 0.0
    %1247 = vmatprep.subr.mxu0 0.0
    %1248 = vmatpush1.msra.mxu0 0.0
    %1249 = vmatprep.subr.mxu0 0.0
    %1250 = vmatpush1.msra.mxu0 0.0
    %1251 = vmatprep.subr.mxu0 0.0
    %1252 = vmatpush1.msra.mxu0 0.0
    %1253 = vmatprep.subr.mxu0 0.0
    %1254 = vmatpush1.msra.mxu0 0.0
    %1255 = vmatprep.subr.mxu0 0.0
    %1256 = vmatpush1.msra.mxu0 0.0
    %1257 = vmatprep.subr.mxu0 0.0
    %1258 = vmatpush1.msra.mxu0 0.0
    %1259 = vmatprep.subr.mxu0 0.0
    %1260 = vmatpush1.msra.mxu0 0.0
    %1261 = vmatprep.subr.mxu0 0.0
    %1262 = vmatpush1.msra.mxu0 0.0
    %1263 = vmatprep.subr.mxu0 0.0
    %1264 = vmatpush1.msra.mxu0 0.0
    %1265 = vmatprep.subr.mxu0 0.0
    %1266 = vmatpush1.msra.mxu0 0.0
    %1267 = vmatprep.subr.mxu0 0.0
    %1268 = vmatpush1.msra.mxu0 0.0
    %1269 = vmatprep.subr.mxu0 0.0
    %1270 = vmatpush1.msra.mxu0 0.0
    %1271 = vmatprep.subr.mxu0 0.0
    %1272 = vmatpush1.msra.mxu0 0.0
    %1273 = vmatprep.subr.mxu0 0.0
    %1274 = vmatpush1.msra.mxu0 0.0
    %1275 = vmatprep.subr.mxu0 0.0
    %1276 = vmatpush1.msra.mxu0 0.0
    %1277 = vmatprep.mubr.f32.mxu0 0.0
    %1278 = vmatmul.mubr.f32.gmra.mrb[0].mxu0 %v1211
    %v1279 = vpop.f32.mrb[0].mxu0
    %v1280 = vadd.f32 %v348, %v1279
    %v1281 = vpop.f32.mrb[0].mxu0
    %v1282 = vadd.f32 %v352, %v1281
    %1283 = vdwg.mxu0
    %v1284 = vadd.f32 %v1280, %v339
    %v1285 = vxor.u32 %v1284, 2147483648
    %v1286 = vmul.f32 %v1285, 1.442695
    %v1287 = vpow.pop %v1286
    %v1288 = vadd.f32 %v1287, 1.0
    %v1289 = vrcp.pop %v1288
    %v1290 = vmul.f32 1.0, %v1289
    %v1291 = vtanh.pop %v1284
    %v1292 = vmul.f32 %v1290, %v1092
    %1294 = vrot.lane.b32.xlu0 %v1291, 32
    %v1295 = vpop.permute.xlu0 %1294
    %v1297 = vmul.f32 %v1290, %v1295
    %1299 = vrot.lane.b32.xlu0 %v1297, 32
    %v1300 = vpop.permute.xlu0 %1299
    %v1302 = vadd.f32 %v1292, %v1300
    %v1303 = vtanh.pop %v1302
    %1305 = vrot.lane.b32.xlu0 %v1303, 32
    %v1306 = vpop.permute.xlu0 %1305
    %v1308 = vmul.f32 %v1290, %v1306
    %1310 = vrot.lane.b32.xlu0 %v1308, 64
    %v1311 = vpop.permute.xlu0 %1310
    %v1312 = vsel %vm462, %v1311, 0
    %1314 = vmatprep.subr.mxu0 0.0
    %1315 = vmatpush1.msra.mxu0 %v238
    %1316 = vmatprep.subr.mxu0 0.0
    %1317 = vmatpush1.msra.mxu0 %v239
    %1318 = vmatprep.subr.mxu0 0.0
    %1319 = vmatpush1.msra.mxu0 %v240
    %1320 = vmatprep.subr.mxu0 0.0
    %1321 = vmatpush1.msra.mxu0 %v241
    %1322 = vmatprep.subr.mxu0 0.0
    %1323 = vmatpush1.msra.mxu0 0.0
    %1324 = vmatprep.subr.mxu0 0.0
    %1325 = vmatpush1.msra.mxu0 0.0
    %1326 = vmatprep.subr.mxu0 0.0
    %1327 = vmatpush1.msra.mxu0 0.0
    %1328 = vmatprep.subr.mxu0 0.0
    %1329 = vmatpush1.msra.mxu0 0.0
    %1330 = vmatprep.subr.mxu0 0.0
    %1331 = vmatpush1.msra.mxu0 0.0
    %1332 = vmatprep.subr.mxu0 0.0
    %1333 = vmatpush1.msra.mxu0 0.0
    %1334 = vmatprep.subr.mxu0 0.0
    %1335 = vmatpush1.msra.mxu0 0.0
    %1336 = vmatprep.subr.mxu0 0.0
    %1337 = vmatpush1.msra.mxu0 0.0
    %1338 = vmatprep.subr.mxu0 0.0
    %1339 = vmatpush1.msra.mxu0 0.0
    %1340 = vmatprep.subr.mxu0 0.0
    %1341 = vmatpush1.msra.mxu0 0.0
    %1342 = vmatprep.subr.mxu0 0.0
    %1343 = vmatpush1.msra.mxu0 0.0
    %1344 = vmatprep.subr.mxu0 0.0
    %1345 = vmatpush1.msra.mxu0 0.0
    %1346 = vmatprep.subr.mxu0 0.0
    %1347 = vmatpush1.msra.mxu0 0.0
    %1348 = vmatprep.subr.mxu0 0.0
    %1349 = vmatpush1.msra.mxu0 0.0
    %1350 = vmatprep.subr.mxu0 0.0
    %1351 = vmatpush1.msra.mxu0 0.0
    %1352 = vmatprep.subr.mxu0 0.0
    %1353 = vmatpush1.msra.mxu0 0.0
    %1354 = vmatprep.subr.mxu0 0.0
    %1355 = vmatpush1.msra.mxu0 0.0
    %1356 = vmatprep.subr.mxu0 0.0
    %1357 = vmatpush1.msra.mxu0 0.0
    %1358 = vmatprep.subr.mxu0 0.0
    %1359 = vmatpush1.msra.mxu0 0.0
    %1360 = vmatprep.subr.mxu0 0.0
    %1361 = vmatpush1.msra.mxu0 0.0
    %1362 = vmatprep.subr.mxu0 0.0
    %1363 = vmatpush1.msra.mxu0 0.0
    %1364 = vmatprep.subr.mxu0 0.0
    %1365 = vmatpush1.msra.mxu0 0.0
    %1366 = vmatprep.subr.mxu0 0.0
    %1367 = vmatpush1.msra.mxu0 0.0
    %1368 = vmatprep.subr.mxu0 0.0
    %1369 = vmatpush1.msra.mxu0 0.0
    %1370 = vmatprep.subr.mxu0 0.0
    %1371 = vmatpush1.msra.mxu0 0.0
    %1372 = vmatprep.subr.mxu0 0.0
    %1373 = vmatpush1.msra.mxu0 0.0
    %1374 = vmatprep.subr.mxu0 0.0
    %1375 = vmatpush1.msra.mxu0 0.0
    %1376 = vmatprep.subr.mxu0 0.0
    %1377 = vmatpush1.msra.mxu0 0.0
    %1378 = vmatprep.mubr.f32.mxu0 0.0
    %1379 = vmatmul.mubr.f32.gmra.mrb[0].mxu0 %v1312
    %v1380 = vpop.f32.mrb[0].mxu0
    %v1381 = vadd.f32 0.0, %v1380
    %v1382 = vpop.f32.mrb[0].mxu0
    %1383 = vdwg.mxu0
    %v1384 = vadd.f32 %v1282, %v1381
    %v1385 = vxor.u32 %v1384, 2147483648
    %v1386 = vmul.f32 %v1385, 1.442695
    %v1387 = vpow.pop %v1386
    %v1388 = vadd.f32 %v1387, 1.0
    %v1389 = vrcp.pop %v1388
    %v1390 = vmul.f32 1.0, %v1389
    %v1391 = vtanh.pop %v1384
    %v1392 = vmul.f32 %v1390, %v1192
    %1394 = vrot.lane.b32.xlu0 %v1391, 32
    %v1395 = vpop.permute.xlu0 %1394
    %v1397 = vmul.f32 %v1390, %v1395
    %1399 = vrot.lane.b32.xlu0 %v1397, 32
    %v1400 = vpop.permute.xlu0 %1399
    %v1402 = vadd.f32 %v1392, %v1400
    %v1403 = vtanh.pop %v1402
    %1405 = vrot.lane.b32.xlu0 %v1403, 32
    %v1406 = vpop.permute.xlu0 %1405
    %v1408 = vmul.f32 %v1390, %v1406
    %1411 = vrot.lane.b32.xlu0 %v1408, 96
    %v1412 = vpop.permute.xlu0 %1411
    %v1414 = vsel %vm462, %v1311, %v1412
    %1415 = vrot.lane.b32.xlu0 %v1408, 64
    %v1416 = vpop.permute.xlu0 %1415
    %1418 = vst.msk [vmem:[#allocation2 + $0x4] sm:$0x1] %vm569, %v1416
    %1419 = vst.msk [vmem:[#allocation2 + $0xb] sm:$0x2] %vm571, %v1416
    %v1421 = vsel %vm355, %v1414, 0
    %1423 = vmatprep.subr.mxu0 %v243
    %1424 = vmatpush1.msra.mxu0 %v242
    %1425 = vmatprep.subr.mxu0 %v245
    %1426 = vmatpush1.msra.mxu0 %v244
    %1427 = vmatprep.subr.mxu0 %v247
    %1428 = vmatpush1.msra.mxu0 %v246
    %1429 = vmatprep.subr.mxu0 %v249
    %1430 = vmatpush1.msra.mxu0 %v248
    %1431 = vmatprep.subr.mxu0 %v251
    %1432 = vmatpush1.msra.mxu0 %v250
    %1433 = vmatprep.subr.mxu0 %v253
    %1434 = vmatpush1.msra.mxu0 %v252
    %1435 = vmatprep.subr.mxu0 %v255
    %1436 = vmatpush1.msra.mxu0 %v254
    %1437 = vmatprep.subr.mxu0 %v257
    %1438 = vmatpush1.msra.mxu0 %v256
    %1439 = vmatprep.subr.mxu0 0.0
    %1440 = vmatpush1.msra.mxu0 0.0
    %1441 = vmatprep.subr.mxu0 0.0
    %1442 = vmatpush1.msra.mxu0 0.0
    %1443 = vmatprep.subr.mxu0 0.0
    %1444 = vmatpush1.msra.mxu0 0.0
    %1445 = vmatprep.subr.mxu0 0.0
    %1446 = vmatpush1.msra.mxu0 0.0
    %1447 = vmatprep.subr.mxu0 0.0
    %1448 = vmatpush1.msra.mxu0 0.0
    %1449 = vmatprep.subr.mxu0 0.0
    %1450 = vmatpush1.msra.mxu0 0.0
    %1451 = vmatprep.subr.mxu0 0.0
    %1452 = vmatpush1.msra.mxu0 0.0
    %1453 = vmatprep.subr.mxu0 0.0
    %1454 = vmatpush1.msra.mxu0 0.0
    %1455 = vmatprep.subr.mxu0 0.0
    %1456 = vmatpush1.msra.mxu0 0.0
    %1457 = vmatprep.subr.mxu0 0.0
    %1458 = vmatpush1.msra.mxu0 0.0
    %1459 = vmatprep.subr.mxu0 0.0
    %1460 = vmatpush1.msra.mxu0 0.0
    %1461 = vmatprep.subr.mxu0 0.0
    %1462 = vmatpush1.msra.mxu0 0.0
    %1463 = vmatprep.subr.mxu0 0.0
    %1464 = vmatpush1.msra.mxu0 0.0
    %1465 = vmatprep.subr.mxu0 0.0
    %1466 = vmatpush1.msra.mxu0 0.0
    %1467 = vmatprep.subr.mxu0 0.0
    %1468 = vmatpush1.msra.mxu0 0.0
    %1469 = vmatprep.subr.mxu0 0.0
    %1470 = vmatpush1.msra.mxu0 0.0
    %1471 = vmatprep.subr.mxu0 0.0
    %1472 = vmatpush1.msra.mxu0 0.0
    %1473 = vmatprep.subr.mxu0 0.0
    %1474 = vmatpush1.msra.mxu0 0.0
    %1475 = vmatprep.subr.mxu0 0.0
    %1476 = vmatpush1.msra.mxu0 0.0
    %1477 = vmatprep.subr.mxu0 0.0
    %1478 = vmatpush1.msra.mxu0 0.0
    %1479 = vmatprep.subr.mxu0 0.0
    %1480 = vmatpush1.msra.mxu0 0.0
    %1481 = vmatprep.subr.mxu0 0.0
    %1482 = vmatpush1.msra.mxu0 0.0
    %1483 = vmatprep.subr.mxu0 0.0
    %1484 = vmatpush1.msra.mxu0 0.0
    %1485 = vmatprep.subr.mxu0 0.0
    %1486 = vmatpush1.msra.mxu0 0.0
    %1487 = vmatprep.mubr.f32.mxu0 0.0
    %1488 = vmatmul.mubr.f32.gmra.mrb[0].mxu0 %v1421
    %v1489 = vpop.f32.mrb[0].mxu0
    %v1490 = vadd.f32 %v348, %v1489
    %v1491 = vpop.f32.mrb[0].mxu0
    %v1492 = vadd.f32 %v352, %v1491
    %1493 = vdwg.mxu0
    %v1495 = vrot.slane %v339, 2
    %v1497 = vadd.f32 %v1490, %v1495
    %v1498 = vxor.u32 %v1497, 2147483648
    %v1499 = vmul.f32 %v1498, 1.442695
    %v1500 = vpow.pop %v1499
    %v1501 = vadd.f32 %v1500, 1.0
    %v1502 = vrcp.pop %v1501
    %v1503 = vmul.f32 1.0, %v1502
    %v1504 = vtanh.pop %v1497
    %v1505 = vmul.f32 %v1503, %v1302
    %1507 = vrot.lane.b32.xlu0 %v1504, 32
    %v1508 = vpop.permute.xlu0 %1507
    %v1510 = vmul.f32 %v1503, %v1508
    %1512 = vrot.lane.b32.xlu0 %v1510, 32
    %v1513 = vpop.permute.xlu0 %1512
    %v1515 = vadd.f32 %v1505, %v1513
    %v1516 = vtanh.pop %v1515
    %1518 = vrot.lane.b32.xlu0 %v1516, 32
    %v1519 = vpop.permute.xlu0 %1518
    %v1521 = vmul.f32 %v1503, %v1519
    %1523 = vrot.lane.b32.xlu0 %v1521, 64
    %v1524 = vpop.permute.xlu0 %1523
    %v1525 = vsel %vm462, %v1524, 0
    %1527 = vmatprep.subr.mxu0 0.0
    %1528 = vmatpush1.msra.mxu0 %v238
    %1529 = vmatprep.subr.mxu0 0.0
    %1530 = vmatpush1.msra.mxu0 %v239
    %1531 = vmatprep.subr.mxu0 0.0
    %1532 = vmatpush1.msra.mxu0 %v240
    %1533 = vmatprep.subr.mxu0 0.0
    %1534 = vmatpush1.msra.mxu0 %v241
    %1535 = vmatprep.subr.mxu0 0.0
    %1536 = vmatpush1.msra.mxu0 0.0
    %1537 = vmatprep.subr.mxu0 0.0
    %1538 = vmatpush1.msra.mxu0 0.0
    %1539 = vmatprep.subr.mxu0 0.0
    %1540 = vmatpush1.msra.mxu0 0.0
    %1541 = vmatprep.subr.mxu0 0.0
    %1542 = vmatpush1.msra.mxu0 0.0
    %1543 = vmatprep.subr.mxu0 0.0
    %1544 = vmatpush1.msra.mxu0 0.0
    %1545 = vmatprep.subr.mxu0 0.0
    %1546 = vmatpush1.msra.mxu0 0.0
    %1547 = vmatprep.subr.mxu0 0.0
    %1548 = vmatpush1.msra.mxu0 0.0
    %1549 = vmatprep.subr.mxu0 0.0
    %1550 = vmatpush1.msra.mxu0 0.0
    %1551 = vmatprep.subr.mxu0 0.0
    %1552 = vmatpush1.msra.mxu0 0.0
    %1553 = vmatprep.subr.mxu0 0.0
    %1554 = vmatpush1.msra.mxu0 0.0
    %1555 = vmatprep.subr.mxu0 0.0
    %1556 = vmatpush1.msra.mxu0 0.0
    %1557 = vmatprep.subr.mxu0 0.0
    %1558 = vmatpush1.msra.mxu0 0.0
    %1559 = vmatprep.subr.mxu0 0.0
    %1560 = vmatpush1.msra.mxu0 0.0
    %1561 = vmatprep.subr.mxu0 0.0
    %1562 = vmatpush1.msra.mxu0 0.0
    %1563 = vmatprep.subr.mxu0 0.0
    %1564 = vmatpush1.msra.mxu0 0.0
    %1565 = vmatprep.subr.mxu0 0.0
    %1566 = vmatpush1.msra.mxu0 0.0
    %1567 = vmatprep.subr.mxu0 0.0
    %1568 = vmatpush1.msra.mxu0 0.0
    %1569 = vmatprep.subr.mxu0 0.0
    %1570 = vmatpush1.msra.mxu0 0.0
    %1571 = vmatprep.subr.mxu0 0.0
    %1572 = vmatpush1.msra.mxu0 0.0
    %1573 = vmatprep.subr.mxu0 0.0
    %1574 = vmatpush1.msra.mxu0 0.0
    %1575 = vmatprep.subr.mxu0 0.0
    %1576 = vmatpush1.msra.mxu0 0.0
    %1577 = vmatprep.subr.mxu0 0.0
    %1578 = vmatpush1.msra.mxu0 0.0
    %1579 = vmatprep.subr.mxu0 0.0
    %1580 = vmatpush1.msra.mxu0 0.0
    %1581 = vmatprep.subr.mxu0 0.0
    %1582 = vmatpush1.msra.mxu0 0.0
    %1583 = vmatprep.subr.mxu0 0.0
    %1584 = vmatpush1.msra.mxu0 0.0
    %1585 = vmatprep.subr.mxu0 0.0
    %1586 = vmatpush1.msra.mxu0 0.0
    %1587 = vmatprep.subr.mxu0 0.0
    %1588 = vmatpush1.msra.mxu0 0.0
    %1589 = vmatprep.subr.mxu0 0.0
    %1590 = vmatpush1.msra.mxu0 0.0
    %1591 = vmatprep.mubr.f32.mxu0 0.0
    %1592 = vmatmul.mubr.f32.gmra.mrb[0].mxu0 %v1525
    %v1593 = vpop.f32.mrb[0].mxu0
    %v1594 = vadd.f32 0.0, %v1593
    %v1595 = vpop.f32.mrb[0].mxu0
    %1596 = vdwg.mxu0
    %v1597 = vadd.f32 %v1492, %v1594
    %v1598 = vxor.u32 %v1597, 2147483648
    %v1599 = vmul.f32 %v1598, 1.442695
    %v1600 = vpow.pop %v1599
    %v1601 = vadd.f32 %v1600, 1.0
    %v1602 = vrcp.pop %v1601
    %v1603 = vmul.f32 1.0, %v1602
    %v1604 = vtanh.pop %v1597
    %v1605 = vmul.f32 %v1603, %v1402
    %1607 = vrot.lane.b32.xlu0 %v1604, 32
    %v1608 = vpop.permute.xlu0 %1607
    %v1610 = vmul.f32 %v1603, %v1608
    %1612 = vrot.lane.b32.xlu0 %v1610, 32
    %v1613 = vpop.permute.xlu0 %1612
    %v1615 = vadd.f32 %v1605, %v1613
    %v1616 = vtanh.pop %v1615
    %1618 = vrot.lane.b32.xlu0 %v1616, 32
    %v1619 = vpop.permute.xlu0 %1618
    %v1621 = vmul.f32 %v1603, %v1619
    %1624 = vrot.lane.b32.xlu0 %v1621, 96
    %v1625 = vpop.permute.xlu0 %1624
    %v1627 = vsel %vm462, %v1524, %v1625
    %1628 = vrot.lane.b32.xlu0 %v1621, 64
    %v1629 = vpop.permute.xlu0 %1628
    %1631 = vst.msk [vmem:[#allocation2 + $0x5] sm:$0x1] %vm569, %v1629
    %1632 = vst.msk [vmem:[#allocation2 + $0xc] sm:$0x2] %vm571, %v1629
    %v1634 = vsel %vm355, %v1627, 0
    %1636 = vmatprep.subr.mxu0 %v243
    %1637 = vmatpush1.msra.mxu0 %v242
    %1638 = vmatprep.subr.mxu0 %v245
    %1639 = vmatpush1.msra.mxu0 %v244
    %1640 = vmatprep.subr.mxu0 %v247
    %1641 = vmatpush1.msra.mxu0 %v246
    %1642 = vmatprep.subr.mxu0 %v249
    %1643 = vmatpush1.msra.mxu0 %v248
    %1644 = vmatprep.subr.mxu0 %v251
    %1645 = vmatpush1.msra.mxu0 %v250
    %1646 = vmatprep.subr.mxu0 %v253
    %1647 = vmatpush1.msra.mxu0 %v252
    %1648 = vmatprep.subr.mxu0 %v255
    %1649 = vmatpush1.msra.mxu0 %v254
    %1650 = vmatprep.subr.mxu0 %v257
    %1651 = vmatpush1.msra.mxu0 %v256
    %1652 = vmatprep.subr.mxu0 0.0
    %1653 = vmatpush1.msra.mxu0 0.0
    %1654 = vmatprep.subr.mxu0 0.0
    %1655 = vmatpush1.msra.mxu0 0.0
    %1656 = vmatprep.subr.mxu0 0.0
    %1657 = vmatpush1.msra.mxu0 0.0
    %1658 = vmatprep.subr.mxu0 0.0
    %1659 = vmatpush1.msra.mxu0 0.0
    %1660 = vmatprep.subr.mxu0 0.0
    %1661 = vmatpush1.msra.mxu0 0.0
    %1662 = vmatprep.subr.mxu0 0.0
    %1663 = vmatpush1.msra.mxu0 0.0
    %1664 = vmatprep.subr.mxu0 0.0
    %1665 = vmatpush1.msra.mxu0 0.0
    %1666 = vmatprep.subr.mxu0 0.0
    %1667 = vmatpush1.msra.mxu0 0.0
    %1668 = vmatprep.subr.mxu0 0.0
    %1669 = vmatpush1.msra.mxu0 0.0
    %1670 = vmatprep.subr.mxu0 0.0
    %1671 = vmatpush1.msra.mxu0 0.0
    %1672 = vmatprep.subr.mxu0 0.0
    %1673 = vmatpush1.msra.mxu0 0.0
    %1674 = vmatprep.subr.mxu0 0.0
    %1675 = vmatpush1.msra.mxu0 0.0
    %1676 = vmatprep.subr.mxu0 0.0
    %1677 = vmatpush1.msra.mxu0 0.0
    %1678 = vmatprep.subr.mxu0 0.0
    %1679 = vmatpush1.msra.mxu0 0.0
    %1680 = vmatprep.subr.mxu0 0.0
    %1681 = vmatpush1.msra.mxu0 0.0
    %1682 = vmatprep.subr.mxu0 0.0
    %1683 = vmatpush1.msra.mxu0 0.0
    %1684 = vmatprep.subr.mxu0 0.0
    %1685 = vmatpush1.msra.mxu0 0.0
    %1686 = vmatprep.subr.mxu0 0.0
    %1687 = vmatpush1.msra.mxu0 0.0
    %1688 = vmatprep.subr.mxu0 0.0
    %1689 = vmatpush1.msra.mxu0 0.0
    %1690 = vmatprep.subr.mxu0 0.0
    %1691 = vmatpush1.msra.mxu0 0.0
    %1692 = vmatprep.subr.mxu0 0.0
    %1693 = vmatpush1.msra.mxu0 0.0
    %1694 = vmatprep.subr.mxu0 0.0
    %1695 = vmatpush1.msra.mxu0 0.0
    %1696 = vmatprep.subr.mxu0 0.0
    %1697 = vmatpush1.msra.mxu0 0.0
    %1698 = vmatprep.subr.mxu0 0.0
    %1699 = vmatpush1.msra.mxu0 0.0
    %1700 = vmatprep.mubr.f32.mxu0 0.0
    %1701 = vmatmul.mubr.f32.gmra.mrb[0].mxu0 %v1634
    %v1702 = vpop.f32.mrb[0].mxu0
    %v1703 = vadd.f32 %v348, %v1702
    %v1704 = vpop.f32.mrb[0].mxu0
    %v1705 = vadd.f32 %v352, %v1704
    %1706 = vdwg.mxu0
    %v1707 = vrot.slane %v339, 4
    %v1709 = vadd.f32 %v1703, %v1707
    %v1710 = vxor.u32 %v1709, 2147483648
    %v1711 = vmul.f32 %v1710, 1.442695
    %v1712 = vpow.pop %v1711
    %v1713 = vadd.f32 %v1712, 1.0
    %v1714 = vrcp.pop %v1713
    %v1715 = vmul.f32 1.0, %v1714
    %v1716 = vtanh.pop %v1709
    %v1717 = vmul.f32 %v1715, %v1515
    %1719 = vrot.lane.b32.xlu0 %v1716, 32
    %v1720 = vpop.permute.xlu0 %1719
    %v1722 = vmul.f32 %v1715, %v1720
    %1724 = vrot.lane.b32.xlu0 %v1722, 32
    %v1725 = vpop.permute.xlu0 %1724
    %v1727 = vadd.f32 %v1717, %v1725
    %v1728 = vtanh.pop %v1727
    %1730 = vrot.lane.b32.xlu0 %v1728, 32
    %v1731 = vpop.permute.xlu0 %1730
    %v1733 = vmul.f32 %v1715, %v1731
    %1735 = vrot.lane.b32.xlu0 %v1733, 64
    %v1736 = vpop.permute.xlu0 %1735
    %v1737 = vsel %vm462, %v1736, 0
    %1739 = vmatprep.subr.mxu0 0.0
    %1740 = vmatpush1.msra.mxu0 %v238
    %1741 = vmatprep.subr.mxu0 0.0
    %1742 = vmatpush1.msra.mxu0 %v239
    %1743 = vmatprep.subr.mxu0 0.0
    %1744 = vmatpush1.msra.mxu0 %v240
    %1745 = vmatprep.subr.mxu0 0.0
    %1746 = vmatpush1.msra.mxu0 %v241
    %1747 = vmatprep.subr.mxu0 0.0
    %1748 = vmatpush1.msra.mxu0 0.0
    %1749 = vmatprep.subr.mxu0 0.0
    %1750 = vmatpush1.msra.mxu0 0.0
    %1751 = vmatprep.subr.mxu0 0.0
    %1752 = vmatpush1.msra.mxu0 0.0
    %1753 = vmatprep.subr.mxu0 0.0
    %1754 = vmatpush1.msra.mxu0 0.0
    %1755 = vmatprep.subr.mxu0 0.0
    %1756 = vmatpush1.msra.mxu0 0.0
    %1757 = vmatprep.subr.mxu0 0.0
    %1758 = vmatpush1.msra.mxu0 0.0
    %1759 = vmatprep.subr.mxu0 0.0
    %1760 = vmatpush1.msra.mxu0 0.0
    %1761 = vmatprep.subr.mxu0 0.0
    %1762 = vmatpush1.msra.mxu0 0.0
    %1763 = vmatprep.subr.mxu0 0.0
    %1764 = vmatpush1.msra.mxu0 0.0
    %1765 = vmatprep.subr.mxu0 0.0
    %1766 = vmatpush1.msra.mxu0 0.0
    %1767 = vmatprep.subr.mxu0 0.0
    %1768 = vmatpush1.msra.mxu0 0.0
    %1769 = vmatprep.subr.mxu0 0.0
    %1770 = vmatpush1.msra.mxu0 0.0
    %1771 = vmatprep.subr.mxu0 0.0
    %1772 = vmatpush1.msra.mxu0 0.0
    %1773 = vmatprep.subr.mxu0 0.0
    %1774 = vmatpush1.msra.mxu0 0.0
    %1775 = vmatprep.subr.mxu0 0.0
    %1776 = vmatpush1.msra.mxu0 0.0
    %1777 = vmatprep.subr.mxu0 0.0
    %1778 = vmatpush1.msra.mxu0 0.0
    %1779 = vmatprep.subr.mxu0 0.0
    %1780 = vmatpush1.msra.mxu0 0.0
    %1781 = vmatprep.subr.mxu0 0.0
    %1782 = vmatpush1.msra.mxu0 0.0
    %1783 = vmatprep.subr.mxu0 0.0
    %1784 = vmatpush1.msra.mxu0 0.0
    %1785 = vmatprep.subr.mxu0 0.0
    %1786 = vmatpush1.msra.mxu0 0.0
    %1787 = vmatprep.subr.mxu0 0.0
    %1788 = vmatpush1.msra.mxu0 0.0
    %1789 = vmatprep.subr.mxu0 0.0
    %1790 = vmatpush1.msra.mxu0 0.0
    %1791 = vmatprep.subr.mxu0 0.0
    %1792 = vmatpush1.msra.mxu0 0.0
    %1793 = vmatprep.subr.mxu0 0.0
    %1794 = vmatpush1.msra.mxu0 0.0
    %1795 = vmatprep.subr.mxu0 0.0
    %1796 = vmatpush1.msra.mxu0 0.0
    %1797 = vmatprep.subr.mxu0 0.0
    %1798 = vmatpush1.msra.mxu0 0.0
    %1799 = vmatprep.subr.mxu0 0.0
    %1800 = vmatpush1.msra.mxu0 0.0
    %1801 = vmatprep.subr.mxu0 0.0
    %1802 = vmatpush1.msra.mxu0 0.0
    %1803 = vmatprep.mubr.f32.mxu0 0.0
    %1804 = vmatmul.mubr.f32.gmra.mrb[0].mxu0 %v1737
    %v1805 = vpop.f32.mrb[0].mxu0
    %v1806 = vadd.f32 0.0, %v1805
    %v1807 = vpop.f32.mrb[0].mxu0
    %1808 = vdwg.mxu0
    %v1809 = vadd.f32 %v1705, %v1806
    %v1810 = vxor.u32 %v1809, 2147483648
    %v1811 = vmul.f32 %v1810, 1.442695
    %v1812 = vpow.pop %v1811
    %v1813 = vadd.f32 %v1812, 1.0
    %v1814 = vrcp.pop %v1813
    %v1815 = vmul.f32 1.0, %v1814
    %v1816 = vtanh.pop %v1809
    %v1817 = vmul.f32 %v1815, %v1615
    %1819 = vrot.lane.b32.xlu0 %v1816, 32
    %v1820 = vpop.permute.xlu0 %1819
    %v1822 = vmul.f32 %v1815, %v1820
    %1824 = vrot.lane.b32.xlu0 %v1822, 32
    %v1825 = vpop.permute.xlu0 %1824
    %v1827 = vadd.f32 %v1817, %v1825
    %v1828 = vtanh.pop %v1827
    %1830 = vrot.lane.b32.xlu0 %v1828, 32
    %v1831 = vpop.permute.xlu0 %1830
    %v1833 = vmul.f32 %v1815, %v1831
    %1836 = vrot.lane.b32.xlu0 %v1833, 96
    %v1837 = vpop.permute.xlu0 %1836
    %v1839 = vsel %vm462, %v1736, %v1837
    %1840 = vrot.lane.b32.xlu0 %v1833, 64
    %v1841 = vpop.permute.xlu0 %1840
    %1843 = vst.msk [vmem:[#allocation2 + $0x6] sm:$0x1] %vm569, %v1841
    %1844 = vst.msk [vmem:[#allocation2 + $0xd] sm:$0x2] %vm571, %v1841
    %v1846 = vsel %vm355, %v1839, 0
    %1848 = vmatprep.subr.mxu0 %v243
    %1849 = vmatpush1.msra.mxu0 %v242
    %1850 = vmatprep.subr.mxu0 %v245
    %1851 = vmatpush1.msra.mxu0 %v244
    %1852 = vmatprep.subr.mxu0 %v247
    %1853 = vmatpush1.msra.mxu0 %v246
    %1854 = vmatprep.subr.mxu0 %v249
    %1855 = vmatpush1.msra.mxu0 %v248
    %1856 = vmatprep.subr.mxu0 %v251
    %1857 = vmatpush1.msra.mxu0 %v250
    %1858 = vmatprep.subr.mxu0 %v253
    %1859 = vmatpush1.msra.mxu0 %v252
    %1860 = vmatprep.subr.mxu0 %v255
    %1861 = vmatpush1.msra.mxu0 %v254
    %1862 = vmatprep.subr.mxu0 %v257
    %1863 = vmatpush1.msra.mxu0 %v256
    %1864 = vmatprep.subr.mxu0 0.0
    %1865 = vmatpush1.msra.mxu0 0.0
    %1866 = vmatprep.subr.mxu0 0.0
    %1867 = vmatpush1.msra.mxu0 0.0
    %1868 = vmatprep.subr.mxu0 0.0
    %1869 = vmatpush1.msra.mxu0 0.0
    %1870 = vmatprep.subr.mxu0 0.0
    %1871 = vmatpush1.msra.mxu0 0.0
    %1872 = vmatprep.subr.mxu0 0.0
    %1873 = vmatpush1.msra.mxu0 0.0
    %1874 = vmatprep.subr.mxu0 0.0
    %1875 = vmatpush1.msra.mxu0 0.0
    %1876 = vmatprep.subr.mxu0 0.0
    %1877 = vmatpush1.msra.mxu0 0.0
    %1878 = vmatprep.subr.mxu0 0.0
    %1879 = vmatpush1.msra.mxu0 0.0
    %1880 = vmatprep.subr.mxu0 0.0
    %1881 = vmatpush1.msra.mxu0 0.0
    %1882 = vmatprep.subr.mxu0 0.0
    %1883 = vmatpush1.msra.mxu0 0.0
    %1884 = vmatprep.subr.mxu0 0.0
    %1885 = vmatpush1.msra.mxu0 0.0
    %1886 = vmatprep.subr.mxu0 0.0
    %1887 = vmatpush1.msra.mxu0 0.0
    %1888 = vmatprep.subr.mxu0 0.0
    %1889 = vmatpush1.msra.mxu0 0.0
    %1890 = vmatprep.subr.mxu0 0.0
    %1891 = vmatpush1.msra.mxu0 0.0
    %1892 = vmatprep.subr.mxu0 0.0
    %1893 = vmatpush1.msra.mxu0 0.0
    %1894 = vmatprep.subr.mxu0 0.0
    %1895 = vmatpush1.msra.mxu0 0.0
    %1896 = vmatprep.subr.mxu0 0.0
    %1897 = vmatpush1.msra.mxu0 0.0
    %1898 = vmatprep.subr.mxu0 0.0
    %1899 = vmatpush1.msra.mxu0 0.0
    %1900 = vmatprep.subr.mxu0 0.0
    %1901 = vmatpush1.msra.mxu0 0.0
    %1902 = vmatprep.subr.mxu0 0.0
    %1903 = vmatpush1.msra.mxu0 0.0
    %1904 = vmatprep.subr.mxu0 0.0
    %1905 = vmatpush1.msra.mxu0 0.0
    %1906 = vmatprep.subr.mxu0 0.0
    %1907 = vmatpush1.msra.mxu0 0.0
    %1908 = vmatprep.subr.mxu0 0.0
    %1909 = vmatpush1.msra.mxu0 0.0
    %1910 = vmatprep.subr.mxu0 0.0
    %1911 = vmatpush1.msra.mxu0 0.0
    %1912 = vmatprep.mubr.f32.mxu0 0.0
    %1913 = vmatmul.mubr.f32.gmra.mrb[0].mxu0 %v1846
    %v1914 = vpop.f32.mrb[0].mxu0
    %v1915 = vadd.f32 %v348, %v1914
    %v1916 = vpop.f32.mrb[0].mxu0
    %v1917 = vadd.f32 %v352, %v1916
    %1918 = vdwg.mxu0
    %v1919 = vrot.slane %v339, 6
    %v1921 = vadd.f32 %v1915, %v1919
    %v1922 = vxor.u32 %v1921, 2147483648
    %v1923 = vmul.f32 %v1922, 1.442695
    %v1924 = vpow.pop %v1923
    %v1925 = vadd.f32 %v1924, 1.0
    %v1926 = vrcp.pop %v1925
    %v1927 = vmul.f32 1.0, %v1926
    %v1928 = vtanh.pop %v1921
    %v1929 = vmul.f32 %v1927, %v1727
    %1931 = vrot.lane.b32.xlu0 %v1928, 32
    %v1932 = vpop.permute.xlu0 %1931
    %v1934 = vmul.f32 %v1927, %v1932
    %1936 = vrot.lane.b32.xlu0 %v1934, 32
    %v1937 = vpop.permute.xlu0 %1936
    %v1939 = vadd.f32 %v1929, %v1937
    %v1940 = vtanh.pop %v1939
    %1942 = vrot.lane.b32.xlu0 %v1940, 32
    %v1943 = vpop.permute.xlu0 %1942
    %v1945 = vmul.f32 %v1927, %v1943
    %1947 = vrot.lane.b32.xlu0 %v1945, 64
    %v1948 = vpop.permute.xlu0 %1947
    %v1949 = vsel %vm462, %v1948, 0
    %1951 = vmatprep.subr.mxu0 0.0
    %1952 = vmatpush1.msra.mxu0 %v238
    %1953 = vmatprep.subr.mxu0 0.0
    %1954 = vmatpush1.msra.mxu0 %v239
    %1955 = vmatprep.subr.mxu0 0.0
    %1956 = vmatpush1.msra.mxu0 %v240
    %1957 = vmatprep.subr.mxu0 0.0
    %1958 = vmatpush1.msra.mxu0 %v241
    %1959 = vmatprep.subr.mxu0 0.0
    %1960 = vmatpush1.msra.mxu0 0.0
    %1961 = vmatprep.subr.mxu0 0.0
    %1962 = vmatpush1.msra.mxu0 0.0
    %1963 = vmatprep.subr.mxu0 0.0
    %1964 = vmatpush1.msra.mxu0 0.0
    %1965 = vmatprep.subr.mxu0 0.0
    %1966 = vmatpush1.msra.mxu0 0.0
    %1967 = vmatprep.subr.mxu0 0.0
    %1968 = vmatpush1.msra.mxu0 0.0
    %1969 = vmatprep.subr.mxu0 0.0
    %1970 = vmatpush1.msra.mxu0 0.0
    %1971 = vmatprep.subr.mxu0 0.0
    %1972 = vmatpush1.msra.mxu0 0.0
    %1973 = vmatprep.subr.mxu0 0.0
    %1974 = vmatpush1.msra.mxu0 0.0
    %1975 = vmatprep.subr.mxu0 0.0
    %1976 = vmatpush1.msra.mxu0 0.0
    %1977 = vmatprep.subr.mxu0 0.0
    %1978 = vmatpush1.msra.mxu0 0.0
    %1979 = vmatprep.subr.mxu0 0.0
    %1980 = vmatpush1.msra.mxu0 0.0
    %1981 = vmatprep.subr.mxu0 0.0
    %1982 = vmatpush1.msra.mxu0 0.0
    %1983 = vmatprep.subr.mxu0 0.0
    %1984 = vmatpush1.msra.mxu0 0.0
    %1985 = vmatprep.subr.mxu0 0.0
    %1986 = vmatpush1.msra.mxu0 0.0
    %1987 = vmatprep.subr.mxu0 0.0
    %1988 = vmatpush1.msra.mxu0 0.0
    %1989 = vmatprep.subr.mxu0 0.0
    %1990 = vmatpush1.msra.mxu0 0.0
    %1991 = vmatprep.subr.mxu0 0.0
    %1992 = vmatpush1.msra.mxu0 0.0
    %1993 = vmatprep.subr.mxu0 0.0
    %1994 = vmatpush1.msra.mxu0 0.0
    %1995 = vmatprep.subr.mxu0 0.0
    %1996 = vmatpush1.msra.mxu0 0.0
    %1997 = vmatprep.subr.mxu0 0.0
    %1998 = vmatpush1.msra.mxu0 0.0
    %1999 = vmatprep.subr.mxu0 0.0
    %2000 = vmatpush1.msra.mxu0 0.0
    %2001 = vmatprep.subr.mxu0 0.0
    %2002 = vmatpush1.msra.mxu0 0.0
    %2003 = vmatprep.subr.mxu0 0.0
    %2004 = vmatpush1.msra.mxu0 0.0
    %2005 = vmatprep.subr.mxu0 0.0
    %2006 = vmatpush1.msra.mxu0 0.0
    %2007 = vmatprep.subr.mxu0 0.0
    %2008 = vmatpush1.msra.mxu0 0.0
    %2009 = vmatprep.subr.mxu0 0.0
    %2010 = vmatpush1.msra.mxu0 0.0
    %2011 = vmatprep.subr.mxu0 0.0
    %2012 = vmatpush1.msra.mxu0 0.0
    %2013 = vmatprep.subr.mxu0 0.0
    %2014 = vmatpush1.msra.mxu0 0.0
    %2015 = vmatprep.mubr.f32.mxu0 0.0
    %2016 = vmatmul.mubr.f32.gmra.mrb[0].mxu0 %v1949
    %v2017 = vpop.f32.mrb[0].mxu0
    %v2018 = vadd.f32 0.0, %v2017
    %v2019 = vpop.f32.mrb[0].mxu0
    %2020 = vdwg.mxu0
    %v2021 = vadd.f32 %v1917, %v2018
    %v2022 = vxor.u32 %v2021, 2147483648
    %v2023 = vmul.f32 %v2022, 1.442695
    %v2024 = vpow.pop %v2023
    %v2025 = vadd.f32 %v2024, 1.0
    %v2026 = vrcp.pop %v2025
    %v2027 = vmul.f32 1.0, %v2026
    %v2028 = vtanh.pop %v2021
    %v2029 = vmul.f32 %v2027, %v1827
    %2031 = vrot.lane.b32.xlu0 %v2028, 32
    %v2032 = vpop.permute.xlu0 %2031
    %v2034 = vmul.f32 %v2027, %v2032
    %2036 = vrot.lane.b32.xlu0 %v2034, 32
    %v2037 = vpop.permute.xlu0 %2036
    %v2039 = vadd.f32 %v2029, %v2037
    %v2040 = vtanh.pop %v2039
    %2042 = vrot.lane.b32.xlu0 %v2040, 32
    %v2043 = vpop.permute.xlu0 %2042
    %v2045 = vmul.f32 %v2027, %v2043
    %2047 = vrot.lane.b32.xlu0 %v2045, 64
    %v2048 = vpop.permute.xlu0 %2047
    %2050 = vst.msk [vmem:[#allocation2 + $0x7] sm:$0x1] %vm569, %v2048
    %2051 = vst.msk [vmem:[#allocation2 + $0xe] sm:$0x2] %vm571, %v2048
    %v2052 = vld [vmem:[%s11] sm:$0x1]
    %v2053 = vld [vmem:[%s12] sm:$0x1]
    %v2054 = vld [vmem:[#allocation2] sm:$0xff]
    %v2055 = vld [vmem:[#allocation2 + $0x8] sm:$0xff]
    %v2056 = vld [vmem:[%s10] sm:$0xff]
    %v2057 = vld [vmem:[%s10 + $0x8] sm:$0xff]
    %v2058 = vld [vmem:[%s10 + $0x10] sm:$0xff]
    %v2059 = vld [vmem:[%s10 + $0x18] sm:$0xff]
    %v2061 = vsel %vm462, %v2054, 0
    %v2064 = vsel %vm462, %v2055, 0
    %2066 = vmatprep.subr.mxu0 0.0
    %2067 = vmatpush1.msra.mxu0 %v2056
    %2068 = vmatprep.subr.mxu0 0.0
    %2069 = vmatpush1.msra.mxu0 %v2057
    %2070 = vmatprep.subr.mxu0 0.0
    %2071 = vmatpush1.msra.mxu0 %v2058
    %2072 = vmatprep.subr.mxu0 0.0
    %2073 = vmatpush1.msra.mxu0 %v2059
    %2074 = vmatprep.subr.mxu0 0.0
    %2075 = vmatpush1.msra.mxu0 0.0
    %2076 = vmatprep.subr.mxu0 0.0
    %2077 = vmatpush1.msra.mxu0 0.0
    %2078 = vmatprep.subr.mxu0 0.0
    %2079 = vmatpush1.msra.mxu0 0.0
    %2080 = vmatprep.subr.mxu0 0.0
    %2081 = vmatpush1.msra.mxu0 0.0
    %2082 = vmatprep.subr.mxu0 0.0
    %2083 = vmatpush1.msra.mxu0 0.0
    %2084 = vmatprep.subr.mxu0 0.0
    %2085 = vmatpush1.msra.mxu0 0.0
    %2086 = vmatprep.subr.mxu0 0.0
    %2087 = vmatpush1.msra.mxu0 0.0
    %2088 = vmatprep.subr.mxu0 0.0
    %2089 = vmatpush1.msra.mxu0 0.0
    %2090 = vmatprep.subr.mxu0 0.0
    %2091 = vmatpush1.msra.mxu0 0.0
    %2092 = vmatprep.subr.mxu0 0.0
    %2093 = vmatpush1.msra.mxu0 0.0
    %2094 = vmatprep.subr.mxu0 0.0
    %2095 = vmatpush1.msra.mxu0 0.0
    %2096 = vmatprep.subr.mxu0 0.0
    %2097 = vmatpush1.msra.mxu0 0.0
    %2098 = vmatprep.subr.mxu0 0.0
    %2099 = vmatpush1.msra.mxu0 0.0
    %2100 = vmatprep.subr.mxu0 0.0
    %2101 = vmatpush1.msra.mxu0 0.0
    %2102 = vmatprep.subr.mxu0 0.0
    %2103 = vmatpush1.msra.mxu0 0.0
    %2104 = vmatprep.subr.mxu0 0.0
    %2105 = vmatpush1.msra.mxu0 0.0
    %2106 = vmatprep.subr.mxu0 0.0
    %2107 = vmatpush1.msra.mxu0 0.0
    %2108 = vmatprep.subr.mxu0 0.0
    %2109 = vmatpush1.msra.mxu0 0.0
    %2110 = vmatprep.subr.mxu0 0.0
    %2111 = vmatpush1.msra.mxu0 0.0
    %2112 = vmatprep.subr.mxu0 0.0
    %2113 = vmatpush1.msra.mxu0 0.0
    %2114 = vmatprep.subr.mxu0 0.0
    %2115 = vmatpush1.msra.mxu0 0.0
    %2116 = vmatprep.subr.mxu0 0.0
    %2117 = vmatpush1.msra.mxu0 0.0
    %2118 = vmatprep.subr.mxu0 0.0
    %2119 = vmatpush1.msra.mxu0 0.0
    %2120 = vmatprep.subr.mxu0 0.0
    %2121 = vmatpush1.msra.mxu0 0.0
    %2122 = vmatprep.subr.mxu0 0.0
    %2123 = vmatpush1.msra.mxu0 0.0
    %2124 = vmatprep.subr.mxu0 0.0
    %2125 = vmatpush1.msra.mxu0 0.0
    %2126 = vmatprep.subr.mxu0 0.0
    %2127 = vmatpush1.msra.mxu0 0.0
    %2128 = vmatprep.subr.mxu0 0.0
    %2129 = vmatpush1.msra.mxu0 0.0
    %2130 = vmatprep.mubr.f32.mxu0 0.0
    %2131 = vmatmul.mubr.f32.gmra.mrb[0].mxu0 %v2061
    %v2132 = vpop.f32.mrb[0].mxu0
    %v2133 = vadd.f32 0.0, %v2132
    %v2134 = vpop.f32.mrb[0].mxu0
    %2135 = vmatprep.mubr.f32.mxu0 0.0
    %2136 = vmatmul.mubr.f32.gmra.mrb[0].mxu0 %v2064
    %v2137 = vpop.f32.mrb[0].mxu0
    %v2138 = vadd.f32 0.0, %v2137
    %v2139 = vpop.f32.mrb[0].mxu0
    %2140 = vdwg.mxu0
    %v2143 = vcombine.high %v2133, %v2133
    %v2145 = vunpack.c.l.s4 1966171168
    %v2146 = vunpack.c.0.s8 %v2145
    %v2147 = vlaneseq
    %v2148 = vshrl.u32 %v2147, 7
    %v2149 = vsub.s32 %v2146, %v2148
    %v2150 = vrot.slane %v2133, %v2149
    %v2152 = vunpack.c.l.s4 1966171168
    %v2153 = vunpack.c.0.s8 %v2152
    %v2154 = vlaneseq
    %v2155 = vshrl.u32 %v2154, 7
    %v2156 = vsub.s32 %v2153, %v2155
    %v2157 = vrot.slane %v2143, %v2156
    %v2158 = vcombine.high %v2150, %v2150
    %v2159 = vcombine.high %v2157, %v2157
    %v2161 = vunpack.c.l.s4 1966171168
    %v2162 = vunpack.c.0.s8 %v2161
    %v2163 = vlaneseq
    %v2164 = vshrl.u32 %v2163, 7
    %v2165 = vsub.s32 %v2162, %v2164
    %v2166 = vrot.slane %v2150, %v2165
    %v2168 = vunpack.c.l.s4 1966171168
    %v2169 = vunpack.c.0.s8 %v2168
    %v2170 = vlaneseq
    %v2171 = vshrl.u32 %v2170, 7
    %v2172 = vsub.s32 %v2169, %v2171
    %v2173 = vrot.slane %v2157, %v2172
    %v2175 = vunpack.c.l.s4 1966171168
    %v2176 = vunpack.c.0.s8 %v2175
    %v2177 = vlaneseq
    %v2178 = vshrl.u32 %v2177, 7
    %v2179 = vsub.s32 %v2176, %v2178
    %v2180 = vrot.slane %v2158, %v2179
    %v2182 = vunpack.c.l.s4 1966171168
    %v2183 = vunpack.c.0.s8 %v2182
    %v2184 = vlaneseq
    %v2185 = vshrl.u32 %v2184, 7
    %v2186 = vsub.s32 %v2183, %v2185
    %v2187 = vrot.slane %v2159, %v2186
    %v2188 = vcombine.high %v2166, %v2166
    %v2189 = vcombine.high %v2173, %v2173
    %v2190 = vcombine.high %v2180, %v2180
    %v2191 = vcombine.high %v2187, %v2187
    %v2192 = vcombine.high %v2138, %v2138
    %v2194 = vunpack.c.l.s4 1966171168
    %v2195 = vunpack.c.0.s8 %v2194
    %v2196 = vlaneseq
    %v2197 = vshrl.u32 %v2196, 7
    %v2198 = vsub.s32 %v2195, %v2197
    %v2199 = vrot.slane %v2138, %v2198
    %v2201 = vunpack.c.l.s4 1966171168
    %v2202 = vunpack.c.0.s8 %v2201
    %v2203 = vlaneseq
    %v2204 = vshrl.u32 %v2203, 7
    %v2205 = vsub.s32 %v2202, %v2204
    %v2206 = vrot.slane %v2192, %v2205
    %v2207 = vcombine.high %v2199, %v2199
    %v2208 = vcombine.high %v2206, %v2206
    %v2210 = vunpack.c.l.s4 1966171168
    %v2211 = vunpack.c.0.s8 %v2210
    %v2212 = vlaneseq
    %v2213 = vshrl.u32 %v2212, 7
    %v2214 = vsub.s32 %v2211, %v2213
    %v2215 = vrot.slane %v2199, %v2214
    %v2217 = vunpack.c.l.s4 1966171168
    %v2218 = vunpack.c.0.s8 %v2217
    %v2219 = vlaneseq
    %v2220 = vshrl.u32 %v2219, 7
    %v2221 = vsub.s32 %v2218, %v2220
    %v2222 = vrot.slane %v2206, %v2221
    %v2224 = vunpack.c.l.s4 1966171168
    %v2225 = vunpack.c.0.s8 %v2224
    %v2226 = vlaneseq
    %v2227 = vshrl.u32 %v2226, 7
    %v2228 = vsub.s32 %v2225, %v2227
    %v2229 = vrot.slane %v2207, %v2228
    %v2231 = vunpack.c.l.s4 1966171168
    %v2232 = vunpack.c.0.s8 %v2231
    %v2233 = vlaneseq
    %v2234 = vshrl.u32 %v2233, 7
    %v2235 = vsub.s32 %v2232, %v2234
    %v2236 = vrot.slane %v2208, %v2235
    %v2237 = vcombine.high %v2215, %v2215
    %v2238 = vcombine.high %v2222, %v2222
    %v2239 = vcombine.high %v2229, %v2229
    %v2240 = vcombine.high %v2236, %v2236
    %v2241 = vlaneseq
    %v2242 = vshrl.u32 %v2241, 7
    %v2243 = vsub.s32 0, %v2242
    %v2244 = vrot.slane %v2166, %v2243
    %v2245 = vlaneseq
    %v2246 = vshrl.u32 %v2245, 7
    %v2247 = vsub.s32 0, %v2246
    %v2248 = vrot.slane %v2180, %v2247
    %v2249 = vlaneseq
    %v2250 = vshrl.u32 %v2249, 7
    %v2251 = vsub.s32 0, %v2250
    %v2252 = vrot.slane %v2188, %v2251
    %v2253 = vlaneseq
    %v2254 = vshrl.u32 %v2253, 7
    %v2255 = vsub.s32 0, %v2254
    %v2256 = vrot.slane %v2190, %v2255
    %v2257 = vlaneseq
    %v2258 = vshrl.u32 %v2257, 7
    %v2259 = vsub.s32 0, %v2258
    %v2260 = vrot.slane %v2173, %v2259
    %v2261 = vlaneseq
    %v2262 = vshrl.u32 %v2261, 7
    %v2263 = vsub.s32 0, %v2262
    %v2264 = vrot.slane %v2187, %v2263
    %v2265 = vlaneseq
    %v2266 = vshrl.u32 %v2265, 7
    %v2267 = vsub.s32 0, %v2266
    %v2268 = vrot.slane %v2189, %v2267
    %v2269 = vlaneseq
    %v2270 = vshrl.u32 %v2269, 7
    %v2271 = vsub.s32 0, %v2270
    %v2272 = vrot.slane %v2191, %v2271
    %v2273 = vlaneseq
    %v2274 = vshrl.u32 %v2273, 7
    %v2275 = vsub.s32 0, %v2274
    %v2276 = vrot.slane %v2215, %v2275
    %v2277 = vlaneseq
    %v2278 = vshrl.u32 %v2277, 7
    %v2279 = vsub.s32 0, %v2278
    %v2280 = vrot.slane %v2229, %v2279
    %v2281 = vlaneseq
    %v2282 = vshrl.u32 %v2281, 7
    %v2283 = vsub.s32 0, %v2282
    %v2284 = vrot.slane %v2237, %v2283
    %v2285 = vlaneseq
    %v2286 = vshrl.u32 %v2285, 7
    %v2287 = vsub.s32 0, %v2286
    %v2288 = vrot.slane %v2239, %v2287
    %v2289 = vlaneseq
    %v2290 = vshrl.u32 %v2289, 7
    %v2291 = vsub.s32 0, %v2290
    %v2292 = vrot.slane %v2222, %v2291
    %v2293 = vlaneseq
    %v2294 = vshrl.u32 %v2293, 7
    %v2295 = vsub.s32 0, %v2294
    %v2296 = vrot.slane %v2236, %v2295
    %v2297 = vlaneseq
    %v2298 = vshrl.u32 %v2297, 7
    %v2299 = vsub.s32 0, %v2298
    %v2300 = vrot.slane %v2238, %v2299
    %v2301 = vlaneseq
    %v2302 = vshrl.u32 %v2301, 7
    %v2303 = vsub.s32 0, %v2302
    %v2304 = vrot.slane %v2240, %v2303
    %2305 = vrot.lane.b32.xlu0 %v2244, 32
    %v2306 = vpop.permute.xlu0 %2305
    %2307 = vrot.lane.b32.xlu0 %v2248, 32
    %v2308 = vpop.permute.xlu0 %2307
    %2309 = vrot.lane.b32.xlu0 %v2252, 32
    %v2310 = vpop.permute.xlu0 %2309
    %2311 = vrot.lane.b32.xlu0 %v2256, 32
    %v2312 = vpop.permute.xlu0 %2311
    %2313 = vrot.lane.b32.xlu0 %v2260, 32
    %v2314 = vpop.permute.xlu0 %2313
    %2315 = vrot.lane.b32.xlu0 %v2264, 32
    %v2316 = vpop.permute.xlu0 %2315
    %2317 = vrot.lane.b32.xlu0 %v2268, 32
    %v2318 = vpop.permute.xlu0 %2317
    %2319 = vrot.lane.b32.xlu0 %v2272, 32
    %v2320 = vpop.permute.xlu0 %2319
    %2321 = vrot.lane.b32.xlu0 %v2276, 32
    %v2322 = vpop.permute.xlu0 %2321
    %2323 = vrot.lane.b32.xlu0 %v2280, 32
    %v2324 = vpop.permute.xlu0 %2323
    %2325 = vrot.lane.b32.xlu0 %v2284, 32
    %v2326 = vpop.permute.xlu0 %2325
    %2327 = vrot.lane.b32.xlu0 %v2288, 32
    %v2328 = vpop.permute.xlu0 %2327
    %2329 = vrot.lane.b32.xlu0 %v2292, 32
    %v2330 = vpop.permute.xlu0 %2329
    %2331 = vrot.lane.b32.xlu0 %v2296, 32
    %v2332 = vpop.permute.xlu0 %2331
    %2333 = vrot.lane.b32.xlu0 %v2300, 32
    %v2334 = vpop.permute.xlu0 %2333
    %2335 = vrot.lane.b32.xlu0 %v2304, 32
    %v2336 = vpop.permute.xlu0 %2335
    %v2353 = vadd.f32 %v218, %v2306
    %v2354 = vadd.f32 %v218, %v2308
    %v2355 = vadd.f32 %v218, %v2310
    %v2356 = vadd.f32 %v218, %v2312
    %v2357 = vadd.f32 %v218, %v2314
    %v2358 = vadd.f32 %v218, %v2316
    %v2359 = vadd.f32 %v218, %v2318
    %v2360 = vadd.f32 %v218, %v2320
    %v2361 = vadd.f32 %v223, %v2322
    %v2362 = vadd.f32 %v223, %v2324
    %v2363 = vadd.f32 %v223, %v2326
    %v2364 = vadd.f32 %v223, %v2328
    %v2365 = vadd.f32 %v223, %v2330
    %v2366 = vadd.f32 %v223, %v2332
    %v2367 = vadd.f32 %v223, %v2334
    %v2368 = vadd.f32 %v223, %v2336
    %v2369 = vtanh.pop %v2353
    %v2370 = vtanh.pop %v2354
    %v2371 = vtanh.pop %v2355
    %v2372 = vtanh.pop %v2356
    %v2373 = vtanh.pop %v2357
    %v2374 = vtanh.pop %v2358
    %v2375 = vtanh.pop %v2359
    %v2376 = vtanh.pop %v2360
    %v2377 = vtanh.pop %v2361
    %v2378 = vtanh.pop %v2362
    %v2379 = vtanh.pop %v2363
    %v2380 = vtanh.pop %v2364
    %v2381 = vtanh.pop %v2365
    %v2382 = vtanh.pop %v2366
    %v2383 = vtanh.pop %v2367
    %v2384 = vtanh.pop %v2368
    %v2386 = vlaneseq
    %v2387 = vshrl.u32 %v2386, 7
    %v2388 = vsub.s32 0, %v2387
    %v2389 = vrot.slane %v2052, %v2388
    %2390 = vrot.lane.b32.xlu0 %v2389, 32
    %v2391 = vpop.permute.xlu0 %2390
    %v2393 = vmul.f32 %v2369, %v2391
    %v2394 = vmul.f32 %v2370, %v2391
    %v2395 = vmul.f32 %v2371, %v2391
    %v2396 = vmul.f32 %v2372, %v2391
    %v2397 = vmul.f32 %v2373, %v2391
    %v2398 = vmul.f32 %v2374, %v2391
    %v2399 = vmul.f32 %v2375, %v2391
    %v2400 = vmul.f32 %v2376, %v2391
    %v2401 = vmul.f32 %v2377, %v2391
    %v2402 = vmul.f32 %v2378, %v2391
    %v2403 = vmul.f32 %v2379, %v2391
    %v2404 = vmul.f32 %v2380, %v2391
    %v2405 = vmul.f32 %v2381, %v2391
    %v2406 = vmul.f32 %v2382, %v2391
    %v2407 = vmul.f32 %v2383, %v2391
    %v2408 = vmul.f32 %v2384, %v2391
    %2425 = vrot.lane.b32.xlu0 %v2393, 96
    %v2426 = vpop.permute.xlu0 %2425
    %2427 = vrot.lane.b32.xlu0 %v2394, 96
    %v2428 = vpop.permute.xlu0 %2427
    %2429 = vrot.lane.b32.xlu0 %v2395, 96
    %v2430 = vpop.permute.xlu0 %2429
    %2431 = vrot.lane.b32.xlu0 %v2396, 96
    %v2432 = vpop.permute.xlu0 %2431
    %2433 = vrot.lane.b32.xlu0 %v2397, 96
    %v2434 = vpop.permute.xlu0 %2433
    %2435 = vrot.lane.b32.xlu0 %v2398, 96
    %v2436 = vpop.permute.xlu0 %2435
    %2437 = vrot.lane.b32.xlu0 %v2399, 96
    %v2438 = vpop.permute.xlu0 %2437
    %2439 = vrot.lane.b32.xlu0 %v2400, 96
    %v2440 = vpop.permute.xlu0 %2439
    %2441 = vrot.lane.b32.xlu0 %v2401, 96
    %v2442 = vpop.permute.xlu0 %2441
    %2443 = vrot.lane.b32.xlu0 %v2402, 96
    %v2444 = vpop.permute.xlu0 %2443
    %2445 = vrot.lane.b32.xlu0 %v2403, 96
    %v2446 = vpop.permute.xlu0 %2445
    %2447 = vrot.lane.b32.xlu0 %v2404, 96
    %v2448 = vpop.permute.xlu0 %2447
    %2449 = vrot.lane.b32.xlu0 %v2405, 96
    %v2450 = vpop.permute.xlu0 %2449
    %2451 = vrot.lane.b32.xlu0 %v2406, 96
    %v2452 = vpop.permute.xlu0 %2451
    %2453 = vrot.lane.b32.xlu0 %v2407, 96
    %v2454 = vpop.permute.xlu0 %2453
    %2455 = vrot.lane.b32.xlu0 %v2408, 96
    %v2456 = vpop.permute.xlu0 %2455
    %v2473 = vsel %vm462, %v2426, 0.0
    %2474 = vadd.xlane.f32.xlu0 %v2473
    %v2475 = vpop.xlane.xlu0 %2474
    %v2476 = vsel %vm462, %v2428, 0.0
    %2477 = vadd.xlane.f32.xlu0 %v2476
    %v2478 = vpop.xlane.xlu0 %2477
    %v2479 = vsel %vm462, %v2430, 0.0
    %2480 = vadd.xlane.f32.xlu0 %v2479
    %v2481 = vpop.xlane.xlu0 %2480
    %v2482 = vsel %vm462, %v2432, 0.0
    %2483 = vadd.xlane.f32.xlu0 %v2482
    %v2484 = vpop.xlane.xlu0 %2483
    %v2485 = vsel %vm462, %v2434, 0.0
    %2486 = vadd.xlane.f32.xlu0 %v2485
    %v2487 = vpop.xlane.xlu0 %2486
    %v2488 = vsel %vm462, %v2436, 0.0
    %2489 = vadd.xlane.f32.xlu0 %v2488
    %v2490 = vpop.xlane.xlu0 %2489
    %v2491 = vsel %vm462, %v2438, 0.0
    %2492 = vadd.xlane.f32.xlu0 %v2491
    %v2493 = vpop.xlane.xlu0 %2492
    %v2494 = vsel %vm462, %v2440, 0.0
    %2495 = vadd.xlane.f32.xlu0 %v2494
    %v2496 = vpop.xlane.xlu0 %2495
    %v2497 = vsel %vm462, %v2442, 0.0
    %2498 = vadd.xlane.f32.xlu0 %v2497
    %v2499 = vpop.xlane.xlu0 %2498
    %v2500 = vsel %vm462, %v2444, 0.0
    %2501 = vadd.xlane.f32.xlu0 %v2500
    %v2502 = vpop.xlane.xlu0 %2501
    %v2503 = vsel %vm462, %v2446, 0.0
    %2504 = vadd.xlane.f32.xlu0 %v2503
    %v2505 = vpop.xlane.xlu0 %2504
    %v2506 = vsel %vm462, %v2448, 0.0
    %2507 = vadd.xlane.f32.xlu0 %v2506
    %v2508 = vpop.xlane.xlu0 %2507
    %v2509 = vsel %vm462, %v2450, 0.0
    %2510 = vadd.xlane.f32.xlu0 %v2509
    %v2511 = vpop.xlane.xlu0 %2510
    %v2512 = vsel %vm462, %v2452, 0.0
    %2513 = vadd.xlane.f32.xlu0 %v2512
    %v2514 = vpop.xlane.xlu0 %2513
    %v2515 = vsel %vm462, %v2454, 0.0
    %2516 = vadd.xlane.f32.xlu0 %v2515
    %v2517 = vpop.xlane.xlu0 %2516
    %v2518 = vsel %vm462, %v2456, 0.0
    %2519 = vadd.xlane.f32.xlu0 %v2518
    %v2520 = vpop.xlane.xlu0 %2519
    %v2521 = vlaneseq
    %v2522 = vshrl.u32 %v2521, 7
    %v2523 = vsub.s32 0, %v2522
    %v2524 = vrot.slane %v231, %v2523
    %v2525 = vlaneseq
    %v2526 = vshrl.u32 %v2525, 7
    %v2527 = vsub.s32 0, %v2526
    %v2528 = vrot.slane %v235, %v2527
    %2532 = vbcast.lane.b32.xlu0 %v2524, 256
    %v2533 = vpop.permute.xlu0 %2532
    %2535 = vbcast.lane.b32.xlu0 %v2528, 256
    %v2536 = vpop.permute.xlu0 %2535
    %v2539 = vadd.f32 %v2475, %v2533
    %v2540 = vadd.f32 %v2478, %v2533
    %v2541 = vadd.f32 %v2481, %v2533
    %v2542 = vadd.f32 %v2484, %v2533
    %v2543 = vadd.f32 %v2487, %v2533
    %v2544 = vadd.f32 %v2490, %v2533
    %v2545 = vadd.f32 %v2493, %v2533
    %v2546 = vadd.f32 %v2496, %v2533
    %v2547 = vadd.f32 %v2499, %v2536
    %v2548 = vadd.f32 %v2502, %v2536
    %v2549 = vadd.f32 %v2505, %v2536
    %v2550 = vadd.f32 %v2508, %v2536
    %v2551 = vadd.f32 %v2511, %v2536
    %v2552 = vadd.f32 %v2514, %v2536
    %v2553 = vadd.f32 %v2517, %v2536
    %v2554 = vadd.f32 %v2520, %v2536
    %2571 = vset.pattern.permute.xlu0 0
    %2572 = vperm.xlu0 %2571, %v2539
    %v2573 = vpop.permute.xlu0 %2572
    %2574 = vset.pattern.permute.xlu0 0
    %2575 = vperm.xlu0 %2574, %v2540
    %v2576 = vpop.permute.xlu0 %2575
    %2577 = vset.pattern.permute.xlu0 0
    %2578 = vperm.xlu0 %2577, %v2541
    %v2579 = vpop.permute.xlu0 %2578
    %2580 = vset.pattern.permute.xlu0 0
    %2581 = vperm.xlu0 %2580, %v2542
    %v2582 = vpop.permute.xlu0 %2581
    %2583 = vset.pattern.permute.xlu0 0
    %2584 = vperm.xlu0 %2583, %v2543
    %v2585 = vpop.permute.xlu0 %2584
    %2586 = vset.pattern.permute.xlu0 0
    %2587 = vperm.xlu0 %2586, %v2544
    %v2588 = vpop.permute.xlu0 %2587
    %2589 = vset.pattern.permute.xlu0 0
    %2590 = vperm.xlu0 %2589, %v2545
    %v2591 = vpop.permute.xlu0 %2590
    %2592 = vset.pattern.permute.xlu0 0
    %2593 = vperm.xlu0 %2592, %v2546
    %v2594 = vpop.permute.xlu0 %2593
    %2595 = vset.pattern.permute.xlu0 0
    %2596 = vperm.xlu0 %2595, %v2547
    %v2597 = vpop.permute.xlu0 %2596
    %2598 = vset.pattern.permute.xlu0 0
    %2599 = vperm.xlu0 %2598, %v2548
    %v2600 = vpop.permute.xlu0 %2599
    %2601 = vset.pattern.permute.xlu0 0
    %2602 = vperm.xlu0 %2601, %v2549
    %v2603 = vpop.permute.xlu0 %2602
    %2604 = vset.pattern.permute.xlu0 0
    %2605 = vperm.xlu0 %2604, %v2550
    %v2606 = vpop.permute.xlu0 %2605
    %2607 = vset.pattern.permute.xlu0 0
    %2608 = vperm.xlu0 %2607, %v2551
    %v2609 = vpop.permute.xlu0 %2608
    %2610 = vset.pattern.permute.xlu0 0
    %2611 = vperm.xlu0 %2610, %v2552
    %v2612 = vpop.permute.xlu0 %2611
    %2613 = vset.pattern.permute.xlu0 0
    %2614 = vperm.xlu0 %2613, %v2553
    %v2615 = vpop.permute.xlu0 %2614
    %2616 = vset.pattern.permute.xlu0 0
    %2617 = vperm.xlu0 %2616, %v2554
    %v2618 = vpop.permute.xlu0 %2617
    %v2619 = vlaneseq
    %v2620 = vshrl.u32 %v2619, 7
    %v2621 = vsub.s32 %v227, %v2620
    %v2622 = vrot.slane %v2573, %v2621
    %v2623 = vlaneseq
    %v2624 = vshrl.u32 %v2623, 7
    %v2625 = vsub.s32 %v227, %v2624
    %v2626 = vrot.slane %v2576, %v2625
    %v2627 = vlaneseq
    %v2628 = vshrl.u32 %v2627, 7
    %v2629 = vsub.s32 %v227, %v2628
    %v2630 = vrot.slane %v2579, %v2629
    %v2631 = vlaneseq
    %v2632 = vshrl.u32 %v2631, 7
    %v2633 = vsub.s32 %v227, %v2632
    %v2634 = vrot.slane %v2582, %v2633
    %v2635 = vlaneseq
    %v2636 = vshrl.u32 %v2635, 7
    %v2637 = vsub.s32 %v227, %v2636
    %v2638 = vrot.slane %v2585, %v2637
    %v2639 = vlaneseq
    %v2640 = vshrl.u32 %v2639, 7
    %v2641 = vsub.s32 %v227, %v2640
    %v2642 = vrot.slane %v2588, %v2641
    %v2643 = vlaneseq
    %v2644 = vshrl.u32 %v2643, 7
    %v2645 = vsub.s32 %v227, %v2644
    %v2646 = vrot.slane %v2591, %v2645
    %v2647 = vlaneseq
    %v2648 = vshrl.u32 %v2647, 7
    %v2649 = vsub.s32 %v227, %v2648
    %v2650 = vrot.slane %v2594, %v2649
    %v2651 = vlaneseq
    %v2652 = vshrl.u32 %v2651, 7
    %v2653 = vsub.s32 %v227, %v2652
    %v2654 = vrot.slane %v2597, %v2653
    %v2655 = vlaneseq
    %v2656 = vshrl.u32 %v2655, 7
    %v2657 = vsub.s32 %v227, %v2656
    %v2658 = vrot.slane %v2600, %v2657
    %v2659 = vlaneseq
    %v2660 = vshrl.u32 %v2659, 7
    %v2661 = vsub.s32 %v227, %v2660
    %v2662 = vrot.slane %v2603, %v2661
    %v2663 = vlaneseq
    %v2664 = vshrl.u32 %v2663, 7
    %v2665 = vsub.s32 %v227, %v2664
    %v2666 = vrot.slane %v2606, %v2665
    %v2667 = vlaneseq
    %v2668 = vshrl.u32 %v2667, 7
    %v2669 = vsub.s32 %v227, %v2668
    %v2670 = vrot.slane %v2609, %v2669
    %v2671 = vlaneseq
    %v2672 = vshrl.u32 %v2671, 7
    %v2673 = vsub.s32 %v227, %v2672
    %v2674 = vrot.slane %v2612, %v2673
    %v2675 = vlaneseq
    %v2676 = vshrl.u32 %v2675, 7
    %v2677 = vsub.s32 %v227, %v2676
    %v2678 = vrot.slane %v2615, %v2677
    %v2679 = vlaneseq
    %v2680 = vshrl.u32 %v2679, 7
    %v2681 = vsub.s32 %v227, %v2680
    %v2682 = vrot.slane %v2618, %v2681
    %vm2683 = vcmask 1041409
    %v2684 = vsel %vm2683, %v2626, %v2622
    %vm2685 = vcmask 1042434
    %v2686 = vsel %vm2685, %v2630, %v2684
    %vm2687 = vcmask 1043459
    %v2688 = vsel %vm2687, %v2634, %v2686
    %vm2689 = vcmask 1044484
    %v2690 = vsel %vm2689, %v2638, %v2688
    %vm2691 = vcmask 1045509
    %v2692 = vsel %vm2691, %v2642, %v2690
    %vm2693 = vcmask 1046534
    %v2694 = vsel %vm2693, %v2646, %v2692
    %vm2695 = vcmask 1047559
    %v2696 = vsel %vm2695, %v2650, %v2694
    %v2697 = vsel %vm2683, %v2658, %v2654
    %v2698 = vsel %vm2685, %v2662, %v2697
    %v2699 = vsel %vm2687, %v2666, %v2698
    %v2700 = vsel %vm2689, %v2670, %v2699
    %v2701 = vsel %vm2691, %v2674, %v2700
    %v2702 = vsel %vm2693, %v2678, %v2701
    %v2703 = vsel %vm2695, %v2682, %v2702
    %vm2706 = vcmask 64512
    %v2707 = vsel %vm2706, %v2696, -inf
    %2708 = vmax.xlane.f32.xlu0 %v2707
    %v2709 = vpop.xlane.xlu0 %2708
    %v2710 = vsel %vm2706, %v2703, -inf
    %2711 = vmax.xlane.f32.xlu0 %v2710
    %v2712 = vpop.xlane.xlu0 %2711
    %v2715 = vlaneseq
    %v2716 = vshrl.u32 %v2715, 7
    %v2717 = vsub.s32 0, %v2716
    %v2718 = vrot.slane %v2709, %v2717
    %v2719 = vlaneseq
    %v2720 = vshrl.u32 %v2719, 7
    %v2721 = vsub.s32 1, %v2720
    %v2722 = vrot.slane %v2709, %v2721
    %v2723 = vlaneseq
    %v2724 = vshrl.u32 %v2723, 7
    %v2725 = vsub.s32 2, %v2724
    %v2726 = vrot.slane %v2709, %v2725
    %v2727 = vlaneseq
    %v2728 = vshrl.u32 %v2727, 7
    %v2729 = vsub.s32 3, %v2728
    %v2730 = vrot.slane %v2709, %v2729
    %v2731 = vlaneseq
    %v2732 = vshrl.u32 %v2731, 7
    %v2733 = vsub.s32 4, %v2732
    %v2734 = vrot.slane %v2709, %v2733
    %v2735 = vlaneseq
    %v2736 = vshrl.u32 %v2735, 7
    %v2737 = vsub.s32 5, %v2736
    %v2738 = vrot.slane %v2709, %v2737
    %v2739 = vlaneseq
    %v2740 = vshrl.u32 %v2739, 7
    %v2741 = vsub.s32 6, %v2740
    %v2742 = vrot.slane %v2709, %v2741
    %v2743 = vlaneseq
    %v2744 = vshrl.u32 %v2743, 7
    %v2745 = vsub.s32 7, %v2744
    %v2746 = vrot.slane %v2709, %v2745
    %v2747 = vlaneseq
    %v2748 = vshrl.u32 %v2747, 7
    %v2749 = vsub.s32 0, %v2748
    %v2750 = vrot.slane %v2712, %v2749
    %v2751 = vlaneseq
    %v2752 = vshrl.u32 %v2751, 7
    %v2753 = vsub.s32 1, %v2752
    %v2754 = vrot.slane %v2712, %v2753
    %v2755 = vlaneseq
    %v2756 = vshrl.u32 %v2755, 7
    %v2757 = vsub.s32 2, %v2756
    %v2758 = vrot.slane %v2712, %v2757
    %v2759 = vlaneseq
    %v2760 = vshrl.u32 %v2759, 7
    %v2761 = vsub.s32 3, %v2760
    %v2762 = vrot.slane %v2712, %v2761
    %v2763 = vlaneseq
    %v2764 = vshrl.u32 %v2763, 7
    %v2765 = vsub.s32 4, %v2764
    %v2766 = vrot.slane %v2712, %v2765
    %v2767 = vlaneseq
    %v2768 = vshrl.u32 %v2767, 7
    %v2769 = vsub.s32 5, %v2768
    %v2770 = vrot.slane %v2712, %v2769
    %v2771 = vlaneseq
    %v2772 = vshrl.u32 %v2771, 7
    %v2773 = vsub.s32 6, %v2772
    %v2774 = vrot.slane %v2712, %v2773
    %v2775 = vlaneseq
    %v2776 = vshrl.u32 %v2775, 7
    %v2777 = vsub.s32 7, %v2776
    %v2778 = vrot.slane %v2712, %v2777
    %v2795 = vsub.f32 %v2539, %v2718
    %v2796 = vsub.f32 %v2540, %v2722
    %v2797 = vsub.f32 %v2541, %v2726
    %v2798 = vsub.f32 %v2542, %v2730
    %v2799 = vsub.f32 %v2543, %v2734
    %v2800 = vsub.f32 %v2544, %v2738
    %v2801 = vsub.f32 %v2545, %v2742
    %v2802 = vsub.f32 %v2546, %v2746
    %v2803 = vsub.f32 %v2547, %v2750
    %v2804 = vsub.f32 %v2548, %v2754
    %v2805 = vsub.f32 %v2549, %v2758
    %v2806 = vsub.f32 %v2550, %v2762
    %v2807 = vsub.f32 %v2551, %v2766
    %v2808 = vsub.f32 %v2552, %v2770
    %v2809 = vsub.f32 %v2553, %v2774
    %v2810 = vsub.f32 %v2554, %v2778
    %v2811 = vmul.f32 %v2795, 1.442695
    %v2812 = vpow.pop %v2811
    %v2813 = vmul.f32 %v2796, 1.442695
    %v2814 = vpow.pop %v2813
    %v2815 = vmul.f32 %v2797, 1.442695
    %v2816 = vpow.pop %v2815
    %v2817 = vmul.f32 %v2798, 1.442695
    %v2818 = vpow.pop %v2817
    %v2819 = vmul.f32 %v2799, 1.442695
    %v2820 = vpow.pop %v2819
    %v2821 = vmul.f32 %v2800, 1.442695
    %v2822 = vpow.pop %v2821
    %v2823 = vmul.f32 %v2801, 1.442695
    %v2824 = vpow.pop %v2823
    %v2825 = vmul.f32 %v2802, 1.442695
    %v2826 = vpow.pop %v2825
    %v2827 = vmul.f32 %v2803, 1.442695
    %v2828 = vpow.pop %v2827
    %v2829 = vmul.f32 %v2804, 1.442695
    %v2830 = vpow.pop %v2829
    %v2831 = vmul.f32 %v2805, 1.442695
    %v2832 = vpow.pop %v2831
    %v2833 = vmul.f32 %v2806, 1.442695
    %v2834 = vpow.pop %v2833
    %v2835 = vmul.f32 %v2807, 1.442695
    %v2836 = vpow.pop %v2835
    %v2837 = vmul.f32 %v2808, 1.442695
    %v2838 = vpow.pop %v2837
    %v2839 = vmul.f32 %v2809, 1.442695
    %v2840 = vpow.pop %v2839
    %v2841 = vmul.f32 %v2810, 1.442695
    %v2842 = vpow.pop %v2841
    %2859 = vset.pattern.permute.xlu0 0
    %2860 = vperm.xlu0 %2859, %v2812
    %v2861 = vpop.permute.xlu0 %2860
    %2862 = vset.pattern.permute.xlu0 0
    %2863 = vperm.xlu0 %2862, %v2814
    %v2864 = vpop.permute.xlu0 %2863
    %2865 = vset.pattern.permute.xlu0 0
    %2866 = vperm.xlu0 %2865, %v2816
    %v2867 = vpop.permute.xlu0 %2866
    %2868 = vset.pattern.permute.xlu0 0
    %2869 = vperm.xlu0 %2868, %v2818
    %v2870 = vpop.permute.xlu0 %2869
    %2871 = vset.pattern.permute.xlu0 0
    %2872 = vperm.xlu0 %2871, %v2820
    %v2873 = vpop.permute.xlu0 %2872
    %2874 = vset.pattern.permute.xlu0 0
    %2875 = vperm.xlu0 %2874, %v2822
    %v2876 = vpop.permute.xlu0 %2875
    %2877 = vset.pattern.permute.xlu0 0
    %2878 = vperm.xlu0 %2877, %v2824
    %v2879 = vpop.permute.xlu0 %2878
    %2880 = vset.pattern.permute.xlu0 0
    %2881 = vperm.xlu0 %2880, %v2826
    %v2882 = vpop.permute.xlu0 %2881
    %2883 = vset.pattern.permute.xlu0 0
    %2884 = vperm.xlu0 %2883, %v2828
    %v2885 = vpop.permute.xlu0 %2884
    %2886 = vset.pattern.permute.xlu0 0
    %2887 = vperm.xlu0 %2886, %v2830
    %v2888 = vpop.permute.xlu0 %2887
    %2889 = vset.pattern.permute.xlu0 0
    %2890 = vperm.xlu0 %2889, %v2832
    %v2891 = vpop.permute.xlu0 %2890
    %2892 = vset.pattern.permute.xlu0 0
    %2893 = vperm.xlu0 %2892, %v2834
    %v2894 = vpop.permute.xlu0 %2893
    %2895 = vset.pattern.permute.xlu0 0
    %2896 = vperm.xlu0 %2895, %v2836
    %v2897 = vpop.permute.xlu0 %2896
    %2898 = vset.pattern.permute.xlu0 0
    %2899 = vperm.xlu0 %2898, %v2838
    %v2900 = vpop.permute.xlu0 %2899
    %2901 = vset.pattern.permute.xlu0 0
    %2902 = vperm.xlu0 %2901, %v2840
    %v2903 = vpop.permute.xlu0 %2902
    %2904 = vset.pattern.permute.xlu0 0
    %2905 = vperm.xlu0 %2904, %v2842
    %v2906 = vpop.permute.xlu0 %2905
    %v2907 = vlaneseq
    %v2908 = vshrl.u32 %v2907, 7
    %v2909 = vsub.s32 %v227, %v2908
    %v2910 = vrot.slane %v2861, %v2909
    %v2911 = vlaneseq
    %v2912 = vshrl.u32 %v2911, 7
    %v2913 = vsub.s32 %v227, %v2912
    %v2914 = vrot.slane %v2864, %v2913
    %v2915 = vlaneseq
    %v2916 = vshrl.u32 %v2915, 7
    %v2917 = vsub.s32 %v227, %v2916
    %v2918 = vrot.slane %v2867, %v2917
    %v2919 = vlaneseq
    %v2920 = vshrl.u32 %v2919, 7
    %v2921 = vsub.s32 %v227, %v2920
    %v2922 = vrot.slane %v2870, %v2921
    %v2923 = vlaneseq
    %v2924 = vshrl.u32 %v2923, 7
    %v2925 = vsub.s32 %v227, %v2924
    %v2926 = vrot.slane %v2873, %v2925
    %v2927 = vlaneseq
    %v2928 = vshrl.u32 %v2927, 7
    %v2929 = vsub.s32 %v227, %v2928
    %v2930 = vrot.slane %v2876, %v2929
    %v2931 = vlaneseq
    %v2932 = vshrl.u32 %v2931, 7
    %v2933 = vsub.s32 %v227, %v2932
    %v2934 = vrot.slane %v2879, %v2933
    %v2935 = vlaneseq
    %v2936 = vshrl.u32 %v2935, 7
    %v2937 = vsub.s32 %v227, %v2936
    %v2938 = vrot.slane %v2882, %v2937
    %v2939 = vlaneseq
    %v2940 = vshrl.u32 %v2939, 7
    %v2941 = vsub.s32 %v227, %v2940
    %v2942 = vrot.slane %v2885, %v2941
    %v2943 = vlaneseq
    %v2944 = vshrl.u32 %v2943, 7
    %v2945 = vsub.s32 %v227, %v2944
    %v2946 = vrot.slane %v2888, %v2945
    %v2947 = vlaneseq
    %v2948 = vshrl.u32 %v2947, 7
    %v2949 = vsub.s32 %v227, %v2948
    %v2950 = vrot.slane %v2891, %v2949
    %v2951 = vlaneseq
    %v2952 = vshrl.u32 %v2951, 7
    %v2953 = vsub.s32 %v227, %v2952
    %v2954 = vrot.slane %v2894, %v2953
    %v2955 = vlaneseq
    %v2956 = vshrl.u32 %v2955, 7
    %v2957 = vsub.s32 %v227, %v2956
    %v2958 = vrot.slane %v2897, %v2957
    %v2959 = vlaneseq
    %v2960 = vshrl.u32 %v2959, 7
    %v2961 = vsub.s32 %v227, %v2960
    %v2962 = vrot.slane %v2900, %v2961
    %v2963 = vlaneseq
    %v2964 = vshrl.u32 %v2963, 7
    %v2965 = vsub.s32 %v227, %v2964
    %v2966 = vrot.slane %v2903, %v2965
    %v2967 = vlaneseq
    %v2968 = vshrl.u32 %v2967, 7
    %v2969 = vsub.s32 %v227, %v2968
    %v2970 = vrot.slane %v2906, %v2969
    %v2971 = vsel %vm2683, %v2914, %v2910
    %v2972 = vsel %vm2685, %v2918, %v2971
    %v2973 = vsel %vm2687, %v2922, %v2972
    %v2974 = vsel %vm2689, %v2926, %v2973
    %v2975 = vsel %vm2691, %v2930, %v2974
    %v2976 = vsel %vm2693, %v2934, %v2975
    %v2977 = vsel %vm2695, %v2938, %v2976
    %v2978 = vsel %vm2683, %v2946, %v2942
    %v2979 = vsel %vm2685, %v2950, %v2978
    %v2980 = vsel %vm2687, %v2954, %v2979
    %v2981 = vsel %vm2689, %v2958, %v2980
    %v2982 = vsel %vm2691, %v2962, %v2981
    %v2983 = vsel %vm2693, %v2966, %v2982
    %v2984 = vsel %vm2695, %v2970, %v2983
    %v2987 = vsel %vm2706, %v2977, 0.0
    %2988 = vadd.xlane.f32.xlu0 %v2987
    %v2989 = vpop.xlane.xlu0 %2988
    %v2990 = vsel %vm2706, %v2984, 0.0
    %2991 = vadd.xlane.f32.xlu0 %v2990
    %v2992 = vpop.xlane.xlu0 %2991
    %v2993 = vrcp.pop %v2989
    %v2994 = vrcp.pop %v2992
    %v2997 = vlaneseq
    %v2998 = vshrl.u32 %v2997, 7
    %v2999 = vsub.s32 0, %v2998
    %v3000 = vrot.slane %v2993, %v2999
    %v3001 = vlaneseq
    %v3002 = vshrl.u32 %v3001, 7
    %v3003 = vsub.s32 1, %v3002
    %v3004 = vrot.slane %v2993, %v3003
    %v3005 = vlaneseq
    %v3006 = vshrl.u32 %v3005, 7
    %v3007 = vsub.s32 2, %v3006
    %v3008 = vrot.slane %v2993, %v3007
    %v3009 = vlaneseq
    %v3010 = vshrl.u32 %v3009, 7
    %v3011 = vsub.s32 3, %v3010
    %v3012 = vrot.slane %v2993, %v3011
    %v3013 = vlaneseq
    %v3014 = vshrl.u32 %v3013, 7
    %v3015 = vsub.s32 4, %v3014
    %v3016 = vrot.slane %v2993, %v3015
    %v3017 = vlaneseq
    %v3018 = vshrl.u32 %v3017, 7
    %v3019 = vsub.s32 5, %v3018
    %v3020 = vrot.slane %v2993, %v3019
    %v3021 = vlaneseq
    %v3022 = vshrl.u32 %v3021, 7
    %v3023 = vsub.s32 6, %v3022
    %v3024 = vrot.slane %v2993, %v3023
    %v3025 = vlaneseq
    %v3026 = vshrl.u32 %v3025, 7
    %v3027 = vsub.s32 7, %v3026
    %v3028 = vrot.slane %v2993, %v3027
    %v3029 = vlaneseq
    %v3030 = vshrl.u32 %v3029, 7
    %v3031 = vsub.s32 0, %v3030
    %v3032 = vrot.slane %v2994, %v3031
    %v3033 = vlaneseq
    %v3034 = vshrl.u32 %v3033, 7
    %v3035 = vsub.s32 1, %v3034
    %v3036 = vrot.slane %v2994, %v3035
    %v3037 = vlaneseq
    %v3038 = vshrl.u32 %v3037, 7
    %v3039 = vsub.s32 2, %v3038
    %v3040 = vrot.slane %v2994, %v3039
    %v3041 = vlaneseq
    %v3042 = vshrl.u32 %v3041, 7
    %v3043 = vsub.s32 3, %v3042
    %v3044 = vrot.slane %v2994, %v3043
    %v3045 = vlaneseq
    %v3046 = vshrl.u32 %v3045, 7
    %v3047 = vsub.s32 4, %v3046
    %v3048 = vrot.slane %v2994, %v3047
    %v3049 = vlaneseq
    %v3050 = vshrl.u32 %v3049, 7
    %v3051 = vsub.s32 5, %v3050
    %v3052 = vrot.slane %v2994, %v3051
    %v3053 = vlaneseq
    %v3054 = vshrl.u32 %v3053, 7
    %v3055 = vsub.s32 6, %v3054
    %v3056 = vrot.slane %v2994, %v3055
    %v3057 = vlaneseq
    %v3058 = vshrl.u32 %v3057, 7
    %v3059 = vsub.s32 7, %v3058
    %v3060 = vrot.slane %v2994, %v3059
    %v3077 = vmul.f32 %v2812, %v3000
    %v3078 = vmul.f32 %v2814, %v3004
    %v3079 = vmul.f32 %v2816, %v3008
    %v3080 = vmul.f32 %v2818, %v3012
    %v3081 = vmul.f32 %v2820, %v3016
    %v3082 = vmul.f32 %v2822, %v3020
    %v3083 = vmul.f32 %v2824, %v3024
    %v3084 = vmul.f32 %v2826, %v3028
    %v3085 = vmul.f32 %v2828, %v3032
    %v3086 = vmul.f32 %v2830, %v3036
    %v3087 = vmul.f32 %v2832, %v3040
    %v3088 = vmul.f32 %v2834, %v3044
    %v3089 = vmul.f32 %v2836, %v3048
    %v3090 = vmul.f32 %v2838, %v3052
    %v3091 = vmul.f32 %v2840, %v3056
    %v3092 = vmul.f32 %v2842, %v3060
    %3101 = vset.pattern.permute.xlu0 0
    %3102 = vperm.xlu0 %3101, %v3077
    %v3103 = vpop.permute.xlu0 %3102
    %3104 = vset.pattern.permute.xlu0 0
    %3105 = vperm.xlu0 %3104, %v3078
    %v3106 = vpop.permute.xlu0 %3105
    %3107 = vset.pattern.permute.xlu0 0
    %3108 = vperm.xlu0 %3107, %v3079
    %v3109 = vpop.permute.xlu0 %3108
    %3110 = vset.pattern.permute.xlu0 0
    %3111 = vperm.xlu0 %3110, %v3080
    %v3112 = vpop.permute.xlu0 %3111
    %3113 = vset.pattern.permute.xlu0 0
    %3114 = vperm.xlu0 %3113, %v3081
    %v3115 = vpop.permute.xlu0 %3114
    %3116 = vset.pattern.permute.xlu0 0
    %3117 = vperm.xlu0 %3116, %v3082
    %v3118 = vpop.permute.xlu0 %3117
    %3119 = vset.pattern.permute.xlu0 0
    %3120 = vperm.xlu0 %3119, %v3083
    %v3121 = vpop.permute.xlu0 %3120
    %3122 = vset.pattern.permute.xlu0 0
    %3123 = vperm.xlu0 %3122, %v3084
    %v3124 = vpop.permute.xlu0 %3123
    %v3125 = vlaneseq
    %v3126 = vshrl.u32 %v3125, 7
    %v3127 = vsub.s32 %v227, %v3126
    %v3128 = vrot.slane %v3103, %v3127
    %v3129 = vlaneseq
    %v3130 = vshrl.u32 %v3129, 7
    %v3131 = vsub.s32 %v227, %v3130
    %v3132 = vrot.slane %v3106, %v3131
    %v3133 = vlaneseq
    %v3134 = vshrl.u32 %v3133, 7
    %v3135 = vsub.s32 %v227, %v3134
    %v3136 = vrot.slane %v3109, %v3135
    %v3137 = vlaneseq
    %v3138 = vshrl.u32 %v3137, 7
    %v3139 = vsub.s32 %v227, %v3138
    %v3140 = vrot.slane %v3112, %v3139
    %v3141 = vlaneseq
    %v3142 = vshrl.u32 %v3141, 7
    %v3143 = vsub.s32 %v227, %v3142
    %v3144 = vrot.slane %v3115, %v3143
    %v3145 = vlaneseq
    %v3146 = vshrl.u32 %v3145, 7
    %v3147 = vsub.s32 %v227, %v3146
    %v3148 = vrot.slane %v3118, %v3147
    %v3149 = vlaneseq
    %v3150 = vshrl.u32 %v3149, 7
    %v3151 = vsub.s32 %v227, %v3150
    %v3152 = vrot.slane %v3121, %v3151
    %v3153 = vlaneseq
    %v3154 = vshrl.u32 %v3153, 7
    %v3155 = vsub.s32 %v227, %v3154
    %v3156 = vrot.slane %v3124, %v3155
    %v3157 = vsel %vm2683, %v3132, %v3128
    %v3158 = vsel %vm2685, %v3136, %v3157
    %v3159 = vsel %vm2687, %v3140, %v3158
    %v3160 = vsel %vm2689, %v3144, %v3159
    %v3161 = vsel %vm2691, %v3148, %v3160
    %v3162 = vsel %vm2693, %v3152, %v3161
    %v3163 = vsel %vm2695, %v3156, %v3162
    %3165 = vrot.lane.b32.xlu0 %v218, 64
    %v3166 = vpop.permute.xlu0 %3165
    %v3168 = vsel %vm2706, %v3163, 0
    %3170 = vmatprep.subr.mxu0 0.0
    %3171 = vmatpush1.msra.mxu0 %v3166
    %3172 = vmatprep.subr.mxu0 0.0
    %3173 = vmatpush1.msra.mxu0 0.0
    %3174 = vmatprep.subr.mxu0 0.0
    %3175 = vmatpush1.msra.mxu0 0.0
    %3176 = vmatprep.subr.mxu0 0.0
    %3177 = vmatpush1.msra.mxu0 0.0
    %3178 = vmatprep.subr.mxu0 0.0
    %3179 = vmatpush1.msra.mxu0 0.0
    %3180 = vmatprep.subr.mxu0 0.0
    %3181 = vmatpush1.msra.mxu0 0.0
    %3182 = vmatprep.subr.mxu0 0.0
    %3183 = vmatpush1.msra.mxu0 0.0
    %3184 = vmatprep.subr.mxu0 0.0
    %3185 = vmatpush1.msra.mxu0 0.0
    %3186 = vmatprep.subr.mxu0 0.0
    %3187 = vmatpush1.msra.mxu0 0.0
    %3188 = vmatprep.subr.mxu0 0.0
    %3189 = vmatpush1.msra.mxu0 0.0
    %3190 = vmatprep.subr.mxu0 0.0
    %3191 = vmatpush1.msra.mxu0 0.0
    %3192 = vmatprep.subr.mxu0 0.0
    %3193 = vmatpush1.msra.mxu0 0.0
    %3194 = vmatprep.subr.mxu0 0.0
    %3195 = vmatpush1.msra.mxu0 0.0
    %3196 = vmatprep.subr.mxu0 0.0
    %3197 = vmatpush1.msra.mxu0 0.0
    %3198 = vmatprep.subr.mxu0 0.0
    %3199 = vmatpush1.msra.mxu0 0.0
    %3200 = vmatprep.subr.mxu0 0.0
    %3201 = vmatpush1.msra.mxu0 0.0
    %3202 = vmatprep.subr.mxu0 0.0
    %3203 = vmatpush1.msra.mxu0 0.0
    %3204 = vmatprep.subr.mxu0 0.0
    %3205 = vmatpush1.msra.mxu0 0.0
    %3206 = vmatprep.subr.mxu0 0.0
    %3207 = vmatpush1.msra.mxu0 0.0
    %3208 = vmatprep.subr.mxu0 0.0
    %3209 = vmatpush1.msra.mxu0 0.0
    %3210 = vmatprep.subr.mxu0 0.0
    %3211 = vmatpush1.msra.mxu0 0.0
    %3212 = vmatprep.subr.mxu0 0.0
    %3213 = vmatpush1.msra.mxu0 0.0
    %3214 = vmatprep.subr.mxu0 0.0
    %3215 = vmatpush1.msra.mxu0 0.0
    %3216 = vmatprep.subr.mxu0 0.0
    %3217 = vmatpush1.msra.mxu0 0.0
    %3218 = vmatprep.subr.mxu0 0.0
    %3219 = vmatpush1.msra.mxu0 0.0
    %3220 = vmatprep.subr.mxu0 0.0
    %3221 = vmatpush1.msra.mxu0 0.0
    %3222 = vmatprep.subr.mxu0 0.0
    %3223 = vmatpush1.msra.mxu0 0.0
    %3224 = vmatprep.subr.mxu0 0.0
    %3225 = vmatpush1.msra.mxu0 0.0
    %3226 = vmatprep.subr.mxu0 0.0
    %3227 = vmatpush1.msra.mxu0 0.0
    %3228 = vmatprep.subr.mxu0 0.0
    %3229 = vmatpush1.msra.mxu0 0.0
    %3230 = vmatprep.subr.mxu0 0.0
    %3231 = vmatpush1.msra.mxu0 0.0
    %3232 = vmatprep.subr.mxu0 0.0
    %3233 = vmatpush1.msra.mxu0 0.0
    %3234 = vmatprep.mubr.f32.mxu0 0.0
    %3235 = vmatmul.mubr.f32.gmra.mrb[0].mxu0 %v3168
    %v3236 = vpop.f32.mrb[0].mxu0
    %v3237 = vadd.f32 0.0, %v3236
    %v3238 = vpop.f32.mrb[0].mxu0
    %3239 = vdwg.mxu0
    %3248 = vset.pattern.permute.xlu0 0
    %3249 = vperm.xlu0 %3248, %v3085
    %v3250 = vpop.permute.xlu0 %3249
    %3251 = vset.pattern.permute.xlu0 0
    %3252 = vperm.xlu0 %3251, %v3086
    %v3253 = vpop.permute.xlu0 %3252
    %3254 = vset.pattern.permute.xlu0 0
    %3255 = vperm.xlu0 %3254, %v3087
    %v3256 = vpop.permute.xlu0 %3255
    %3257 = vset.pattern.permute.xlu0 0
    %3258 = vperm.xlu0 %3257, %v3088
    %v3259 = vpop.permute.xlu0 %3258
    %3260 = vset.pattern.permute.xlu0 0
    %3261 = vperm.xlu0 %3260, %v3089
    %v3262 = vpop.permute.xlu0 %3261
    %3263 = vset.pattern.permute.xlu0 0
    %3264 = vperm.xlu0 %3263, %v3090
    %v3265 = vpop.permute.xlu0 %3264
    %3266 = vset.pattern.permute.xlu0 0
    %3267 = vperm.xlu0 %3266, %v3091
    %v3268 = vpop.permute.xlu0 %3267
    %3269 = vset.pattern.permute.xlu0 0
    %3270 = vperm.xlu0 %3269, %v3092
    %v3271 = vpop.permute.xlu0 %3270
    %v3272 = vlaneseq
    %v3273 = vshrl.u32 %v3272, 7
    %v3274 = vsub.s32 %v227, %v3273
    %v3275 = vrot.slane %v3250, %v3274
    %v3276 = vlaneseq
    %v3277 = vshrl.u32 %v3276, 7
    %v3278 = vsub.s32 %v227, %v3277
    %v3279 = vrot.slane %v3253, %v3278
    %v3280 = vlaneseq
    %v3281 = vshrl.u32 %v3280, 7
    %v3282 = vsub.s32 %v227, %v3281
    %v3283 = vrot.slane %v3256, %v3282
    %v3284 = vlaneseq
    %v3285 = vshrl.u32 %v3284, 7
    %v3286 = vsub.s32 %v227, %v3285
    %v3287 = vrot.slane %v3259, %v3286
    %v3288 = vlaneseq
    %v3289 = vshrl.u32 %v3288, 7
    %v3290 = vsub.s32 %v227, %v3289
    %v3291 = vrot.slane %v3262, %v3290
    %v3292 = vlaneseq
    %v3293 = vshrl.u32 %v3292, 7
    %v3294 = vsub.s32 %v227, %v3293
    %v3295 = vrot.slane %v3265, %v3294
    %v3296 = vlaneseq
    %v3297 = vshrl.u32 %v3296, 7
    %v3298 = vsub.s32 %v227, %v3297
    %v3299 = vrot.slane %v3268, %v3298
    %v3300 = vlaneseq
    %v3301 = vshrl.u32 %v3300, 7
    %v3302 = vsub.s32 %v227, %v3301
    %v3303 = vrot.slane %v3271, %v3302
    %v3304 = vsel %vm2683, %v3279, %v3275
    %v3305 = vsel %vm2685, %v3283, %v3304
    %v3306 = vsel %vm2687, %v3287, %v3305
    %v3307 = vsel %vm2689, %v3291, %v3306
    %v3308 = vsel %vm2691, %v3295, %v3307
    %v3309 = vsel %vm2693, %v3299, %v3308
    %v3310 = vsel %vm2695, %v3303, %v3309
    %3312 = vrot.lane.b32.xlu0 %v223, 64
    %v3313 = vpop.permute.xlu0 %3312
    %v3315 = vsel %vm2706, %v3310, 0
    %3317 = vmatprep.subr.mxu0 0.0
    %3318 = vmatpush1.msra.mxu0 %v3313
    %3319 = vmatprep.subr.mxu0 0.0
    %3320 = vmatpush1.msra.mxu0 0.0
    %3321 = vmatprep.subr.mxu0 0.0
    %3322 = vmatpush1.msra.mxu0 0.0
    %3323 = vmatprep.subr.mxu0 0.0
    %3324 = vmatpush1.msra.mxu0 0.0
    %3325 = vmatprep.subr.mxu0 0.0
    %3326 = vmatpush1.msra.mxu0 0.0
    %3327 = vmatprep.subr.mxu0 0.0
    %3328 = vmatpush1.msra.mxu0 0.0
    %3329 = vmatprep.subr.mxu0 0.0
    %3330 = vmatpush1.msra.mxu0 0.0
    %3331 = vmatprep.subr.mxu0 0.0
    %3332 = vmatpush1.msra.mxu0 0.0
    %3333 = vmatprep.subr.mxu0 0.0
    %3334 = vmatpush1.msra.mxu0 0.0
    %3335 = vmatprep.subr.mxu0 0.0
    %3336 = vmatpush1.msra.mxu0 0.0
    %3337 = vmatprep.subr.mxu0 0.0
    %3338 = vmatpush1.msra.mxu0 0.0
    %3339 = vmatprep.subr.mxu0 0.0
    %3340 = vmatpush1.msra.mxu0 0.0
    %3341 = vmatprep.subr.mxu0 0.0
    %3342 = vmatpush1.msra.mxu0 0.0
    %3343 = vmatprep.subr.mxu0 0.0
    %3344 = vmatpush1.msra.mxu0 0.0
    %3345 = vmatprep.subr.mxu0 0.0
    %3346 = vmatpush1.msra.mxu0 0.0
    %3347 = vmatprep.subr.mxu0 0.0
    %3348 = vmatpush1.msra.mxu0 0.0
    %3349 = vmatprep.subr.mxu0 0.0
    %3350 = vmatpush1.msra.mxu0 0.0
    %3351 = vmatprep.subr.mxu0 0.0
    %3352 = vmatpush1.msra.mxu0 0.0
    %3353 = vmatprep.subr.mxu0 0.0
    %3354 = vmatpush1.msra.mxu0 0.0
    %3355 = vmatprep.subr.mxu0 0.0
    %3356 = vmatpush1.msra.mxu0 0.0
    %3357 = vmatprep.subr.mxu0 0.0
    %3358 = vmatpush1.msra.mxu0 0.0
    %3359 = vmatprep.subr.mxu0 0.0
    %3360 = vmatpush1.msra.mxu0 0.0
    %3361 = vmatprep.subr.mxu0 0.0
    %3362 = vmatpush1.msra.mxu0 0.0
    %3363 = vmatprep.subr.mxu0 0.0
    %3364 = vmatpush1.msra.mxu0 0.0
    %3365 = vmatprep.subr.mxu0 0.0
    %3366 = vmatpush1.msra.mxu0 0.0
    %3367 = vmatprep.subr.mxu0 0.0
    %3368 = vmatpush1.msra.mxu0 0.0
    %3369 = vmatprep.subr.mxu0 0.0
    %3370 = vmatpush1.msra.mxu0 0.0
    %3371 = vmatprep.subr.mxu0 0.0
    %3372 = vmatpush1.msra.mxu0 0.0
    %3373 = vmatprep.subr.mxu0 0.0
    %3374 = vmatpush1.msra.mxu0 0.0
    %3375 = vmatprep.subr.mxu0 0.0
    %3376 = vmatpush1.msra.mxu0 0.0
    %3377 = vmatprep.subr.mxu0 0.0
    %3378 = vmatpush1.msra.mxu0 0.0
    %3379 = vmatprep.subr.mxu0 0.0
    %3380 = vmatpush1.msra.mxu0 0.0
    %3381 = vmatprep.mubr.f32.mxu0 0.0
    %3382 = vmatmul.mubr.f32.gmra.mrb[0].mxu0 %v3315
    %v3383 = vpop.f32.mrb[0].mxu0
    %v3384 = vadd.f32 0.0, %v3383
    %v3385 = vpop.f32.mrb[0].mxu0
    %3386 = vdwg.mxu0
    %v3389 = vcombine.high %v3237, %v3237
    %v3391 = vunpack.c.l.s4 1966171168
    %v3392 = vunpack.c.0.s8 %v3391
    %v3393 = vlaneseq
    %v3394 = vshrl.u32 %v3393, 7
    %v3395 = vsub.s32 %v3392, %v3394
    %v3396 = vrot.slane %v3237, %v3395
    %v3398 = vunpack.c.l.s4 1966171168
    %v3399 = vunpack.c.0.s8 %v3398
    %v3400 = vlaneseq
    %v3401 = vshrl.u32 %v3400, 7
    %v3402 = vsub.s32 %v3399, %v3401
    %v3403 = vrot.slane %v3389, %v3402
    %v3404 = vcombine.high %v3396, %v3396
    %v3405 = vcombine.high %v3403, %v3403
    %v3407 = vunpack.c.l.s4 1966171168
    %v3408 = vunpack.c.0.s8 %v3407
    %v3409 = vlaneseq
    %v3410 = vshrl.u32 %v3409, 7
    %v3411 = vsub.s32 %v3408, %v3410
    %v3412 = vrot.slane %v3396, %v3411
    %v3414 = vunpack.c.l.s4 1966171168
    %v3415 = vunpack.c.0.s8 %v3414
    %v3416 = vlaneseq
    %v3417 = vshrl.u32 %v3416, 7
    %v3418 = vsub.s32 %v3415, %v3417
    %v3419 = vrot.slane %v3403, %v3418
    %v3421 = vunpack.c.l.s4 1966171168
    %v3422 = vunpack.c.0.s8 %v3421
    %v3423 = vlaneseq
    %v3424 = vshrl.u32 %v3423, 7
    %v3425 = vsub.s32 %v3422, %v3424
    %v3426 = vrot.slane %v3404, %v3425
    %v3428 = vunpack.c.l.s4 1966171168
    %v3429 = vunpack.c.0.s8 %v3428
    %v3430 = vlaneseq
    %v3431 = vshrl.u32 %v3430, 7
    %v3432 = vsub.s32 %v3429, %v3431
    %v3433 = vrot.slane %v3405, %v3432
    %v3434 = vcombine.high %v3412, %v3412
    %v3435 = vcombine.high %v3419, %v3419
    %v3436 = vcombine.high %v3426, %v3426
    %v3437 = vcombine.high %v3433, %v3433
    %v3438 = vcombine.high %v3384, %v3384
    %v3440 = vunpack.c.l.s4 1966171168
    %v3441 = vunpack.c.0.s8 %v3440
    %v3442 = vlaneseq
    %v3443 = vshrl.u32 %v3442, 7
    %v3444 = vsub.s32 %v3441, %v3443
    %v3445 = vrot.slane %v3384, %v3444
    %v3447 = vunpack.c.l.s4 1966171168
    %v3448 = vunpack.c.0.s8 %v3447
    %v3449 = vlaneseq
    %v3450 = vshrl.u32 %v3449, 7
    %v3451 = vsub.s32 %v3448, %v3450
    %v3452 = vrot.slane %v3438, %v3451
    %v3453 = vcombine.high %v3445, %v3445
    %v3454 = vcombine.high %v3452, %v3452
    %v3456 = vunpack.c.l.s4 1966171168
    %v3457 = vunpack.c.0.s8 %v3456
    %v3458 = vlaneseq
    %v3459 = vshrl.u32 %v3458, 7
    %v3460 = vsub.s32 %v3457, %v3459
    %v3461 = vrot.slane %v3445, %v3460
    %v3463 = vunpack.c.l.s4 1966171168
    %v3464 = vunpack.c.0.s8 %v3463
    %v3465 = vlaneseq
    %v3466 = vshrl.u32 %v3465, 7
    %v3467 = vsub.s32 %v3464, %v3466
    %v3468 = vrot.slane %v3452, %v3467
    %v3470 = vunpack.c.l.s4 1966171168
    %v3471 = vunpack.c.0.s8 %v3470
    %v3472 = vlaneseq
    %v3473 = vshrl.u32 %v3472, 7
    %v3474 = vsub.s32 %v3471, %v3473
    %v3475 = vrot.slane %v3453, %v3474
    %v3477 = vunpack.c.l.s4 1966171168
    %v3478 = vunpack.c.0.s8 %v3477
    %v3479 = vlaneseq
    %v3480 = vshrl.u32 %v3479, 7
    %v3481 = vsub.s32 %v3478, %v3480
    %v3482 = vrot.slane %v3454, %v3481
    %v3483 = vcombine.high %v3461, %v3461
    %v3484 = vcombine.high %v3468, %v3468
    %v3485 = vcombine.high %v3475, %v3475
    %v3486 = vcombine.high %v3482, %v3482
    %v3487 = vlaneseq
    %v3488 = vshrl.u32 %v3487, 7
    %v3489 = vsub.s32 0, %v3488
    %v3490 = vrot.slane %v3412, %v3489
    %v3491 = vlaneseq
    %v3492 = vshrl.u32 %v3491, 7
    %v3493 = vsub.s32 0, %v3492
    %v3494 = vrot.slane %v3426, %v3493
    %v3495 = vlaneseq
    %v3496 = vshrl.u32 %v3495, 7
    %v3497 = vsub.s32 0, %v3496
    %v3498 = vrot.slane %v3434, %v3497
    %v3499 = vlaneseq
    %v3500 = vshrl.u32 %v3499, 7
    %v3501 = vsub.s32 0, %v3500
    %v3502 = vrot.slane %v3436, %v3501
    %v3503 = vlaneseq
    %v3504 = vshrl.u32 %v3503, 7
    %v3505 = vsub.s32 0, %v3504
    %v3506 = vrot.slane %v3419, %v3505
    %v3507 = vlaneseq
    %v3508 = vshrl.u32 %v3507, 7
    %v3509 = vsub.s32 0, %v3508
    %v3510 = vrot.slane %v3433, %v3509
    %v3511 = vlaneseq
    %v3512 = vshrl.u32 %v3511, 7
    %v3513 = vsub.s32 0, %v3512
    %v3514 = vrot.slane %v3435, %v3513
    %v3515 = vlaneseq
    %v3516 = vshrl.u32 %v3515, 7
    %v3517 = vsub.s32 0, %v3516
    %v3518 = vrot.slane %v3437, %v3517
    %v3519 = vlaneseq
    %v3520 = vshrl.u32 %v3519, 7
    %v3521 = vsub.s32 0, %v3520
    %v3522 = vrot.slane %v3461, %v3521
    %v3523 = vlaneseq
    %v3524 = vshrl.u32 %v3523, 7
    %v3525 = vsub.s32 0, %v3524
    %v3526 = vrot.slane %v3475, %v3525
    %v3527 = vlaneseq
    %v3528 = vshrl.u32 %v3527, 7
    %v3529 = vsub.s32 0, %v3528
    %v3530 = vrot.slane %v3483, %v3529
    %v3531 = vlaneseq
    %v3532 = vshrl.u32 %v3531, 7
    %v3533 = vsub.s32 0, %v3532
    %v3534 = vrot.slane %v3485, %v3533
    %v3535 = vlaneseq
    %v3536 = vshrl.u32 %v3535, 7
    %v3537 = vsub.s32 0, %v3536
    %v3538 = vrot.slane %v3468, %v3537
    %v3539 = vlaneseq
    %v3540 = vshrl.u32 %v3539, 7
    %v3541 = vsub.s32 0, %v3540
    %v3542 = vrot.slane %v3482, %v3541
    %v3543 = vlaneseq
    %v3544 = vshrl.u32 %v3543, 7
    %v3545 = vsub.s32 0, %v3544
    %v3546 = vrot.slane %v3484, %v3545
    %v3547 = vlaneseq
    %v3548 = vshrl.u32 %v3547, 7
    %v3549 = vsub.s32 0, %v3548
    %v3550 = vrot.slane %v3486, %v3549
    %3551 = vrot.lane.b32.xlu0 %v3490, 32
    %v3552 = vpop.permute.xlu0 %3551
    %3553 = vrot.lane.b32.xlu0 %v3494, 32
    %v3554 = vpop.permute.xlu0 %3553
    %3555 = vrot.lane.b32.xlu0 %v3498, 32
    %v3556 = vpop.permute.xlu0 %3555
    %3557 = vrot.lane.b32.xlu0 %v3502, 32
    %v3558 = vpop.permute.xlu0 %3557
    %3559 = vrot.lane.b32.xlu0 %v3506, 32
    %v3560 = vpop.permute.xlu0 %3559
    %3561 = vrot.lane.b32.xlu0 %v3510, 32
    %v3562 = vpop.permute.xlu0 %3561
    %3563 = vrot.lane.b32.xlu0 %v3514, 32
    %v3564 = vpop.permute.xlu0 %3563
    %3565 = vrot.lane.b32.xlu0 %v3518, 32
    %v3566 = vpop.permute.xlu0 %3565
    %3567 = vrot.lane.b32.xlu0 %v3522, 32
    %v3568 = vpop.permute.xlu0 %3567
    %3569 = vrot.lane.b32.xlu0 %v3526, 32
    %v3570 = vpop.permute.xlu0 %3569
    %3571 = vrot.lane.b32.xlu0 %v3530, 32
    %v3572 = vpop.permute.xlu0 %3571
    %3573 = vrot.lane.b32.xlu0 %v3534, 32
    %v3574 = vpop.permute.xlu0 %3573
    %3575 = vrot.lane.b32.xlu0 %v3538, 32
    %v3576 = vpop.permute.xlu0 %3575
    %3577 = vrot.lane.b32.xlu0 %v3542, 32
    %v3578 = vpop.permute.xlu0 %3577
    %3579 = vrot.lane.b32.xlu0 %v3546, 32
    %v3580 = vpop.permute.xlu0 %3579
    %3581 = vrot.lane.b32.xlu0 %v3550, 32
    %v3582 = vpop.permute.xlu0 %3581
    %v3599 = vadd.f32 %v218, %v3552
    %v3600 = vadd.f32 %v218, %v3554
    %v3601 = vadd.f32 %v218, %v3556
    %v3602 = vadd.f32 %v218, %v3558
    %v3603 = vadd.f32 %v218, %v3560
    %v3604 = vadd.f32 %v218, %v3562
    %v3605 = vadd.f32 %v218, %v3564
    %v3606 = vadd.f32 %v218, %v3566
    %v3607 = vadd.f32 %v223, %v3568
    %v3608 = vadd.f32 %v223, %v3570
    %v3609 = vadd.f32 %v223, %v3572
    %v3610 = vadd.f32 %v223, %v3574
    %v3611 = vadd.f32 %v223, %v3576
    %v3612 = vadd.f32 %v223, %v3578
    %v3613 = vadd.f32 %v223, %v3580
    %v3614 = vadd.f32 %v223, %v3582
    %v3615 = vtanh.pop %v3599
    %v3616 = vtanh.pop %v3600
    %v3617 = vtanh.pop %v3601
    %v3618 = vtanh.pop %v3602
    %v3619 = vtanh.pop %v3603
    %v3620 = vtanh.pop %v3604
    %v3621 = vtanh.pop %v3605
    %v3622 = vtanh.pop %v3606
    %v3623 = vtanh.pop %v3607
    %v3624 = vtanh.pop %v3608
    %v3625 = vtanh.pop %v3609
    %v3626 = vtanh.pop %v3610
    %v3627 = vtanh.pop %v3611
    %v3628 = vtanh.pop %v3612
    %v3629 = vtanh.pop %v3613
    %v3630 = vtanh.pop %v3614
    %v3631 = vmul.f32 %v3615, %v2391
    %v3632 = vmul.f32 %v3616, %v2391
    %v3633 = vmul.f32 %v3617, %v2391
    %v3634 = vmul.f32 %v3618, %v2391
    %v3635 = vmul.f32 %v3619, %v2391
    %v3636 = vmul.f32 %v3620, %v2391
    %v3637 = vmul.f32 %v3621, %v2391
    %v3638 = vmul.f32 %v3622, %v2391
    %v3639 = vmul.f32 %v3623, %v2391
    %v3640 = vmul.f32 %v3624, %v2391
    %v3641 = vmul.f32 %v3625, %v2391
    %v3642 = vmul.f32 %v3626, %v2391
    %v3643 = vmul.f32 %v3627, %v2391
    %v3644 = vmul.f32 %v3628, %v2391
    %v3645 = vmul.f32 %v3629, %v2391
    %v3646 = vmul.f32 %v3630, %v2391
    %3663 = vrot.lane.b32.xlu0 %v3631, 96
    %v3664 = vpop.permute.xlu0 %3663
    %3665 = vrot.lane.b32.xlu0 %v3632, 96
    %v3666 = vpop.permute.xlu0 %3665
    %3667 = vrot.lane.b32.xlu0 %v3633, 96
    %v3668 = vpop.permute.xlu0 %3667
    %3669 = vrot.lane.b32.xlu0 %v3634, 96
    %v3670 = vpop.permute.xlu0 %3669
    %3671 = vrot.lane.b32.xlu0 %v3635, 96
    %v3672 = vpop.permute.xlu0 %3671
    %3673 = vrot.lane.b32.xlu0 %v3636, 96
    %v3674 = vpop.permute.xlu0 %3673
    %3675 = vrot.lane.b32.xlu0 %v3637, 96
    %v3676 = vpop.permute.xlu0 %3675
    %3677 = vrot.lane.b32.xlu0 %v3638, 96
    %v3678 = vpop.permute.xlu0 %3677
    %3679 = vrot.lane.b32.xlu0 %v3639, 96
    %v3680 = vpop.permute.xlu0 %3679
    %3681 = vrot.lane.b32.xlu0 %v3640, 96
    %v3682 = vpop.permute.xlu0 %3681
    %3683 = vrot.lane.b32.xlu0 %v3641, 96
    %v3684 = vpop.permute.xlu0 %3683
    %3685 = vrot.lane.b32.xlu0 %v3642, 96
    %v3686 = vpop.permute.xlu0 %3685
    %3687 = vrot.lane.b32.xlu0 %v3643, 96
    %v3688 = vpop.permute.xlu0 %3687
    %3689 = vrot.lane.b32.xlu0 %v3644, 96
    %v3690 = vpop.permute.xlu0 %3689
    %3691 = vrot.lane.b32.xlu0 %v3645, 96
    %v3692 = vpop.permute.xlu0 %3691
    %3693 = vrot.lane.b32.xlu0 %v3646, 96
    %v3694 = vpop.permute.xlu0 %3693
    %v3711 = vsel %vm462, %v3664, 0.0
    %3712 = vadd.xlane.f32.xlu0 %v3711
    %v3713 = vpop.xlane.xlu0 %3712
    %v3714 = vsel %vm462, %v3666, 0.0
    %3715 = vadd.xlane.f32.xlu0 %v3714
    %v3716 = vpop.xlane.xlu0 %3715
    %v3717 = vsel %vm462, %v3668, 0.0
    %3718 = vadd.xlane.f32.xlu0 %v3717
    %v3719 = vpop.xlane.xlu0 %3718
    %v3720 = vsel %vm462, %v3670, 0.0
    %3721 = vadd.xlane.f32.xlu0 %v3720
    %v3722 = vpop.xlane.xlu0 %3721
    %v3723 = vsel %vm462, %v3672, 0.0
    %3724 = vadd.xlane.f32.xlu0 %v3723
    %v3725 = vpop.xlane.xlu0 %3724
    %v3726 = vsel %vm462, %v3674, 0.0
    %3727 = vadd.xlane.f32.xlu0 %v3726
    %v3728 = vpop.xlane.xlu0 %3727
    %v3729 = vsel %vm462, %v3676, 0.0
    %3730 = vadd.xlane.f32.xlu0 %v3729
    %v3731 = vpop.xlane.xlu0 %3730
    %v3732 = vsel %vm462, %v3678, 0.0
    %3733 = vadd.xlane.f32.xlu0 %v3732
    %v3734 = vpop.xlane.xlu0 %3733
    %v3735 = vsel %vm462, %v3680, 0.0
    %3736 = vadd.xlane.f32.xlu0 %v3735
    %v3737 = vpop.xlane.xlu0 %3736
    %v3738 = vsel %vm462, %v3682, 0.0
    %3739 = vadd.xlane.f32.xlu0 %v3738
    %v3740 = vpop.xlane.xlu0 %3739
    %v3741 = vsel %vm462, %v3684, 0.0
    %3742 = vadd.xlane.f32.xlu0 %v3741
    %v3743 = vpop.xlane.xlu0 %3742
    %v3744 = vsel %vm462, %v3686, 0.0
    %3745 = vadd.xlane.f32.xlu0 %v3744
    %v3746 = vpop.xlane.xlu0 %3745
    %v3747 = vsel %vm462, %v3688, 0.0
    %3748 = vadd.xlane.f32.xlu0 %v3747
    %v3749 = vpop.xlane.xlu0 %3748
    %v3750 = vsel %vm462, %v3690, 0.0
    %3751 = vadd.xlane.f32.xlu0 %v3750
    %v3752 = vpop.xlane.xlu0 %3751
    %v3753 = vsel %vm462, %v3692, 0.0
    %3754 = vadd.xlane.f32.xlu0 %v3753
    %v3755 = vpop.xlane.xlu0 %3754
    %v3756 = vsel %vm462, %v3694, 0.0
    %3757 = vadd.xlane.f32.xlu0 %v3756
    %v3758 = vpop.xlane.xlu0 %3757
    %v3759 = vadd.f32 %v3713, %v2533
    %v3760 = vadd.f32 %v3716, %v2533
    %v3761 = vadd.f32 %v3719, %v2533
    %v3762 = vadd.f32 %v3722, %v2533
    %v3763 = vadd.f32 %v3725, %v2533
    %v3764 = vadd.f32 %v3728, %v2533
    %v3765 = vadd.f32 %v3731, %v2533
    %v3766 = vadd.f32 %v3734, %v2533
    %v3767 = vadd.f32 %v3737, %v2536
    %v3768 = vadd.f32 %v3740, %v2536
    %v3769 = vadd.f32 %v3743, %v2536
    %v3770 = vadd.f32 %v3746, %v2536
    %v3771 = vadd.f32 %v3749, %v2536
    %v3772 = vadd.f32 %v3752, %v2536
    %v3773 = vadd.f32 %v3755, %v2536
    %v3774 = vadd.f32 %v3758, %v2536
    %3791 = vset.pattern.permute.xlu0 0
    %3792 = vperm.xlu0 %3791, %v3759
    %v3793 = vpop.permute.xlu0 %3792
    %3794 = vset.pattern.permute.xlu0 0
    %3795 = vperm.xlu0 %3794, %v3760
    %v3796 = vpop.permute.xlu0 %3795
    %3797 = vset.pattern.permute.xlu0 0
    %3798 = vperm.xlu0 %3797, %v3761
    %v3799 = vpop.permute.xlu0 %3798
    %3800 = vset.pattern.permute.xlu0 0
    %3801 = vperm.xlu0 %3800, %v3762
    %v3802 = vpop.permute.xlu0 %3801
    %3803 = vset.pattern.permute.xlu0 0
    %3804 = vperm.xlu0 %3803, %v3763
    %v3805 = vpop.permute.xlu0 %3804
    %3806 = vset.pattern.permute.xlu0 0
    %3807 = vperm.xlu0 %3806, %v3764
    %v3808 = vpop.permute.xlu0 %3807
    %3809 = vset.pattern.permute.xlu0 0
    %3810 = vperm.xlu0 %3809, %v3765
    %v3811 = vpop.permute.xlu0 %3810
    %3812 = vset.pattern.permute.xlu0 0
    %3813 = vperm.xlu0 %3812, %v3766
    %v3814 = vpop.permute.xlu0 %3813
    %3815 = vset.pattern.permute.xlu0 0
    %3816 = vperm.xlu0 %3815, %v3767
    %v3817 = vpop.permute.xlu0 %3816
    %3818 = vset.pattern.permute.xlu0 0
    %3819 = vperm.xlu0 %3818, %v3768
    %v3820 = vpop.permute.xlu0 %3819
    %3821 = vset.pattern.permute.xlu0 0
    %3822 = vperm.xlu0 %3821, %v3769
    %v3823 = vpop.permute.xlu0 %3822
    %3824 = vset.pattern.permute.xlu0 0
    %3825 = vperm.xlu0 %3824, %v3770
    %v3826 = vpop.permute.xlu0 %3825
    %3827 = vset.pattern.permute.xlu0 0
    %3828 = vperm.xlu0 %3827, %v3771
    %v3829 = vpop.permute.xlu0 %3828
    %3830 = vset.pattern.permute.xlu0 0
    %3831 = vperm.xlu0 %3830, %v3772
    %v3832 = vpop.permute.xlu0 %3831
    %3833 = vset.pattern.permute.xlu0 0
    %3834 = vperm.xlu0 %3833, %v3773
    %v3835 = vpop.permute.xlu0 %3834
    %3836 = vset.pattern.permute.xlu0 0
    %3837 = vperm.xlu0 %3836, %v3774
    %v3838 = vpop.permute.xlu0 %3837
    %v3839 = vlaneseq
    %v3840 = vshrl.u32 %v3839, 7
    %v3841 = vsub.s32 %v227, %v3840
    %v3842 = vrot.slane %v3793, %v3841
    %v3843 = vlaneseq
    %v3844 = vshrl.u32 %v3843, 7
    %v3845 = vsub.s32 %v227, %v3844
    %v3846 = vrot.slane %v3796, %v3845
    %v3847 = vlaneseq
    %v3848 = vshrl.u32 %v3847, 7
    %v3849 = vsub.s32 %v227, %v3848
    %v3850 = vrot.slane %v3799, %v3849
    %v3851 = vlaneseq
    %v3852 = vshrl.u32 %v3851, 7
    %v3853 = vsub.s32 %v227, %v3852
    %v3854 = vrot.slane %v3802, %v3853
    %v3855 = vlaneseq
    %v3856 = vshrl.u32 %v3855, 7
    %v3857 = vsub.s32 %v227, %v3856
    %v3858 = vrot.slane %v3805, %v3857
    %v3859 = vlaneseq
    %v3860 = vshrl.u32 %v3859, 7
    %v3861 = vsub.s32 %v227, %v3860
    %v3862 = vrot.slane %v3808, %v3861
    %v3863 = vlaneseq
    %v3864 = vshrl.u32 %v3863, 7
    %v3865 = vsub.s32 %v227, %v3864
    %v3866 = vrot.slane %v3811, %v3865
    %v3867 = vlaneseq
    %v3868 = vshrl.u32 %v3867, 7
    %v3869 = vsub.s32 %v227, %v3868
    %v3870 = vrot.slane %v3814, %v3869
    %v3871 = vlaneseq
    %v3872 = vshrl.u32 %v3871, 7
    %v3873 = vsub.s32 %v227, %v3872
    %v3874 = vrot.slane %v3817, %v3873
    %v3875 = vlaneseq
    %v3876 = vshrl.u32 %v3875, 7
    %v3877 = vsub.s32 %v227, %v3876
    %v3878 = vrot.slane %v3820, %v3877
    %v3879 = vlaneseq
    %v3880 = vshrl.u32 %v3879, 7
    %v3881 = vsub.s32 %v227, %v3880
    %v3882 = vrot.slane %v3823, %v3881
    %v3883 = vlaneseq
    %v3884 = vshrl.u32 %v3883, 7
    %v3885 = vsub.s32 %v227, %v3884
    %v3886 = vrot.slane %v3826, %v3885
    %v3887 = vlaneseq
    %v3888 = vshrl.u32 %v3887, 7
    %v3889 = vsub.s32 %v227, %v3888
    %v3890 = vrot.slane %v3829, %v3889
    %v3891 = vlaneseq
    %v3892 = vshrl.u32 %v3891, 7
    %v3893 = vsub.s32 %v227, %v3892
    %v3894 = vrot.slane %v3832, %v3893
    %v3895 = vlaneseq
    %v3896 = vshrl.u32 %v3895, 7
    %v3897 = vsub.s32 %v227, %v3896
    %v3898 = vrot.slane %v3835, %v3897
    %v3899 = vlaneseq
    %v3900 = vshrl.u32 %v3899, 7
    %v3901 = vsub.s32 %v227, %v3900
    %v3902 = vrot.slane %v3838, %v3901
    %v3903 = vsel %vm2683, %v3846, %v3842
    %v3904 = vsel %vm2685, %v3850, %v3903
    %v3905 = vsel %vm2687, %v3854, %v3904
    %v3906 = vsel %vm2689, %v3858, %v3905
    %v3907 = vsel %vm2691, %v3862, %v3906
    %v3908 = vsel %vm2693, %v3866, %v3907
    %v3909 = vsel %vm2695, %v3870, %v3908
    %v3910 = vsel %vm2683, %v3878, %v3874
    %v3911 = vsel %vm2685, %v3882, %v3910
    %v3912 = vsel %vm2687, %v3886, %v3911
    %v3913 = vsel %vm2689, %v3890, %v3912
    %v3914 = vsel %vm2691, %v3894, %v3913
    %v3915 = vsel %vm2693, %v3898, %v3914
    %v3916 = vsel %vm2695, %v3902, %v3915
    %v3919 = vsel %vm2706, %v3909, -inf
    %3920 = vmax.xlane.f32.xlu0 %v3919
    %v3921 = vpop.xlane.xlu0 %3920
    %v3922 = vsel %vm2706, %v3916, -inf
    %3923 = vmax.xlane.f32.xlu0 %v3922
    %v3924 = vpop.xlane.xlu0 %3923
    %v3927 = vlaneseq
    %v3928 = vshrl.u32 %v3927, 7
    %v3929 = vsub.s32 0, %v3928
    %v3930 = vrot.slane %v3921, %v3929
    %v3931 = vlaneseq
    %v3932 = vshrl.u32 %v3931, 7
    %v3933 = vsub.s32 1, %v3932
    %v3934 = vrot.slane %v3921, %v3933
    %v3935 = vlaneseq
    %v3936 = vshrl.u32 %v3935, 7
    %v3937 = vsub.s32 2, %v3936
    %v3938 = vrot.slane %v3921, %v3937
    %v3939 = vlaneseq
    %v3940 = vshrl.u32 %v3939, 7
    %v3941 = vsub.s32 3, %v3940
    %v3942 = vrot.slane %v3921, %v3941
    %v3943 = vlaneseq
    %v3944 = vshrl.u32 %v3943, 7
    %v3945 = vsub.s32 4, %v3944
    %v3946 = vrot.slane %v3921, %v3945
    %v3947 = vlaneseq
    %v3948 = vshrl.u32 %v3947, 7
    %v3949 = vsub.s32 5, %v3948
    %v3950 = vrot.slane %v3921, %v3949
    %v3951 = vlaneseq
    %v3952 = vshrl.u32 %v3951, 7
    %v3953 = vsub.s32 6, %v3952
    %v3954 = vrot.slane %v3921, %v3953
    %v3955 = vlaneseq
    %v3956 = vshrl.u32 %v3955, 7
    %v3957 = vsub.s32 7, %v3956
    %v3958 = vrot.slane %v3921, %v3957
    %v3959 = vlaneseq
    %v3960 = vshrl.u32 %v3959, 7
    %v3961 = vsub.s32 0, %v3960
    %v3962 = vrot.slane %v3924, %v3961
    %v3963 = vlaneseq
    %v3964 = vshrl.u32 %v3963, 7
    %v3965 = vsub.s32 1, %v3964
    %v3966 = vrot.slane %v3924, %v3965
    %v3967 = vlaneseq
    %v3968 = vshrl.u32 %v3967, 7
    %v3969 = vsub.s32 2, %v3968
    %v3970 = vrot.slane %v3924, %v3969
    %v3971 = vlaneseq
    %v3972 = vshrl.u32 %v3971, 7
    %v3973 = vsub.s32 3, %v3972
    %v3974 = vrot.slane %v3924, %v3973
    %v3975 = vlaneseq
    %v3976 = vshrl.u32 %v3975, 7
    %v3977 = vsub.s32 4, %v3976
    %v3978 = vrot.slane %v3924, %v3977
    %v3979 = vlaneseq
    %v3980 = vshrl.u32 %v3979, 7
    %v3981 = vsub.s32 5, %v3980
    %v3982 = vrot.slane %v3924, %v3981
    %v3983 = vlaneseq
    %v3984 = vshrl.u32 %v3983, 7
    %v3985 = vsub.s32 6, %v3984
    %v3986 = vrot.slane %v3924, %v3985
    %v3987 = vlaneseq
    %v3988 = vshrl.u32 %v3987, 7
    %v3989 = vsub.s32 7, %v3988
    %v3990 = vrot.slane %v3924, %v3989
    %v4007 = vsub.f32 %v3759, %v3930
    %v4008 = vsub.f32 %v3760, %v3934
    %v4009 = vsub.f32 %v3761, %v3938
    %v4010 = vsub.f32 %v3762, %v3942
    %v4011 = vsub.f32 %v3763, %v3946
    %v4012 = vsub.f32 %v3764, %v3950
    %v4013 = vsub.f32 %v3765, %v3954
    %v4014 = vsub.f32 %v3766, %v3958
    %v4015 = vsub.f32 %v3767, %v3962
    %v4016 = vsub.f32 %v3768, %v3966
    %v4017 = vsub.f32 %v3769, %v3970
    %v4018 = vsub.f32 %v3770, %v3974
    %v4019 = vsub.f32 %v3771, %v3978
    %v4020 = vsub.f32 %v3772, %v3982
    %v4021 = vsub.f32 %v3773, %v3986
    %v4022 = vsub.f32 %v3774, %v3990
    %v4023 = vmul.f32 %v4007, 1.442695
    %v4024 = vpow.pop %v4023
    %v4025 = vmul.f32 %v4008, 1.442695
    %v4026 = vpow.pop %v4025
    %v4027 = vmul.f32 %v4009, 1.442695
    %v4028 = vpow.pop %v4027
    %v4029 = vmul.f32 %v4010, 1.442695
    %v4030 = vpow.pop %v4029
    %v4031 = vmul.f32 %v4011, 1.442695
    %v4032 = vpow.pop %v4031
    %v4033 = vmul.f32 %v4012, 1.442695
    %v4034 = vpow.pop %v4033
    %v4035 = vmul.f32 %v4013, 1.442695
    %v4036 = vpow.pop %v4035
    %v4037 = vmul.f32 %v4014, 1.442695
    %v4038 = vpow.pop %v4037
    %v4039 = vmul.f32 %v4015, 1.442695
    %v4040 = vpow.pop %v4039
    %v4041 = vmul.f32 %v4016, 1.442695
    %v4042 = vpow.pop %v4041
    %v4043 = vmul.f32 %v4017, 1.442695
    %v4044 = vpow.pop %v4043
    %v4045 = vmul.f32 %v4018, 1.442695
    %v4046 = vpow.pop %v4045
    %v4047 = vmul.f32 %v4019, 1.442695
    %v4048 = vpow.pop %v4047
    %v4049 = vmul.f32 %v4020, 1.442695
    %v4050 = vpow.pop %v4049
    %v4051 = vmul.f32 %v4021, 1.442695
    %v4052 = vpow.pop %v4051
    %v4053 = vmul.f32 %v4022, 1.442695
    %v4054 = vpow.pop %v4053
    %4071 = vset.pattern.permute.xlu0 0
    %4072 = vperm.xlu0 %4071, %v4024
    %v4073 = vpop.permute.xlu0 %4072
    %4074 = vset.pattern.permute.xlu0 0
    %4075 = vperm.xlu0 %4074, %v4026
    %v4076 = vpop.permute.xlu0 %4075
    %4077 = vset.pattern.permute.xlu0 0
    %4078 = vperm.xlu0 %4077, %v4028
    %v4079 = vpop.permute.xlu0 %4078
    %4080 = vset.pattern.permute.xlu0 0
    %4081 = vperm.xlu0 %4080, %v4030
    %v4082 = vpop.permute.xlu0 %4081
    %4083 = vset.pattern.permute.xlu0 0
    %4084 = vperm.xlu0 %4083, %v4032
    %v4085 = vpop.permute.xlu0 %4084
    %4086 = vset.pattern.permute.xlu0 0
    %4087 = vperm.xlu0 %4086, %v4034
    %v4088 = vpop.permute.xlu0 %4087
    %4089 = vset.pattern.permute.xlu0 0
    %4090 = vperm.xlu0 %4089, %v4036
    %v4091 = vpop.permute.xlu0 %4090
    %4092 = vset.pattern.permute.xlu0 0
    %4093 = vperm.xlu0 %4092, %v4038
    %v4094 = vpop.permute.xlu0 %4093
    %4095 = vset.pattern.permute.xlu0 0
    %4096 = vperm.xlu0 %4095, %v4040
    %v4097 = vpop.permute.xlu0 %4096
    %4098 = vset.pattern.permute.xlu0 0
    %4099 = vperm.xlu0 %4098, %v4042
    %v4100 = vpop.permute.xlu0 %4099
    %4101 = vset.pattern.permute.xlu0 0
    %4102 = vperm.xlu0 %4101, %v4044
    %v4103 = vpop.permute.xlu0 %4102
    %4104 = vset.pattern.permute.xlu0 0
    %4105 = vperm.xlu0 %4104, %v4046
    %v4106 = vpop.permute.xlu0 %4105
    %4107 = vset.pattern.permute.xlu0 0
    %4108 = vperm.xlu0 %4107, %v4048
    %v4109 = vpop.permute.xlu0 %4108
    %4110 = vset.pattern.permute.xlu0 0
    %4111 = vperm.xlu0 %4110, %v4050
    %v4112 = vpop.permute.xlu0 %4111
    %4113 = vset.pattern.permute.xlu0 0
    %4114 = vperm.xlu0 %4113, %v4052
    %v4115 = vpop.permute.xlu0 %4114
    %4116 = vset.pattern.permute.xlu0 0
    %4117 = vperm.xlu0 %4116, %v4054
    %v4118 = vpop.permute.xlu0 %4117
    %v4119 = vlaneseq
    %v4120 = vshrl.u32 %v4119, 7
    %v4121 = vsub.s32 %v227, %v4120
    %v4122 = vrot.slane %v4073, %v4121
    %v4123 = vlaneseq
    %v4124 = vshrl.u32 %v4123, 7
    %v4125 = vsub.s32 %v227, %v4124
    %v4126 = vrot.slane %v4076, %v4125
    %v4127 = vlaneseq
    %v4128 = vshrl.u32 %v4127, 7
    %v4129 = vsub.s32 %v227, %v4128
    %v4130 = vrot.slane %v4079, %v4129
    %v4131 = vlaneseq
    %v4132 = vshrl.u32 %v4131, 7
    %v4133 = vsub.s32 %v227, %v4132
    %v4134 = vrot.slane %v4082, %v4133
    %v4135 = vlaneseq
    %v4136 = vshrl.u32 %v4135, 7
    %v4137 = vsub.s32 %v227, %v4136
    %v4138 = vrot.slane %v4085, %v4137
    %v4139 = vlaneseq
    %v4140 = vshrl.u32 %v4139, 7
    %v4141 = vsub.s32 %v227, %v4140
    %v4142 = vrot.slane %v4088, %v4141
    %v4143 = vlaneseq
    %v4144 = vshrl.u32 %v4143, 7
    %v4145 = vsub.s32 %v227, %v4144
    %v4146 = vrot.slane %v4091, %v4145
    %v4147 = vlaneseq
    %v4148 = vshrl.u32 %v4147, 7
    %v4149 = vsub.s32 %v227, %v4148
    %v4150 = vrot.slane %v4094, %v4149
    %v4151 = vlaneseq
    %v4152 = vshrl.u32 %v4151, 7
    %v4153 = vsub.s32 %v227, %v4152
    %v4154 = vrot.slane %v4097, %v4153
    %v4155 = vlaneseq
    %v4156 = vshrl.u32 %v4155, 7
    %v4157 = vsub.s32 %v227, %v4156
    %v4158 = vrot.slane %v4100, %v4157
    %v4159 = vlaneseq
    %v4160 = vshrl.u32 %v4159, 7
    %v4161 = vsub.s32 %v227, %v4160
    %v4162 = vrot.slane %v4103, %v4161
    %v4163 = vlaneseq
    %v4164 = vshrl.u32 %v4163, 7
    %v4165 = vsub.s32 %v227, %v4164
    %v4166 = vrot.slane %v4106, %v4165
    %v4167 = vlaneseq
    %v4168 = vshrl.u32 %v4167, 7
    %v4169 = vsub.s32 %v227, %v4168
    %v4170 = vrot.slane %v4109, %v4169
    %v4171 = vlaneseq
    %v4172 = vshrl.u32 %v4171, 7
    %v4173 = vsub.s32 %v227, %v4172
    %v4174 = vrot.slane %v4112, %v4173
    %v4175 = vlaneseq
    %v4176 = vshrl.u32 %v4175, 7
    %v4177 = vsub.s32 %v227, %v4176
    %v4178 = vrot.slane %v4115, %v4177
    %v4179 = vlaneseq
    %v4180 = vshrl.u32 %v4179, 7
    %v4181 = vsub.s32 %v227, %v4180
    %v4182 = vrot.slane %v4118, %v4181
    %v4183 = vsel %vm2683, %v4126, %v4122
    %v4184 = vsel %vm2685, %v4130, %v4183
    %v4185 = vsel %vm2687, %v4134, %v4184
    %v4186 = vsel %vm2689, %v4138, %v4185
    %v4187 = vsel %vm2691, %v4142, %v4186
    %v4188 = vsel %vm2693, %v4146, %v4187
    %v4189 = vsel %vm2695, %v4150, %v4188
    %v4190 = vsel %vm2683, %v4158, %v4154
    %v4191 = vsel %vm2685, %v4162, %v4190
    %v4192 = vsel %vm2687, %v4166, %v4191
    %v4193 = vsel %vm2689, %v4170, %v4192
    %v4194 = vsel %vm2691, %v4174, %v4193
    %v4195 = vsel %vm2693, %v4178, %v4194
    %v4196 = vsel %vm2695, %v4182, %v4195
    %v4199 = vsel %vm2706, %v4189, 0.0
    %4200 = vadd.xlane.f32.xlu0 %v4199
    %v4201 = vpop.xlane.xlu0 %4200
    %v4202 = vsel %vm2706, %v4196, 0.0
    %4203 = vadd.xlane.f32.xlu0 %v4202
    %v4204 = vpop.xlane.xlu0 %4203
    %v4205 = vrcp.pop %v4201
    %v4206 = vrcp.pop %v4204
    %v4209 = vlaneseq
    %v4210 = vshrl.u32 %v4209, 7
    %v4211 = vsub.s32 0, %v4210
    %v4212 = vrot.slane %v4205, %v4211
    %v4213 = vlaneseq
    %v4214 = vshrl.u32 %v4213, 7
    %v4215 = vsub.s32 1, %v4214
    %v4216 = vrot.slane %v4205, %v4215
    %v4217 = vlaneseq
    %v4218 = vshrl.u32 %v4217, 7
    %v4219 = vsub.s32 2, %v4218
    %v4220 = vrot.slane %v4205, %v4219
    %v4221 = vlaneseq
    %v4222 = vshrl.u32 %v4221, 7
    %v4223 = vsub.s32 3, %v4222
    %v4224 = vrot.slane %v4205, %v4223
    %v4225 = vlaneseq
    %v4226 = vshrl.u32 %v4225, 7
    %v4227 = vsub.s32 4, %v4226
    %v4228 = vrot.slane %v4205, %v4227
    %v4229 = vlaneseq
    %v4230 = vshrl.u32 %v4229, 7
    %v4231 = vsub.s32 5, %v4230
    %v4232 = vrot.slane %v4205, %v4231
    %v4233 = vlaneseq
    %v4234 = vshrl.u32 %v4233, 7
    %v4235 = vsub.s32 6, %v4234
    %v4236 = vrot.slane %v4205, %v4235
    %v4237 = vlaneseq
    %v4238 = vshrl.u32 %v4237, 7
    %v4239 = vsub.s32 7, %v4238
    %v4240 = vrot.slane %v4205, %v4239
    %v4241 = vlaneseq
    %v4242 = vshrl.u32 %v4241, 7
    %v4243 = vsub.s32 0, %v4242
    %v4244 = vrot.slane %v4206, %v4243
    %v4245 = vlaneseq
    %v4246 = vshrl.u32 %v4245, 7
    %v4247 = vsub.s32 1, %v4246
    %v4248 = vrot.slane %v4206, %v4247
    %v4249 = vlaneseq
    %v4250 = vshrl.u32 %v4249, 7
    %v4251 = vsub.s32 2, %v4250
    %v4252 = vrot.slane %v4206, %v4251
    %v4253 = vlaneseq
    %v4254 = vshrl.u32 %v4253, 7
    %v4255 = vsub.s32 3, %v4254
    %v4256 = vrot.slane %v4206, %v4255
    %v4257 = vlaneseq
    %v4258 = vshrl.u32 %v4257, 7
    %v4259 = vsub.s32 4, %v4258
    %v4260 = vrot.slane %v4206, %v4259
    %v4261 = vlaneseq
    %v4262 = vshrl.u32 %v4261, 7
    %v4263 = vsub.s32 5, %v4262
    %v4264 = vrot.slane %v4206, %v4263
    %v4265 = vlaneseq
    %v4266 = vshrl.u32 %v4265, 7
    %v4267 = vsub.s32 6, %v4266
    %v4268 = vrot.slane %v4206, %v4267
    %v4269 = vlaneseq
    %v4270 = vshrl.u32 %v4269, 7
    %v4271 = vsub.s32 7, %v4270
    %v4272 = vrot.slane %v4206, %v4271
    %v4289 = vmul.f32 %v4024, %v4212
    %v4290 = vmul.f32 %v4026, %v4216
    %v4291 = vmul.f32 %v4028, %v4220
    %v4292 = vmul.f32 %v4030, %v4224
    %v4293 = vmul.f32 %v4032, %v4228
    %v4294 = vmul.f32 %v4034, %v4232
    %v4295 = vmul.f32 %v4036, %v4236
    %v4296 = vmul.f32 %v4038, %v4240
    %v4297 = vmul.f32 %v4040, %v4244
    %v4298 = vmul.f32 %v4042, %v4248
    %v4299 = vmul.f32 %v4044, %v4252
    %v4300 = vmul.f32 %v4046, %v4256
    %v4301 = vmul.f32 %v4048, %v4260
    %v4302 = vmul.f32 %v4050, %v4264
    %v4303 = vmul.f32 %v4052, %v4268
    %v4304 = vmul.f32 %v4054, %v4272
    %4313 = vset.pattern.permute.xlu0 0
    %4314 = vperm.xlu0 %4313, %v4289
    %v4315 = vpop.permute.xlu0 %4314
    %4316 = vset.pattern.permute.xlu0 0
    %4317 = vperm.xlu0 %4316, %v4290
    %v4318 = vpop.permute.xlu0 %4317
    %4319 = vset.pattern.permute.xlu0 0
    %4320 = vperm.xlu0 %4319, %v4291
    %v4321 = vpop.permute.xlu0 %4320
    %4322 = vset.pattern.permute.xlu0 0
    %4323 = vperm.xlu0 %4322, %v4292
    %v4324 = vpop.permute.xlu0 %4323
    %4325 = vset.pattern.permute.xlu0 0
    %4326 = vperm.xlu0 %4325, %v4293
    %v4327 = vpop.permute.xlu0 %4326
    %4328 = vset.pattern.permute.xlu0 0
    %4329 = vperm.xlu0 %4328, %v4294
    %v4330 = vpop.permute.xlu0 %4329
    %4331 = vset.pattern.permute.xlu0 0
    %4332 = vperm.xlu0 %4331, %v4295
    %v4333 = vpop.permute.xlu0 %4332
    %4334 = vset.pattern.permute.xlu0 0
    %4335 = vperm.xlu0 %4334, %v4296
    %v4336 = vpop.permute.xlu0 %4335
    %v4337 = vlaneseq
    %v4338 = vshrl.u32 %v4337, 7
    %v4339 = vsub.s32 %v227, %v4338
    %v4340 = vrot.slane %v4315, %v4339
    %v4341 = vlaneseq
    %v4342 = vshrl.u32 %v4341, 7
    %v4343 = vsub.s32 %v227, %v4342
    %v4344 = vrot.slane %v4318, %v4343
    %v4345 = vlaneseq
    %v4346 = vshrl.u32 %v4345, 7
    %v4347 = vsub.s32 %v227, %v4346
    %v4348 = vrot.slane %v4321, %v4347
    %v4349 = vlaneseq
    %v4350 = vshrl.u32 %v4349, 7
    %v4351 = vsub.s32 %v227, %v4350
    %v4352 = vrot.slane %v4324, %v4351
    %v4353 = vlaneseq
    %v4354 = vshrl.u32 %v4353, 7
    %v4355 = vsub.s32 %v227, %v4354
    %v4356 = vrot.slane %v4327, %v4355
    %v4357 = vlaneseq
    %v4358 = vshrl.u32 %v4357, 7
    %v4359 = vsub.s32 %v227, %v4358
    %v4360 = vrot.slane %v4330, %v4359
    %v4361 = vlaneseq
    %v4362 = vshrl.u32 %v4361, 7
    %v4363 = vsub.s32 %v227, %v4362
    %v4364 = vrot.slane %v4333, %v4363
    %v4365 = vlaneseq
    %v4366 = vshrl.u32 %v4365, 7
    %v4367 = vsub.s32 %v227, %v4366
    %v4368 = vrot.slane %v4336, %v4367
    %v4369 = vsel %vm2683, %v4344, %v4340
    %v4370 = vsel %vm2685, %v4348, %v4369
    %v4371 = vsel %vm2687, %v4352, %v4370
    %v4372 = vsel %vm2689, %v4356, %v4371
    %v4373 = vsel %vm2691, %v4360, %v4372
    %v4374 = vsel %vm2693, %v4364, %v4373
    %v4375 = vsel %vm2695, %v4368, %v4374
    %4376 = vrot.lane.b32.xlu0 %v218, 32
    %v4377 = vpop.permute.xlu0 %4376
    %v4379 = vsel %vm2706, %v4375, 0
    %4381 = vmatprep.subr.mxu0 0.0
    %4382 = vmatpush1.msra.mxu0 %v4377
    %4383 = vmatprep.subr.mxu0 0.0
    %4384 = vmatpush1.msra.mxu0 0.0
    %4385 = vmatprep.subr.mxu0 0.0
    %4386 = vmatpush1.msra.mxu0 0.0
    %4387 = vmatprep.subr.mxu0 0.0
    %4388 = vmatpush1.msra.mxu0 0.0
    %4389 = vmatprep.subr.mxu0 0.0
    %4390 = vmatpush1.msra.mxu0 0.0
    %4391 = vmatprep.subr.mxu0 0.0
    %4392 = vmatpush1.msra.mxu0 0.0
    %4393 = vmatprep.subr.mxu0 0.0
    %4394 = vmatpush1.msra.mxu0 0.0
    %4395 = vmatprep.subr.mxu0 0.0
    %4396 = vmatpush1.msra.mxu0 0.0
    %4397 = vmatprep.subr.mxu0 0.0
    %4398 = vmatpush1.msra.mxu0 0.0
    %4399 = vmatprep.subr.mxu0 0.0
    %4400 = vmatpush1.msra.mxu0 0.0
    %4401 = vmatprep.subr.mxu0 0.0
    %4402 = vmatpush1.msra.mxu0 0.0
    %4403 = vmatprep.subr.mxu0 0.0
    %4404 = vmatpush1.msra.mxu0 0.0
    %4405 = vmatprep.subr.mxu0 0.0
    %4406 = vmatpush1.msra.mxu0 0.0
    %4407 = vmatprep.subr.mxu0 0.0
    %4408 = vmatpush1.msra.mxu0 0.0
    %4409 = vmatprep.subr.mxu0 0.0
    %4410 = vmatpush1.msra.mxu0 0.0
    %4411 = vmatprep.subr.mxu0 0.0
    %4412 = vmatpush1.msra.mxu0 0.0
    %4413 = vmatprep.subr.mxu0 0.0
    %4414 = vmatpush1.msra.mxu0 0.0
    %4415 = vmatprep.subr.mxu0 0.0
    %4416 = vmatpush1.msra.mxu0 0.0
    %4417 = vmatprep.subr.mxu0 0.0
    %4418 = vmatpush1.msra.mxu0 0.0
    %4419 = vmatprep.subr.mxu0 0.0
    %4420 = vmatpush1.msra.mxu0 0.0
    %4421 = vmatprep.subr.mxu0 0.0
    %4422 = vmatpush1.msra.mxu0 0.0
    %4423 = vmatprep.subr.mxu0 0.0
    %4424 = vmatpush1.msra.mxu0 0.0
    %4425 = vmatprep.subr.mxu0 0.0
    %4426 = vmatpush1.msra.mxu0 0.0
    %4427 = vmatprep.subr.mxu0 0.0
    %4428 = vmatpush1.msra.mxu0 0.0
    %4429 = vmatprep.subr.mxu0 0.0
    %4430 = vmatpush1.msra.mxu0 0.0
    %4431 = vmatprep.subr.mxu0 0.0
    %4432 = vmatpush1.msra.mxu0 0.0
    %4433 = vmatprep.subr.mxu0 0.0
    %4434 = vmatpush1.msra.mxu0 0.0
    %4435 = vmatprep.subr.mxu0 0.0
    %4436 = vmatpush1.msra.mxu0 0.0
    %4437 = vmatprep.subr.mxu0 0.0
    %4438 = vmatpush1.msra.mxu0 0.0
    %4439 = vmatprep.subr.mxu0 0.0
    %4440 = vmatpush1.msra.mxu0 0.0
    %4441 = vmatprep.subr.mxu0 0.0
    %4442 = vmatpush1.msra.mxu0 0.0
    %4443 = vmatprep.subr.mxu0 0.0
    %4444 = vmatpush1.msra.mxu0 0.0
    %4445 = vmatprep.mubr.f32.mxu0 0.0
    %4446 = vmatmul.mubr.f32.gmra.mrb[0].mxu0 %v4379
    %v4447 = vpop.f32.mrb[0].mxu0
    %v4448 = vadd.f32 0.0, %v4447
    %v4449 = vpop.f32.mrb[0].mxu0
    %4450 = vdwg.mxu0
    %4459 = vset.pattern.permute.xlu0 0
    %4460 = vperm.xlu0 %4459, %v4297
    %v4461 = vpop.permute.xlu0 %4460
    %4462 = vset.pattern.permute.xlu0 0
    %4463 = vperm.xlu0 %4462, %v4298
    %v4464 = vpop.permute.xlu0 %4463
    %4465 = vset.pattern.permute.xlu0 0
    %4466 = vperm.xlu0 %4465, %v4299
    %v4467 = vpop.permute.xlu0 %4466
    %4468 = vset.pattern.permute.xlu0 0
    %4469 = vperm.xlu0 %4468, %v4300
    %v4470 = vpop.permute.xlu0 %4469
    %4471 = vset.pattern.permute.xlu0 0
    %4472 = vperm.xlu0 %4471, %v4301
    %v4473 = vpop.permute.xlu0 %4472
    %4474 = vset.pattern.permute.xlu0 0
    %4475 = vperm.xlu0 %4474, %v4302
    %v4476 = vpop.permute.xlu0 %4475
    %4477 = vset.pattern.permute.xlu0 0
    %4478 = vperm.xlu0 %4477, %v4303
    %v4479 = vpop.permute.xlu0 %4478
    %4480 = vset.pattern.permute.xlu0 0
    %4481 = vperm.xlu0 %4480, %v4304
    %v4482 = vpop.permute.xlu0 %4481
    %v4483 = vlaneseq
    %v4484 = vshrl.u32 %v4483, 7
    %v4485 = vsub.s32 %v227, %v4484
    %v4486 = vrot.slane %v4461, %v4485
    %v4487 = vlaneseq
    %v4488 = vshrl.u32 %v4487, 7
    %v4489 = vsub.s32 %v227, %v4488
    %v4490 = vrot.slane %v4464, %v4489
    %v4491 = vlaneseq
    %v4492 = vshrl.u32 %v4491, 7
    %v4493 = vsub.s32 %v227, %v4492
    %v4494 = vrot.slane %v4467, %v4493
    %v4495 = vlaneseq
    %v4496 = vshrl.u32 %v4495, 7
    %v4497 = vsub.s32 %v227, %v4496
    %v4498 = vrot.slane %v4470, %v4497
    %v4499 = vlaneseq
    %v4500 = vshrl.u32 %v4499, 7
    %v4501 = vsub.s32 %v227, %v4500
    %v4502 = vrot.slane %v4473, %v4501
    %v4503 = vlaneseq
    %v4504 = vshrl.u32 %v4503, 7
    %v4505 = vsub.s32 %v227, %v4504
    %v4506 = vrot.slane %v4476, %v4505
    %v4507 = vlaneseq
    %v4508 = vshrl.u32 %v4507, 7
    %v4509 = vsub.s32 %v227, %v4508
    %v4510 = vrot.slane %v4479, %v4509
    %v4511 = vlaneseq
    %v4512 = vshrl.u32 %v4511, 7
    %v4513 = vsub.s32 %v227, %v4512
    %v4514 = vrot.slane %v4482, %v4513
    %v4515 = vsel %vm2683, %v4490, %v4486
    %v4516 = vsel %vm2685, %v4494, %v4515
    %v4517 = vsel %vm2687, %v4498, %v4516
    %v4518 = vsel %vm2689, %v4502, %v4517
    %v4519 = vsel %vm2691, %v4506, %v4518
    %v4520 = vsel %vm2693, %v4510, %v4519
    %v4521 = vsel %vm2695, %v4514, %v4520
    %4522 = vrot.lane.b32.xlu0 %v223, 32
    %v4523 = vpop.permute.xlu0 %4522
    %v4525 = vsel %vm2706, %v4521, 0
    %4527 = vmatprep.subr.mxu0 0.0
    %4528 = vmatpush1.msra.mxu0 %v4523
    %4529 = vmatprep.subr.mxu0 0.0
    %4530 = vmatpush1.msra.mxu0 0.0
    %4531 = vmatprep.subr.mxu0 0.0
    %4532 = vmatpush1.msra.mxu0 0.0
    %4533 = vmatprep.subr.mxu0 0.0
    %4534 = vmatpush1.msra.mxu0 0.0
    %4535 = vmatprep.subr.mxu0 0.0
    %4536 = vmatpush1.msra.mxu0 0.0
    %4537 = vmatprep.subr.mxu0 0.0
    %4538 = vmatpush1.msra.mxu0 0.0
    %4539 = vmatprep.subr.mxu0 0.0
    %4540 = vmatpush1.msra.mxu0 0.0
    %4541 = vmatprep.subr.mxu0 0.0
    %4542 = vmatpush1.msra.mxu0 0.0
    %4543 = vmatprep.subr.mxu0 0.0
    %4544 = vmatpush1.msra.mxu0 0.0
    %4545 = vmatprep.subr.mxu0 0.0
    %4546 = vmatpush1.msra.mxu0 0.0
    %4547 = vmatprep.subr.mxu0 0.0
    %4548 = vmatpush1.msra.mxu0 0.0
    %4549 = vmatprep.subr.mxu0 0.0
    %4550 = vmatpush1.msra.mxu0 0.0
    %4551 = vmatprep.subr.mxu0 0.0
    %4552 = vmatpush1.msra.mxu0 0.0
    %4553 = vmatprep.subr.mxu0 0.0
    %4554 = vmatpush1.msra.mxu0 0.0
    %4555 = vmatprep.subr.mxu0 0.0
    %4556 = vmatpush1.msra.mxu0 0.0
    %4557 = vmatprep.subr.mxu0 0.0
    %4558 = vmatpush1.msra.mxu0 0.0
    %4559 = vmatprep.subr.mxu0 0.0
    %4560 = vmatpush1.msra.mxu0 0.0
    %4561 = vmatprep.subr.mxu0 0.0
    %4562 = vmatpush1.msra.mxu0 0.0
    %4563 = vmatprep.subr.mxu0 0.0
    %4564 = vmatpush1.msra.mxu0 0.0
    %4565 = vmatprep.subr.mxu0 0.0
    %4566 = vmatpush1.msra.mxu0 0.0
    %4567 = vmatprep.subr.mxu0 0.0
    %4568 = vmatpush1.msra.mxu0 0.0
    %4569 = vmatprep.subr.mxu0 0.0
    %4570 = vmatpush1.msra.mxu0 0.0
    %4571 = vmatprep.subr.mxu0 0.0
    %4572 = vmatpush1.msra.mxu0 0.0
    %4573 = vmatprep.subr.mxu0 0.0
    %4574 = vmatpush1.msra.mxu0 0.0
    %4575 = vmatprep.subr.mxu0 0.0
    %4576 = vmatpush1.msra.mxu0 0.0
    %4577 = vmatprep.subr.mxu0 0.0
    %4578 = vmatpush1.msra.mxu0 0.0
    %4579 = vmatprep.subr.mxu0 0.0
    %4580 = vmatpush1.msra.mxu0 0.0
    %4581 = vmatprep.subr.mxu0 0.0
    %4582 = vmatpush1.msra.mxu0 0.0
    %4583 = vmatprep.subr.mxu0 0.0
    %4584 = vmatpush1.msra.mxu0 0.0
    %4585 = vmatprep.subr.mxu0 0.0
    %4586 = vmatpush1.msra.mxu0 0.0
    %4587 = vmatprep.subr.mxu0 0.0
    %4588 = vmatpush1.msra.mxu0 0.0
    %4589 = vmatprep.subr.mxu0 0.0
    %4590 = vmatpush1.msra.mxu0 0.0
    %4591 = vmatprep.mubr.f32.mxu0 0.0
    %4592 = vmatmul.mubr.f32.gmra.mrb[0].mxu0 %v4525
    %v4593 = vpop.f32.mrb[0].mxu0
    %v4594 = vadd.f32 0.0, %v4593
    %v4595 = vpop.f32.mrb[0].mxu0
    %4596 = vdwg.mxu0
    %v4599 = vcombine.high %v4448, %v4448
    %v4601 = vunpack.c.l.s4 1966171168
    %v4602 = vunpack.c.0.s8 %v4601
    %v4603 = vlaneseq
    %v4604 = vshrl.u32 %v4603, 7
    %v4605 = vsub.s32 %v4602, %v4604
    %v4606 = vrot.slane %v4448, %v4605
    %v4608 = vunpack.c.l.s4 1966171168
    %v4609 = vunpack.c.0.s8 %v4608
    %v4610 = vlaneseq
    %v4611 = vshrl.u32 %v4610, 7
    %v4612 = vsub.s32 %v4609, %v4611
    %v4613 = vrot.slane %v4599, %v4612
    %v4614 = vcombine.high %v4606, %v4606
    %v4615 = vcombine.high %v4613, %v4613
    %v4617 = vunpack.c.l.s4 1966171168
    %v4618 = vunpack.c.0.s8 %v4617
    %v4619 = vlaneseq
    %v4620 = vshrl.u32 %v4619, 7
    %v4621 = vsub.s32 %v4618, %v4620
    %v4622 = vrot.slane %v4606, %v4621
    %v4624 = vunpack.c.l.s4 1966171168
    %v4625 = vunpack.c.0.s8 %v4624
    %v4626 = vlaneseq
    %v4627 = vshrl.u32 %v4626, 7
    %v4628 = vsub.s32 %v4625, %v4627
    %v4629 = vrot.slane %v4613, %v4628
    %v4631 = vunpack.c.l.s4 1966171168
    %v4632 = vunpack.c.0.s8 %v4631
    %v4633 = vlaneseq
    %v4634 = vshrl.u32 %v4633, 7
    %v4635 = vsub.s32 %v4632, %v4634
    %v4636 = vrot.slane %v4614, %v4635
    %v4638 = vunpack.c.l.s4 1966171168
    %v4639 = vunpack.c.0.s8 %v4638
    %v4640 = vlaneseq
    %v4641 = vshrl.u32 %v4640, 7
    %v4642 = vsub.s32 %v4639, %v4641
    %v4643 = vrot.slane %v4615, %v4642
    %v4644 = vcombine.high %v4622, %v4622
    %v4645 = vcombine.high %v4629, %v4629
    %v4646 = vcombine.high %v4636, %v4636
    %v4647 = vcombine.high %v4643, %v4643
    %v4648 = vcombine.high %v4594, %v4594
    %v4650 = vunpack.c.l.s4 1966171168
    %v4651 = vunpack.c.0.s8 %v4650
    %v4652 = vlaneseq
    %v4653 = vshrl.u32 %v4652, 7
    %v4654 = vsub.s32 %v4651, %v4653
    %v4655 = vrot.slane %v4594, %v4654
    %v4657 = vunpack.c.l.s4 1966171168
    %v4658 = vunpack.c.0.s8 %v4657
    %v4659 = vlaneseq
    %v4660 = vshrl.u32 %v4659, 7
    %v4661 = vsub.s32 %v4658, %v4660
    %v4662 = vrot.slane %v4648, %v4661
    %v4663 = vcombine.high %v4655, %v4655
    %v4664 = vcombine.high %v4662, %v4662
    %v4666 = vunpack.c.l.s4 1966171168
    %v4667 = vunpack.c.0.s8 %v4666
    %v4668 = vlaneseq
    %v4669 = vshrl.u32 %v4668, 7
    %v4670 = vsub.s32 %v4667, %v4669
    %v4671 = vrot.slane %v4655, %v4670
    %v4673 = vunpack.c.l.s4 1966171168
    %v4674 = vunpack.c.0.s8 %v4673
    %v4675 = vlaneseq
    %v4676 = vshrl.u32 %v4675, 7
    %v4677 = vsub.s32 %v4674, %v4676
    %v4678 = vrot.slane %v4662, %v4677
    %v4680 = vunpack.c.l.s4 1966171168
    %v4681 = vunpack.c.0.s8 %v4680
    %v4682 = vlaneseq
    %v4683 = vshrl.u32 %v4682, 7
    %v4684 = vsub.s32 %v4681, %v4683
    %v4685 = vrot.slane %v4663, %v4684
    %v4687 = vunpack.c.l.s4 1966171168
    %v4688 = vunpack.c.0.s8 %v4687
    %v4689 = vlaneseq
    %v4690 = vshrl.u32 %v4689, 7
    %v4691 = vsub.s32 %v4688, %v4690
    %v4692 = vrot.slane %v4664, %v4691
    %v4693 = vcombine.high %v4671, %v4671
    %v4694 = vcombine.high %v4678, %v4678
    %v4695 = vcombine.high %v4685, %v4685
    %v4696 = vcombine.high %v4692, %v4692
    %v4697 = vlaneseq
    %v4698 = vshrl.u32 %v4697, 7
    %v4699 = vsub.s32 0, %v4698
    %v4700 = vrot.slane %v4622, %v4699
    %v4701 = vlaneseq
    %v4702 = vshrl.u32 %v4701, 7
    %v4703 = vsub.s32 0, %v4702
    %v4704 = vrot.slane %v4636, %v4703
    %v4705 = vlaneseq
    %v4706 = vshrl.u32 %v4705, 7
    %v4707 = vsub.s32 0, %v4706
    %v4708 = vrot.slane %v4644, %v4707
    %v4709 = vlaneseq
    %v4710 = vshrl.u32 %v4709, 7
    %v4711 = vsub.s32 0, %v4710
    %v4712 = vrot.slane %v4646, %v4711
    %v4713 = vlaneseq
    %v4714 = vshrl.u32 %v4713, 7
    %v4715 = vsub.s32 0, %v4714
    %v4716 = vrot.slane %v4629, %v4715
    %v4717 = vlaneseq
    %v4718 = vshrl.u32 %v4717, 7
    %v4719 = vsub.s32 0, %v4718
    %v4720 = vrot.slane %v4643, %v4719
    %v4721 = vlaneseq
    %v4722 = vshrl.u32 %v4721, 7
    %v4723 = vsub.s32 0, %v4722
    %v4724 = vrot.slane %v4645, %v4723
    %v4725 = vlaneseq
    %v4726 = vshrl.u32 %v4725, 7
    %v4727 = vsub.s32 0, %v4726
    %v4728 = vrot.slane %v4647, %v4727
    %v4729 = vlaneseq
    %v4730 = vshrl.u32 %v4729, 7
    %v4731 = vsub.s32 0, %v4730
    %v4732 = vrot.slane %v4671, %v4731
    %v4733 = vlaneseq
    %v4734 = vshrl.u32 %v4733, 7
    %v4735 = vsub.s32 0, %v4734
    %v4736 = vrot.slane %v4685, %v4735
    %v4737 = vlaneseq
    %v4738 = vshrl.u32 %v4737, 7
    %v4739 = vsub.s32 0, %v4738
    %v4740 = vrot.slane %v4693, %v4739
    %v4741 = vlaneseq
    %v4742 = vshrl.u32 %v4741, 7
    %v4743 = vsub.s32 0, %v4742
    %v4744 = vrot.slane %v4695, %v4743
    %v4745 = vlaneseq
    %v4746 = vshrl.u32 %v4745, 7
    %v4747 = vsub.s32 0, %v4746
    %v4748 = vrot.slane %v4678, %v4747
    %v4749 = vlaneseq
    %v4750 = vshrl.u32 %v4749, 7
    %v4751 = vsub.s32 0, %v4750
    %v4752 = vrot.slane %v4692, %v4751
    %v4753 = vlaneseq
    %v4754 = vshrl.u32 %v4753, 7
    %v4755 = vsub.s32 0, %v4754
    %v4756 = vrot.slane %v4694, %v4755
    %v4757 = vlaneseq
    %v4758 = vshrl.u32 %v4757, 7
    %v4759 = vsub.s32 0, %v4758
    %v4760 = vrot.slane %v4696, %v4759
    %v4777 = vadd.f32 %v218, %v4700
    %v4778 = vadd.f32 %v218, %v4704
    %v4779 = vadd.f32 %v218, %v4708
    %v4780 = vadd.f32 %v218, %v4712
    %v4781 = vadd.f32 %v218, %v4716
    %v4782 = vadd.f32 %v218, %v4720
    %v4783 = vadd.f32 %v218, %v4724
    %v4784 = vadd.f32 %v218, %v4728
    %v4785 = vadd.f32 %v223, %v4732
    %v4786 = vadd.f32 %v223, %v4736
    %v4787 = vadd.f32 %v223, %v4740
    %v4788 = vadd.f32 %v223, %v4744
    %v4789 = vadd.f32 %v223, %v4748
    %v4790 = vadd.f32 %v223, %v4752
    %v4791 = vadd.f32 %v223, %v4756
    %v4792 = vadd.f32 %v223, %v4760
    %v4793 = vtanh.pop %v4777
    %v4794 = vtanh.pop %v4778
    %v4795 = vtanh.pop %v4779
    %v4796 = vtanh.pop %v4780
    %v4797 = vtanh.pop %v4781
    %v4798 = vtanh.pop %v4782
    %v4799 = vtanh.pop %v4783
    %v4800 = vtanh.pop %v4784
    %v4801 = vtanh.pop %v4785
    %v4802 = vtanh.pop %v4786
    %v4803 = vtanh.pop %v4787
    %v4804 = vtanh.pop %v4788
    %v4805 = vtanh.pop %v4789
    %v4806 = vtanh.pop %v4790
    %v4807 = vtanh.pop %v4791
    %v4808 = vtanh.pop %v4792
    %v4810 = vlaneseq
    %v4811 = vshrl.u32 %v4810, 7
    %v4812 = vsub.s32 0, %v4811
    %v4813 = vrot.slane %v2053, %v4812
    %v4815 = vmul.f32 %v4793, %v4813
    %v4816 = vmul.f32 %v4794, %v4813
    %v4817 = vmul.f32 %v4795, %v4813
    %v4818 = vmul.f32 %v4796, %v4813
    %v4819 = vmul.f32 %v4797, %v4813
    %v4820 = vmul.f32 %v4798, %v4813
    %v4821 = vmul.f32 %v4799, %v4813
    %v4822 = vmul.f32 %v4800, %v4813
    %v4823 = vmul.f32 %v4801, %v4813
    %v4824 = vmul.f32 %v4802, %v4813
    %v4825 = vmul.f32 %v4803, %v4813
    %v4826 = vmul.f32 %v4804, %v4813
    %v4827 = vmul.f32 %v4805, %v4813
    %v4828 = vmul.f32 %v4806, %v4813
    %v4829 = vmul.f32 %v4807, %v4813
    %v4830 = vmul.f32 %v4808, %v4813
    %v4831 = vsel %vm462, %v4815, 0.0
    %4832 = vadd.xlane.f32.xlu0 %v4831
    %v4833 = vpop.xlane.xlu0 %4832
    %v4834 = vsel %vm462, %v4816, 0.0
    %4835 = vadd.xlane.f32.xlu0 %v4834
    %v4836 = vpop.xlane.xlu0 %4835
    %v4837 = vsel %vm462, %v4817, 0.0
    %4838 = vadd.xlane.f32.xlu0 %v4837
    %v4839 = vpop.xlane.xlu0 %4838
    %v4840 = vsel %vm462, %v4818, 0.0
    %4841 = vadd.xlane.f32.xlu0 %v4840
    %v4842 = vpop.xlane.xlu0 %4841
    %v4843 = vsel %vm462, %v4819, 0.0
    %4844 = vadd.xlane.f32.xlu0 %v4843
    %v4845 = vpop.xlane.xlu0 %4844
    %v4846 = vsel %vm462, %v4820, 0.0
    %4847 = vadd.xlane.f32.xlu0 %v4846
    %v4848 = vpop.xlane.xlu0 %4847
    %v4849 = vsel %vm462, %v4821, 0.0
    %4850 = vadd.xlane.f32.xlu0 %v4849
    %v4851 = vpop.xlane.xlu0 %4850
    %v4852 = vsel %vm462, %v4822, 0.0
    %4853 = vadd.xlane.f32.xlu0 %v4852
    %v4854 = vpop.xlane.xlu0 %4853
    %v4855 = vsel %vm462, %v4823, 0.0
    %4856 = vadd.xlane.f32.xlu0 %v4855
    %v4857 = vpop.xlane.xlu0 %4856
    %v4858 = vsel %vm462, %v4824, 0.0
    %4859 = vadd.xlane.f32.xlu0 %v4858
    %v4860 = vpop.xlane.xlu0 %4859
    %v4861 = vsel %vm462, %v4825, 0.0
    %4862 = vadd.xlane.f32.xlu0 %v4861
    %v4863 = vpop.xlane.xlu0 %4862
    %v4864 = vsel %vm462, %v4826, 0.0
    %4865 = vadd.xlane.f32.xlu0 %v4864
    %v4866 = vpop.xlane.xlu0 %4865
    %v4867 = vsel %vm462, %v4827, 0.0
    %4868 = vadd.xlane.f32.xlu0 %v4867
    %v4869 = vpop.xlane.xlu0 %4868
    %v4870 = vsel %vm462, %v4828, 0.0
    %4871 = vadd.xlane.f32.xlu0 %v4870
    %v4872 = vpop.xlane.xlu0 %4871
    %v4873 = vsel %vm462, %v4829, 0.0
    %4874 = vadd.xlane.f32.xlu0 %v4873
    %v4875 = vpop.xlane.xlu0 %4874
    %v4876 = vsel %vm462, %v4830, 0.0
    %4877 = vadd.xlane.f32.xlu0 %v4876
    %v4878 = vpop.xlane.xlu0 %4877
    %v4895 = vlaneseq
    %v4896 = vshrl.u32 %v4895, 7
    %v4897 = vsub.s32 %v227, %v4896
    %v4898 = vrot.slane %v4833, %v4897
    %v4899 = vlaneseq
    %v4900 = vshrl.u32 %v4899, 7
    %v4901 = vsub.s32 %v227, %v4900
    %v4902 = vrot.slane %v4836, %v4901
    %v4903 = vlaneseq
    %v4904 = vshrl.u32 %v4903, 7
    %v4905 = vsub.s32 %v227, %v4904
    %v4906 = vrot.slane %v4839, %v4905
    %v4907 = vlaneseq
    %v4908 = vshrl.u32 %v4907, 7
    %v4909 = vsub.s32 %v227, %v4908
    %v4910 = vrot.slane %v4842, %v4909
    %v4911 = vlaneseq
    %v4912 = vshrl.u32 %v4911, 7
    %v4913 = vsub.s32 %v227, %v4912
    %v4914 = vrot.slane %v4845, %v4913
    %v4915 = vlaneseq
    %v4916 = vshrl.u32 %v4915, 7
    %v4917 = vsub.s32 %v227, %v4916
    %v4918 = vrot.slane %v4848, %v4917
    %v4919 = vlaneseq
    %v4920 = vshrl.u32 %v4919, 7
    %v4921 = vsub.s32 %v227, %v4920
    %v4922 = vrot.slane %v4851, %v4921
    %v4923 = vlaneseq
    %v4924 = vshrl.u32 %v4923, 7
    %v4925 = vsub.s32 %v227, %v4924
    %v4926 = vrot.slane %v4854, %v4925
    %v4927 = vlaneseq
    %v4928 = vshrl.u32 %v4927, 7
    %v4929 = vsub.s32 %v227, %v4928
    %v4930 = vrot.slane %v4857, %v4929
    %v4931 = vlaneseq
    %v4932 = vshrl.u32 %v4931, 7
    %v4933 = vsub.s32 %v227, %v4932
    %v4934 = vrot.slane %v4860, %v4933
    %v4935 = vlaneseq
    %v4936 = vshrl.u32 %v4935, 7
    %v4937 = vsub.s32 %v227, %v4936
    %v4938 = vrot.slane %v4863, %v4937
    %v4939 = vlaneseq
    %v4940 = vshrl.u32 %v4939, 7
    %v4941 = vsub.s32 %v227, %v4940
    %v4942 = vrot.slane %v4866, %v4941
    %v4943 = vlaneseq
    %v4944 = vshrl.u32 %v4943, 7
    %v4945 = vsub.s32 %v227, %v4944
    %v4946 = vrot.slane %v4869, %v4945
    %v4947 = vlaneseq
    %v4948 = vshrl.u32 %v4947, 7
    %v4949 = vsub.s32 %v227, %v4948
    %v4950 = vrot.slane %v4872, %v4949
    %v4951 = vlaneseq
    %v4952 = vshrl.u32 %v4951, 7
    %v4953 = vsub.s32 %v227, %v4952
    %v4954 = vrot.slane %v4875, %v4953
    %v4955 = vlaneseq
    %v4956 = vshrl.u32 %v4955, 7
    %v4957 = vsub.s32 %v227, %v4956
    %v4958 = vrot.slane %v4878, %v4957
    %v4959 = vsel %vm2683, %v4902, %v4898
    %v4960 = vsel %vm2685, %v4906, %v4959
    %v4961 = vsel %vm2687, %v4910, %v4960
    %v4962 = vsel %vm2689, %v4914, %v4961
    %v4963 = vsel %vm2691, %v4918, %v4962
    %v4964 = vsel %vm2693, %v4922, %v4963
    %v4965 = vsel %vm2695, %v4926, %v4964
    %v4966 = vsel %vm2683, %v4934, %v4930
    %v4967 = vsel %vm2685, %v4938, %v4966
    %v4968 = vsel %vm2687, %v4942, %v4967
    %v4969 = vsel %vm2689, %v4946, %v4968
    %v4970 = vsel %vm2691, %v4950, %v4969
    %v4971 = vsel %vm2693, %v4954, %v4970
    %v4972 = vsel %vm2695, %v4958, %v4971
    %4975 = vst.msk [vmem:[#allocation17] sm:$0xff] %vm2706, %v4965
    %4976 = vst.msk [vmem:[#allocation17 + $0x8] sm:$0xff] %vm2706, %v4972
    // Predicated region
    $region78: #{tpu_custom_call.1} parent=1 // pred_check
      _
    $region79: #{tpu_custom_call.1} parent=1 // pred_check_branch
      %4978 = sbr.rel (0) target = $region81
    $region80: #{tpu_custom_call.1} parent=1 // pred_region
      %s4980 = ssub.s32 256, 256
      %4981 = vsyncadd [#allocation7], %s4980
      %s4982 = sshll.u32 [#allocation17], 4
      %s4983 = int_to_ptr.vmem [resolvable:$true] %s4982
      %4988 = dma.vmem_to_hbm [thread:$0]  %s4983, 256, %s13, [#allocation7], 128, 128, 8
    $region81: #{tpu_custom_call.1} parent=1 // pred_fallthru
      _
    // Predicated region
    $region82: #{tpu_custom_call.1} parent=1 // pred_check
      _
    $region83: #{tpu_custom_call.1} parent=1 // pred_check_branch
      %4990 = sbr.rel (0) target = $region85
    $region84: #{tpu_custom_call.1} parent=1 // pred_region
      %4991 = dma.done [#allocation7], 256
    $region85: #{tpu_custom_call.1} parent=1 // pred_fallthru
      _
    %4992 = vsyncpa [#allocation6], 1
    %4993 = vsyncpa [#allocation9], 1
    %4994 = vsyncpa [#allocation12], 1
    %4995 = vsyncpa [#allocation15], 1
    %4996 = vsyncpa [#allocation7], 1

</llo_original>
